<compile_context>
chip_gen: v7x
topology: tpu7x:2x2x1
jax: 0.10.0
libtpu: 0.0.40
codegen_flags: <defaults>
</compile_context>

<pallas_src>
import math
from functools import partial

import numpy as np
import jax
import jax.numpy as jnp
from jax.experimental import pallas as pl
from jax.experimental.pallas import tpu as pltpu


def _swap01(x):
    """(A, B, C) -> (B, A, C) via static slices + axis-0 concat (robust Mosaic lowering)."""
    return jnp.concatenate([x[:, b, :][None] for b in range(x.shape[1])], axis=0)


def _transformer_layer_kernel(
        x_ref, mb_ref, ek_ref, ev_ref, eq_ref,
        wq_ref, bq_ref, wk_ref, bk_ref, wv_ref, bv_ref,
        wo_ref, bo_ref, ln1w_ref, ln1b_ref,
        w1_ref, b1_ref, w2_ref, b2_ref, ln2w_ref, ln2b_ref,
        out_ref):
    bb, S, H = x_ref.shape
    heads = wq_ref.shape[0]
    cdt = wq_ref.dtype          # MXU-operand dtype: bf16 by default, f32 if requested
    f32 = jnp.float32

    wq = wq_ref[...]            # (h, H, dh)  (pre-scaled by 1/sqrt(dh) in the wrapper)
    wk = wk_ref[...]
    wv = wv_ref[...]
    wo = wo_ref[...]            # (h, dh, H)
    bq = bq_ref[...][:, None, :]    # (h, 1, dh) f32 (pre-scaled)
    bk = bk_ref[...][:, None, :]
    bv = bv_ref[...][:, None, :]

    # Static unroll over the compile-time batch block (bb == 1 at the test shape).
    for b in range(bb):
        x = x_ref[b]                                                   # (S, H) f32
        xh = jnp.broadcast_to(x.astype(cdt)[None], (heads, S, H))      # (h, S, H)

        # Head-batched Q/K/V projections on the MXU.
        q = jnp.einsum('hsk,hkd->hsd', xh, wq, preferred_element_type=f32) + bq   # (h, q, d)
        k = jnp.einsum('hsk,hkd->hsd', xh, wk, preferred_element_type=f32) + bk   # (h, k, d)
        v = jnp.einsum('hsk,hkd->hsd', xh, wv, preferred_element_type=f32) + bv   # (h, k, d)
        qc = q.astype(cdt)
        kc = k.astype(cdt)
        vc = v.astype(cdt)

        ek = ek_ref[b]            # (q, k, d) cdt
        ev = ev_ref[b]            # (q, k, d) cdt
        eq = eq_ref[b]            # (q, k, d) cdt (pre-scaled)

        # Attention scores: s1 / s2 are MXU contractions; s3 / s4 contract only over d.
        s1 = jnp.einsum('hqd,hkd->hqk', qc, kc, preferred_element_type=f32)          # (h, q, k)
        s2 = _swap01(jnp.einsum('qhd,qkd->qhk', _swap01(qc), ek,
                                preferred_element_type=f32))                         # (h, q, k)
        eq32 = eq.astype(f32)
        ek32 = ek.astype(f32)
        s3 = jnp.sum(k[:, None, :, :] * eq32[None, :, :, :], axis=-1)                # (h, q, k)
        s4 = jnp.sum(eq32 * ek32, axis=-1)                                            # (q, k)

        # Additive mask bias (precomputed in the wrapper) replaces masked_fill's compare+select.
        scores = s1 + s2 + s3 + (s4 + mb_ref[b])[None, :, :]

        # Softmax over k (f32, max-subtracted); the divide rides the EUP slot.
        m = jnp.max(scores, axis=-1, keepdims=True)
        e = jnp.exp(scores - m)
        attn = e * pl.reciprocal(jnp.sum(e, axis=-1, keepdims=True), approx=True)     # (h, q, k)
        attn_c = attn.astype(cdt)

        # Attention outputs: both contract over k on the MXU.
        o1 = jnp.einsum('hqk,hkd->hqd', attn_c, vc, preferred_element_type=f32)       # (h, q, d)
        o2 = _swap01(jnp.einsum('qhk,qkd->qhd', _swap01(attn_c), ev,
                                preferred_element_type=f32))                          # (h, q, d)
        o = (o1 + o2).astype(cdt)

        # Output projection without per-head lane-slice reassembly: contract (h, d) against wo.
        attn_out = jnp.sum(
            jnp.einsum('hqd,hdo->hqo', o, wo, preferred_element_type=f32),
            axis=0) + bo_ref[...]                                                     # (S, H)

        # Residual + LayerNorm (eps=1e-5, biased variance), f32.
        h1 = x + attn_out
        mu = jnp.mean(h1, axis=-1, keepdims=True)
        var = jnp.mean((h1 - mu) ** 2, axis=-1, keepdims=True)
        h1 = (h1 - mu) * jax.lax.rsqrt(var + 1e-5) * ln1w_ref[...] + ln1b_ref[...]

        # FeedForward: Linear -> ReLU -> Linear (bf16 operands, f32 accumulation).
        f = jnp.dot(h1.astype(cdt), w1_ref[...], preferred_element_type=f32) + b1_ref[...]
        f = jnp.maximum(f, 0.0)
        f = jnp.dot(f.astype(cdt), w2_ref[...], preferred_element_type=f32) + b2_ref[...]

        h2 = h1 + f
        mu2 = jnp.mean(h2, axis=-1, keepdims=True)
        var2 = jnp.mean((h2 - mu2) ** 2, axis=-1, keepdims=True)
        out_ref[b] = (h2 - mu2) * jax.lax.rsqrt(var2 + 1e-5) * ln2w_ref[...] + ln2b_ref[...]


def transformer_layer_pallas(x, graph, edge_key, edge_value, edge_query, params, heads,
                             *, batch_block=None, compute_dtype=jnp.bfloat16):
    B, S, H = x.shape
    dh = H // heads
    scale = 1.0 / math.sqrt(dh)
    cdt = compute_dtype

    if batch_block is None:
        bb = max(1, B // 2)             # fattest batch block that keeps >= 2 grid steps (megacore)
        while B % bb:
            bb -= 1
    else:
        bb = batch_block
    assert B % bb == 0, "batch_block must divide the batch"

    # Additive attention-mask bias, computed once outside the kernel.
    mask_bias = jnp.where(graph == 0, -100000.0, 0.0).astype(jnp.float32)

    # Edge tensors: bf16 HBM residency / DMA; edge_query pre-scaled and relaid out to [q, k, d]
    # so every edge term is either a leading-batch contraction or a d-only reduce.
    ek = edge_key.astype(cdt)                                            # (B, q, k, d)
    ev = edge_value.astype(cdt)                                          # (B, q, k, d)
    eq = (jnp.transpose(edge_query, (0, 2, 1, 3)) * scale).astype(cdt)   # (B, k, q, d) -> (B, q, k, d)

    def per_head_in(w):   # (H, H) -> (heads, H, dh) with w_h[h, i, d] = w[i, h*dh + d]
        return jnp.transpose(w.reshape(H, heads, dh), (1, 0, 2))

    weights = [
        per_head_in(params['wq'] * scale).astype(cdt), (params['bq'] * scale).reshape(heads, dh),
        per_head_in(params['wk']).astype(cdt),         params['bk'].reshape(heads, dh),
        per_head_in(params['wv']).astype(cdt),         params['bv'].reshape(heads, dh),
        params['wo'].reshape(heads, dh, H).astype(cdt), params['bo'],
        params['ln1w'], params['ln1b'],
        params['w1'].astype(cdt), params['b1'],
        params['w2'].astype(cdt), params['b2'],
        params['ln2w'], params['ln2b'],
    ]

    data_specs = [
        pl.BlockSpec((bb, S, H), lambda b: (b, 0, 0)),
        pl.BlockSpec((bb, S, S), lambda b: (b, 0, 0)),
        pl.BlockSpec((bb, S, S, dh), lambda b: (b, 0, 0, 0)),
        pl.BlockSpec((bb, S, S, dh), lambda b: (b, 0, 0, 0)),
        pl.BlockSpec((bb, S, S, dh), lambda b: (b, 0, 0, 0)),
    ]
    # Weight blocks never change across the batch grid (constant index_map).
    weight_specs = [pl.BlockSpec(w.shape, lambda b, n=w.ndim: (0,) * n) for w in weights]

    # Explicit scoped-VMEM budget sized to the chosen blocks (defaults are far below physical VMEM).
    e_item = np.dtype(cdt).itemsize
    data_block_bytes = bb * (2 * S * H * 4 + S * S * 4 + 3 * S * S * dh * e_item)
    weight_bytes = sum(int(math.prod(w.shape)) * np.dtype(w.dtype).itemsize for w in weights)
    vmem_limit = int(min(64 * 2 ** 20,
                         max(16 * 2 ** 20, 2 * (data_block_bytes + weight_bytes) + 8 * 2 ** 20)))

    return pl.pallas_call(
        _transformer_layer_kernel,
        out_shape=jax.ShapeDtypeStruct((B, S, H), jnp.float32),
        grid_spec=pltpu.PrefetchScalarGridSpec(
            num_scalar_prefetch=0,
            grid=(B // bb,),
            in_specs=data_specs + weight_specs,
            out_specs=pl.BlockSpec((bb, S, H), lambda b: (b, 0, 0)),
        ),
        compiler_params=pltpu.CompilerParams(
            dimension_semantics=("parallel",),
            vmem_limit_bytes=vmem_limit),
    )(x.astype(jnp.float32), mask_bias, ek, ev, eq, *weights)


def init_params(key, H, times=2):
    """Deterministic PyTorch-Linear-style uniform init (weights stored as (in, out))."""
    ks = jax.random.split(key, 6)

    def lin(k, fan_in, fan_out):
        kw, kb = jax.random.split(k)
        bound = 1.0 / math.sqrt(fan_in)
        w = jax.random.uniform(kw, (fan_in, fan_out), jnp.float32, -bound, bound)
        b = jax.random.uniform(kb, (1, fan_out), jnp.float32, -bound, bound)
        return w, b

    wq, bq = lin(ks[0], H, H)
    wk, bk = lin(ks[1], H, H)
    wv, bv = lin(ks[2], H, H)
    wo, bo = lin(ks[3], H, H)
    w1, b1 = lin(ks[4], H, H * times)
    w2, b2 = lin(ks[5], H * times, H)
    ones = jnp.ones((1, H), jnp.float32)
    zeros = jnp.zeros((1, H), jnp.float32)
    return dict(wq=wq, bq=bq, wk=wk, bk=bk, wv=wv, bv=bv, wo=wo, bo=bo,
                ln1w=ones, ln1b=zeros, w1=w1, b1=b1, w2=w2, b2=b2,
                ln2w=ones, ln2b=zeros)


def _reference(x, graph, ek, ev, eq, params, heads):
    """Pure-JAX f32 reference matching the PyTorch forward (use_edge=True, remove_mask=False, p=0)."""
    B, S, H = x.shape
    dh = H // heads
    scale = 1.0 / math.sqrt(dh)

    def lin(z, w, b):
        return z @ w + b

    q = lin(x, params["wq"], params["bq"]).reshape(B, S, heads, dh)
    k = lin(x, params["wk"], params["bk"]).reshape(B, S, heads, dh)
    v = lin(x, params["wv"], params["bv"]).reshape(B, S, heads, dh)

    scores = (jnp.einsum('bqhd,bkhd->bhqk', q, k)
              + jnp.einsum('bqhd,bqkd->bhqk', q, ek)
              + jnp.einsum('bkqd,bkhd->bhqk', eq, k)
              + jnp.einsum('bkqd,bqkd->bqk', eq, ek)[:, None]) * scale
    scores = jnp.where(graph[:, None] == 0, -100000.0, scores)
    attn = jax.nn.softmax(scores, axis=-1)
    o = (jnp.einsum('bhqk,bkhd->bqhd', attn, v)
         + jnp.einsum('bhqk,bqkd->bqhd', attn, ev)).reshape(B, S, H)
    o = lin(o, params["wo"], params["bo"])

    def ln(z, w, b):
        mu = z.mean(-1, keepdims=True)
        var = ((z - mu) ** 2).mean(-1, keepdims=True)
        return (z - mu) / jnp.sqrt(var + 1e-5) * w + b

    h1 = ln(x + o, params["ln1w"], params["ln1b"])
    f = jnp.maximum(lin(h1, params["w1"], params["b1"]), 0.0)
    f = lin(f, params["w2"], params["b2"])
    return ln(h1 + f, params["ln2w"], params["ln2b"])


if __name__ == "__main__":
    B, S, H, heads = 2, 8, 32, 4
    dh = H // heads

    key = jax.random.PRNGKey(0)
    kx, kg, kek, kev, keq, kp = jax.random.split(key, 6)

    x = jax.random.normal(kx, (B, S, H), jnp.float32)
    graph = (jax.random.uniform(kg, (B, S, S)) > 0.3).astype(jnp.float32)
    graph = jnp.maximum(graph, jnp.eye(S, dtype=jnp.float32)[None])        # keep diagonal attendable
    edge_key = jax.random.normal(kek, (B, S, S, dh), jnp.float32) * 0.1    # [b, q, k, d]
    edge_value = jax.random.normal(kev, (B, S, S, dh), jnp.float32) * 0.1  # [b, q, k, d]
    edge_query = jax.random.normal(keq, (B, S, S, dh), jnp.float32) * 0.1  # [b, k, q, d]

    params = init_params(kp, H, times=2)
    ref = _reference(x, graph, edge_key, edge_value, edge_query, params, heads)

    # f32 compute path: tight parity with the pure-JAX reference (approx-reciprocal only).
    out_f32 = transformer_layer_pallas(x, graph, edge_key, edge_value, edge_query, params, heads,
                                       compute_dtype=jnp.float32)
    out_f32 = jax.block_until_ready(out_f32)
    assert out_f32.shape == (B, S, H)
    assert bool(jnp.all(jnp.isfinite(out_f32)))
    assert bool(jnp.allclose(out_f32, ref, atol=5e-3, rtol=5e-3)), \
        f"f32 max abs diff {float(jnp.max(jnp.abs(out_f32 - ref)))}"

    # Default bf16-MXU-operand path: looser tolerance reflects bf16 operand rounding.
    out_bf16 = transformer_layer_pallas(x, graph, edge_key, edge_value, edge_query, params, heads,
                                        compute_dtype=jnp.bfloat16)
    out_bf16 = jax.block_until_ready(out_bf16)
    assert out_bf16.shape == (B, S, H)
    assert bool(jnp.all(jnp.isfinite(out_bf16)))
    assert bool(jnp.allclose(out_bf16, ref, atol=3e-2, rtol=3e-2)), \
        f"bf16 max abs diff {float(jnp.max(jnp.abs(out_bf16 - ref)))}"

    print("KERNEL_OK")
</pallas_src>

<mosaic_0001>
module attributes {stable_mosaic.version = 11 : i64} {
  func.func @_transformer_layer_kernel(%arg0: i32, %arg1: memref<1x8x32xf32, #tpu.memory_space<vmem>>, %arg2: memref<1x8x8xf32, #tpu.memory_space<vmem>>, %arg3: memref<1x8x8x8xf32, #tpu.memory_space<vmem>>, %arg4: memref<1x8x8x8xf32, #tpu.memory_space<vmem>>, %arg5: memref<1x8x8x8xf32, #tpu.memory_space<vmem>>, %arg6: memref<4x32x8xf32, #tpu.memory_space<vmem>>, %arg7: memref<4x8xf32, #tpu.memory_space<vmem>>, %arg8: memref<4x32x8xf32, #tpu.memory_space<vmem>>, %arg9: memref<4x8xf32, #tpu.memory_space<vmem>>, %arg10: memref<4x32x8xf32, #tpu.memory_space<vmem>>, %arg11: memref<4x8xf32, #tpu.memory_space<vmem>>, %arg12: memref<4x8x32xf32, #tpu.memory_space<vmem>>, %arg13: memref<1x32xf32, #tpu.memory_space<vmem>>, %arg14: memref<1x32xf32, #tpu.memory_space<vmem>>, %arg15: memref<1x32xf32, #tpu.memory_space<vmem>>, %arg16: memref<32x64xf32, #tpu.memory_space<vmem>>, %arg17: memref<1x64xf32, #tpu.memory_space<vmem>>, %arg18: memref<64x32xf32, #tpu.memory_space<vmem>>, %arg19: memref<1x32xf32, #tpu.memory_space<vmem>>, %arg20: memref<1x32xf32, #tpu.memory_space<vmem>>, %arg21: memref<1x32xf32, #tpu.memory_space<vmem>>, %arg22: memref<1x8x32xf32, #tpu.memory_space<vmem>>) attributes {dimension_semantics = [#tpu.dimension_semantics<parallel>], iteration_bounds = array<i64: 2>, scalar_prefetch = 0 : i64, scratch_operands = 0 : i64, tpu.core_type = #tpu.core_type<tc>, window_params = [{transform_indices = @transform_0, window_bounds = array<i64: 1, 8, 32>}, {transform_indices = @transform_1, window_bounds = array<i64: 1, 8, 8>}, {transform_indices = @transform_2, window_bounds = array<i64: 1, 8, 8, 8>}, {transform_indices = @transform_3, window_bounds = array<i64: 1, 8, 8, 8>}, {transform_indices = @transform_4, window_bounds = array<i64: 1, 8, 8, 8>}, {pipeline_mode = #tpu.pipeline_mode<synchronous>, transform_indices = @transform_5, window_bounds = array<i64: 4, 32, 8>}, {pipeline_mode = #tpu.pipeline_mode<synchronous>, transform_indices = @transform_6, window_bounds = array<i64: 4, 8>}, {pipeline_mode = #tpu.pipeline_mode<synchronous>, transform_indices = @transform_7, window_bounds = array<i64: 4, 32, 8>}, {pipeline_mode = #tpu.pipeline_mode<synchronous>, transform_indices = @transform_8, window_bounds = array<i64: 4, 8>}, {pipeline_mode = #tpu.pipeline_mode<synchronous>, transform_indices = @transform_9, window_bounds = array<i64: 4, 32, 8>}, {pipeline_mode = #tpu.pipeline_mode<synchronous>, transform_indices = @transform_10, window_bounds = array<i64: 4, 8>}, {pipeline_mode = #tpu.pipeline_mode<synchronous>, transform_indices = @transform_11, window_bounds = array<i64: 4, 8, 32>}, {pipeline_mode = #tpu.pipeline_mode<synchronous>, transform_indices = @transform_12, window_bounds = array<i64: 1, 32>}, {pipeline_mode = #tpu.pipeline_mode<synchronous>, transform_indices = @transform_13, window_bounds = array<i64: 1, 32>}, {pipeline_mode = #tpu.pipeline_mode<synchronous>, transform_indices = @transform_14, window_bounds = array<i64: 1, 32>}, {pipeline_mode = #tpu.pipeline_mode<synchronous>, transform_indices = @transform_15, window_bounds = array<i64: 32, 64>}, {pipeline_mode = #tpu.pipeline_mode<synchronous>, transform_indices = @transform_16, window_bounds = array<i64: 1, 64>}, {pipeline_mode = #tpu.pipeline_mode<synchronous>, transform_indices = @transform_17, window_bounds = array<i64: 64, 32>}, {pipeline_mode = #tpu.pipeline_mode<synchronous>, transform_indices = @transform_18, window_bounds = array<i64: 1, 32>}, {pipeline_mode = #tpu.pipeline_mode<synchronous>, transform_indices = @transform_19, window_bounds = array<i64: 1, 32>}, {pipeline_mode = #tpu.pipeline_mode<synchronous>, transform_indices = @transform_20, window_bounds = array<i64: 1, 32>}, {transform_indices = @transform_21, window_bounds = array<i64: 1, 8, 32>}]} {
    %c0 = arith.constant 0 : index
    %c0_0 = arith.constant 0 : index
    %c0_1 = arith.constant 0 : index
    %0 = vector.load %arg6[%c0, %c0_0, %c0_1] : memref<4x32x8xf32, #tpu.memory_space<vmem>>, vector<4x32x8xf32>
    %c0_2 = arith.constant 0 : index
    %c0_3 = arith.constant 0 : index
    %c0_4 = arith.constant 0 : index
    %1 = vector.load %arg8[%c0_2, %c0_3, %c0_4] : memref<4x32x8xf32, #tpu.memory_space<vmem>>, vector<4x32x8xf32>
    %c0_5 = arith.constant 0 : index
    %c0_6 = arith.constant 0 : index
    %c0_7 = arith.constant 0 : index
    %2 = vector.load %arg10[%c0_5, %c0_6, %c0_7] : memref<4x32x8xf32, #tpu.memory_space<vmem>>, vector<4x32x8xf32>
    %c0_8 = arith.constant 0 : index
    %c0_9 = arith.constant 0 : index
    %c0_10 = arith.constant 0 : index
    %3 = vector.load %arg12[%c0_8, %c0_9, %c0_10] : memref<4x8x32xf32, #tpu.memory_space<vmem>>, vector<4x8x32xf32>
    %c0_11 = arith.constant 0 : index
    %c0_12 = arith.constant 0 : index
    %4 = vector.load %arg7[%c0_11, %c0_12] : memref<4x8xf32, #tpu.memory_space<vmem>>, vector<4x8xf32>
    %5 = vector.shape_cast %4 : vector<4x8xf32> to vector<4x1x8xf32>
    %c0_13 = arith.constant 0 : index
    %c0_14 = arith.constant 0 : index
    %6 = vector.load %arg9[%c0_13, %c0_14] : memref<4x8xf32, #tpu.memory_space<vmem>>, vector<4x8xf32>
    %7 = vector.shape_cast %6 : vector<4x8xf32> to vector<4x1x8xf32>
    %c0_15 = arith.constant 0 : index
    %c0_16 = arith.constant 0 : index
    %8 = vector.load %arg11[%c0_15, %c0_16] : memref<4x8xf32, #tpu.memory_space<vmem>>, vector<4x8xf32>
    %9 = vector.shape_cast %8 : vector<4x8xf32> to vector<4x1x8xf32>
    %c0_17 = arith.constant 0 : index
    %c0_18 = arith.constant 0 : index
    %c0_19 = arith.constant 0 : index
    %10 = vector.load %arg1[%c0_17, %c0_18, %c0_19] : memref<1x8x32xf32, #tpu.memory_space<vmem>>, vector<1x8x32xf32>
    %11 = vector.shape_cast %10 : vector<1x8x32xf32> to vector<8x32xf32>
    %12 = vector.shape_cast %11 : vector<8x32xf32> to vector<1x8x32xf32>
    %13 = vector.shape_cast %12 : vector<1x8x32xf32> to vector<1x8x32xf32>
    %14 = vector.broadcast %13 : vector<1x8x32xf32> to vector<4x8x32xf32>
    "tpu.trace_start"() <{level = 10 : i32, message = "hsk,hkd->hsd"}> : () -> ()
    %cst = arith.constant dense<0.000000e+00> : vector<4x8x8xf32>
    %15 = tpu.matmul %14, %0, %cst {dimension_numbers = #tpu.dot_dimension_numbers<[2], [1], [1], [2], [0, 0, 0, 1, 1, 2], [0], [0]>} : vector<4x8x32xf32>, vector<4x32x8xf32>, vector<4x8x8xf32> -> vector<4x8x8xf32>
    "tpu.trace_stop"() : () -> ()
    %16 = vector.broadcast %5 : vector<4x1x8xf32> to vector<4x8x8xf32>
    %17 = arith.addf %15, %16 : vector<4x8x8xf32>
    "tpu.trace_start"() <{level = 10 : i32, message = "hsk,hkd->hsd"}> : () -> ()
    %cst_20 = arith.constant dense<0.000000e+00> : vector<4x8x8xf32>
    %18 = tpu.matmul %14, %1, %cst_20 {dimension_numbers = #tpu.dot_dimension_numbers<[2], [1], [1], [2], [0, 0, 0, 1, 1, 2], [0], [0]>} : vector<4x8x32xf32>, vector<4x32x8xf32>, vector<4x8x8xf32> -> vector<4x8x8xf32>
    "tpu.trace_stop"() : () -> ()
    %19 = vector.broadcast %7 : vector<4x1x8xf32> to vector<4x8x8xf32>
    %20 = arith.addf %18, %19 : vector<4x8x8xf32>
    "tpu.trace_start"() <{level = 10 : i32, message = "hsk,hkd->hsd"}> : () -> ()
    %cst_21 = arith.constant dense<0.000000e+00> : vector<4x8x8xf32>
    %21 = tpu.matmul %14, %2, %cst_21 {dimension_numbers = #tpu.dot_dimension_numbers<[2], [1], [1], [2], [0, 0, 0, 1, 1, 2], [0], [0]>} : vector<4x8x32xf32>, vector<4x32x8xf32>, vector<4x8x8xf32> -> vector<4x8x8xf32>
    "tpu.trace_stop"() : () -> ()
    %22 = vector.broadcast %9 : vector<4x1x8xf32> to vector<4x8x8xf32>
    %23 = arith.addf %21, %22 : vector<4x8x8xf32>
    %c0_22 = arith.constant 0 : index
    %c0_23 = arith.constant 0 : index
    %c0_24 = arith.constant 0 : index
    %c0_25 = arith.constant 0 : index
    %24 = vector.load %arg3[%c0_22, %c0_23, %c0_24, %c0_25] : memref<1x8x8x8xf32, #tpu.memory_space<vmem>>, vector<1x8x8x8xf32>
    %25 = vector.shape_cast %24 : vector<1x8x8x8xf32> to vector<8x8x8xf32>
    %c0_26 = arith.constant 0 : index
    %c0_27 = arith.constant 0 : index
    %c0_28 = arith.constant 0 : index
    %c0_29 = arith.constant 0 : index
    %26 = vector.load %arg4[%c0_26, %c0_27, %c0_28, %c0_29] : memref<1x8x8x8xf32, #tpu.memory_space<vmem>>, vector<1x8x8x8xf32>
    %27 = vector.shape_cast %26 : vector<1x8x8x8xf32> to vector<8x8x8xf32>
    %c0_30 = arith.constant 0 : index
    %c0_31 = arith.constant 0 : index
    %c0_32 = arith.constant 0 : index
    %c0_33 = arith.constant 0 : index
    %28 = vector.load %arg5[%c0_30, %c0_31, %c0_32, %c0_33] : memref<1x8x8x8xf32, #tpu.memory_space<vmem>>, vector<1x8x8x8xf32>
    %29 = vector.shape_cast %28 : vector<1x8x8x8xf32> to vector<8x8x8xf32>
    "tpu.trace_start"() <{level = 10 : i32, message = "hqd,hkd->hqk"}> : () -> ()
    %cst_34 = arith.constant dense<0.000000e+00> : vector<4x8x8xf32>
    %30 = tpu.matmul %17, %20, %cst_34 {dimension_numbers = #tpu.dot_dimension_numbers<[2], [2], [1], [1], [0, 0, 0, 1, 1, 1], [0], [0]>} : vector<4x8x8xf32>, vector<4x8x8xf32>, vector<4x8x8xf32> -> vector<4x8x8xf32>
    "tpu.trace_stop"() : () -> ()
    %31 = vector.extract_strided_slice %17 {offsets = [0, 0, 0], sizes = [4, 1, 8], strides = [1, 1, 1]} : vector<4x8x8xf32> to vector<4x1x8xf32>
    %32 = vector.shape_cast %31 : vector<4x1x8xf32> to vector<4x8xf32>
    %33 = vector.shape_cast %32 : vector<4x8xf32> to vector<1x4x8xf32>
    %34 = vector.extract_strided_slice %17 {offsets = [0, 1, 0], sizes = [4, 1, 8], strides = [1, 1, 1]} : vector<4x8x8xf32> to vector<4x1x8xf32>
    %35 = vector.shape_cast %34 : vector<4x1x8xf32> to vector<4x8xf32>
    %36 = vector.shape_cast %35 : vector<4x8xf32> to vector<1x4x8xf32>
    %37 = vector.extract_strided_slice %17 {offsets = [0, 2, 0], sizes = [4, 1, 8], strides = [1, 1, 1]} : vector<4x8x8xf32> to vector<4x1x8xf32>
    %38 = vector.shape_cast %37 : vector<4x1x8xf32> to vector<4x8xf32>
    %39 = vector.shape_cast %38 : vector<4x8xf32> to vector<1x4x8xf32>
    %40 = vector.extract_strided_slice %17 {offsets = [0, 3, 0], sizes = [4, 1, 8], strides = [1, 1, 1]} : vector<4x8x8xf32> to vector<4x1x8xf32>
    %41 = vector.shape_cast %40 : vector<4x1x8xf32> to vector<4x8xf32>
    %42 = vector.shape_cast %41 : vector<4x8xf32> to vector<1x4x8xf32>
    %43 = vector.extract_strided_slice %17 {offsets = [0, 4, 0], sizes = [4, 1, 8], strides = [1, 1, 1]} : vector<4x8x8xf32> to vector<4x1x8xf32>
    %44 = vector.shape_cast %43 : vector<4x1x8xf32> to vector<4x8xf32>
    %45 = vector.shape_cast %44 : vector<4x8xf32> to vector<1x4x8xf32>
    %46 = vector.extract_strided_slice %17 {offsets = [0, 5, 0], sizes = [4, 1, 8], strides = [1, 1, 1]} : vector<4x8x8xf32> to vector<4x1x8xf32>
    %47 = vector.shape_cast %46 : vector<4x1x8xf32> to vector<4x8xf32>
    %48 = vector.shape_cast %47 : vector<4x8xf32> to vector<1x4x8xf32>
    %49 = vector.extract_strided_slice %17 {offsets = [0, 6, 0], sizes = [4, 1, 8], strides = [1, 1, 1]} : vector<4x8x8xf32> to vector<4x1x8xf32>
    %50 = vector.shape_cast %49 : vector<4x1x8xf32> to vector<4x8xf32>
    %51 = vector.shape_cast %50 : vector<4x8xf32> to vector<1x4x8xf32>
    %52 = vector.extract_strided_slice %17 {offsets = [0, 7, 0], sizes = [4, 1, 8], strides = [1, 1, 1]} : vector<4x8x8xf32> to vector<4x1x8xf32>
    %53 = vector.shape_cast %52 : vector<4x1x8xf32> to vector<4x8xf32>
    %54 = vector.shape_cast %53 : vector<4x8xf32> to vector<1x4x8xf32>
    %55 = tpu.concatenate %33, %36, %39, %42, %45, %48, %51, %54 in 0 : vector<1x4x8xf32>, vector<1x4x8xf32>, vector<1x4x8xf32>, vector<1x4x8xf32>, vector<1x4x8xf32>, vector<1x4x8xf32>, vector<1x4x8xf32>, vector<1x4x8xf32> -> vector<8x4x8xf32>
    "tpu.trace_start"() <{level = 10 : i32, message = "qhd,qkd->qhk"}> : () -> ()
    %cst_35 = arith.constant dense<0.000000e+00> : vector<8x4x8xf32>
    %56 = tpu.matmul %55, %25, %cst_35 {dimension_numbers = #tpu.dot_dimension_numbers<[2], [2], [1], [1], [0, 0, 0, 1, 1, 1], [0], [0]>} : vector<8x4x8xf32>, vector<8x8x8xf32>, vector<8x4x8xf32> -> vector<8x4x8xf32>
    "tpu.trace_stop"() : () -> ()
    %57 = vector.extract_strided_slice %56 {offsets = [0, 0, 0], sizes = [8, 1, 8], strides = [1, 1, 1]} : vector<8x4x8xf32> to vector<8x1x8xf32>
    %58 = vector.shape_cast %57 : vector<8x1x8xf32> to vector<8x8xf32>
    %59 = vector.shape_cast %58 : vector<8x8xf32> to vector<1x8x8xf32>
    %60 = vector.extract_strided_slice %56 {offsets = [0, 1, 0], sizes = [8, 1, 8], strides = [1, 1, 1]} : vector<8x4x8xf32> to vector<8x1x8xf32>
    %61 = vector.shape_cast %60 : vector<8x1x8xf32> to vector<8x8xf32>
    %62 = vector.shape_cast %61 : vector<8x8xf32> to vector<1x8x8xf32>
    %63 = vector.extract_strided_slice %56 {offsets = [0, 2, 0], sizes = [8, 1, 8], strides = [1, 1, 1]} : vector<8x4x8xf32> to vector<8x1x8xf32>
    %64 = vector.shape_cast %63 : vector<8x1x8xf32> to vector<8x8xf32>
    %65 = vector.shape_cast %64 : vector<8x8xf32> to vector<1x8x8xf32>
    %66 = vector.extract_strided_slice %56 {offsets = [0, 3, 0], sizes = [8, 1, 8], strides = [1, 1, 1]} : vector<8x4x8xf32> to vector<8x1x8xf32>
    %67 = vector.shape_cast %66 : vector<8x1x8xf32> to vector<8x8xf32>
    %68 = vector.shape_cast %67 : vector<8x8xf32> to vector<1x8x8xf32>
    %69 = tpu.concatenate %59, %62, %65, %68 in 0 : vector<1x8x8xf32>, vector<1x8x8xf32>, vector<1x8x8xf32>, vector<1x8x8xf32> -> vector<4x8x8xf32>
    %70 = vector.shape_cast %20 : vector<4x8x8xf32> to vector<4x1x8x8xf32>
    %71 = vector.shape_cast %29 : vector<8x8x8xf32> to vector<1x8x8x8xf32>
    %72 = vector.broadcast %70 : vector<4x1x8x8xf32> to vector<4x8x8x8xf32>
    %73 = vector.broadcast %71 : vector<1x8x8x8xf32> to vector<4x8x8x8xf32>
    %74 = arith.mulf %72, %73 : vector<4x8x8x8xf32>
    %cst_36 = arith.constant dense<0.000000e+00> : vector<4x8x8xf32>
    %75 = vector.multi_reduction <add>, %74, %cst_36 [3] : vector<4x8x8x8xf32> to vector<4x8x8xf32>
    %76 = arith.mulf %29, %25 : vector<8x8x8xf32>
    %cst_37 = arith.constant dense<0.000000e+00> : vector<8x8xf32>
    %77 = vector.multi_reduction <add>, %76, %cst_37 [2] : vector<8x8x8xf32> to vector<8x8xf32>
    %78 = arith.addf %30, %69 : vector<4x8x8xf32>
    %79 = arith.addf %78, %75 : vector<4x8x8xf32>
    %c0_38 = arith.constant 0 : index
    %c0_39 = arith.constant 0 : index
    %c0_40 = arith.constant 0 : index
    %80 = vector.load %arg2[%c0_38, %c0_39, %c0_40] : memref<1x8x8xf32, #tpu.memory_space<vmem>>, vector<1x8x8xf32>
    %81 = vector.shape_cast %80 : vector<1x8x8xf32> to vector<8x8xf32>
    %82 = arith.addf %77, %81 : vector<8x8xf32>
    %83 = vector.shape_cast %82 : vector<8x8xf32> to vector<1x8x8xf32>
    %84 = vector.broadcast %83 : vector<1x8x8xf32> to vector<4x8x8xf32>
    %85 = arith.addf %79, %84 : vector<4x8x8xf32>
    %cst_41 = arith.constant dense<0xFF800000> : vector<4x8xf32>
    %86 = vector.multi_reduction <maximumf>, %85, %cst_41 [2] : vector<4x8x8xf32> to vector<4x8xf32>
    %87 = vector.shape_cast %86 : vector<4x8xf32> to vector<4x8x1xf32>
    %88 = vector.broadcast %87 : vector<4x8x1xf32> to vector<4x8x8xf32>
    %89 = arith.subf %85, %88 : vector<4x8x8xf32>
    %90 = math.exp %89 : vector<4x8x8xf32>
    %cst_42 = arith.constant dense<0.000000e+00> : vector<4x8xf32>
    %91 = vector.multi_reduction <add>, %90, %cst_42 [2] : vector<4x8x8xf32> to vector<4x8xf32>
    %92 = vector.shape_cast %91 : vector<4x8xf32> to vector<4x8x1xf32>
    %93 = tpu.reciprocal %92 {approx = true} : vector<4x8x1xf32> -> vector<4x8x1xf32>
    %94 = vector.broadcast %93 : vector<4x8x1xf32> to vector<4x8x8xf32>
    %95 = arith.mulf %90, %94 : vector<4x8x8xf32>
    "tpu.trace_start"() <{level = 10 : i32, message = "hqk,hkd->hqd"}> : () -> ()
    %cst_43 = arith.constant dense<0.000000e+00> : vector<4x8x8xf32>
    %96 = tpu.matmul %95, %23, %cst_43 {dimension_numbers = #tpu.dot_dimension_numbers<[2], [1], [1], [2], [0, 0, 0, 1, 1, 2], [0], [0]>} : vector<4x8x8xf32>, vector<4x8x8xf32>, vector<4x8x8xf32> -> vector<4x8x8xf32>
    "tpu.trace_stop"() : () -> ()
    %97 = vector.extract_strided_slice %95 {offsets = [0, 0, 0], sizes = [4, 1, 8], strides = [1, 1, 1]} : vector<4x8x8xf32> to vector<4x1x8xf32>
    %98 = vector.shape_cast %97 : vector<4x1x8xf32> to vector<4x8xf32>
    %99 = vector.shape_cast %98 : vector<4x8xf32> to vector<1x4x8xf32>
    %100 = vector.extract_strided_slice %95 {offsets = [0, 1, 0], sizes = [4, 1, 8], strides = [1, 1, 1]} : vector<4x8x8xf32> to vector<4x1x8xf32>
    %101 = vector.shape_cast %100 : vector<4x1x8xf32> to vector<4x8xf32>
    %102 = vector.shape_cast %101 : vector<4x8xf32> to vector<1x4x8xf32>
    %103 = vector.extract_strided_slice %95 {offsets = [0, 2, 0], sizes = [4, 1, 8], strides = [1, 1, 1]} : vector<4x8x8xf32> to vector<4x1x8xf32>
    %104 = vector.shape_cast %103 : vector<4x1x8xf32> to vector<4x8xf32>
    %105 = vector.shape_cast %104 : vector<4x8xf32> to vector<1x4x8xf32>
    %106 = vector.extract_strided_slice %95 {offsets = [0, 3, 0], sizes = [4, 1, 8], strides = [1, 1, 1]} : vector<4x8x8xf32> to vector<4x1x8xf32>
    %107 = vector.shape_cast %106 : vector<4x1x8xf32> to vector<4x8xf32>
    %108 = vector.shape_cast %107 : vector<4x8xf32> to vector<1x4x8xf32>
    %109 = vector.extract_strided_slice %95 {offsets = [0, 4, 0], sizes = [4, 1, 8], strides = [1, 1, 1]} : vector<4x8x8xf32> to vector<4x1x8xf32>
    %110 = vector.shape_cast %109 : vector<4x1x8xf32> to vector<4x8xf32>
    %111 = vector.shape_cast %110 : vector<4x8xf32> to vector<1x4x8xf32>
    %112 = vector.extract_strided_slice %95 {offsets = [0, 5, 0], sizes = [4, 1, 8], strides = [1, 1, 1]} : vector<4x8x8xf32> to vector<4x1x8xf32>
    %113 = vector.shape_cast %112 : vector<4x1x8xf32> to vector<4x8xf32>
    %114 = vector.shape_cast %113 : vector<4x8xf32> to vector<1x4x8xf32>
    %115 = vector.extract_strided_slice %95 {offsets = [0, 6, 0], sizes = [4, 1, 8], strides = [1, 1, 1]} : vector<4x8x8xf32> to vector<4x1x8xf32>
    %116 = vector.shape_cast %115 : vector<4x1x8xf32> to vector<4x8xf32>
    %117 = vector.shape_cast %116 : vector<4x8xf32> to vector<1x4x8xf32>
    %118 = vector.extract_strided_slice %95 {offsets = [0, 7, 0], sizes = [4, 1, 8], strides = [1, 1, 1]} : vector<4x8x8xf32> to vector<4x1x8xf32>
    %119 = vector.shape_cast %118 : vector<4x1x8xf32> to vector<4x8xf32>
    %120 = vector.shape_cast %119 : vector<4x8xf32> to vector<1x4x8xf32>
    %121 = tpu.concatenate %99, %102, %105, %108, %111, %114, %117, %120 in 0 : vector<1x4x8xf32>, vector<1x4x8xf32>, vector<1x4x8xf32>, vector<1x4x8xf32>, vector<1x4x8xf32>, vector<1x4x8xf32>, vector<1x4x8xf32>, vector<1x4x8xf32> -> vector<8x4x8xf32>
    "tpu.trace_start"() <{level = 10 : i32, message = "qhk,qkd->qhd"}> : () -> ()
    %cst_44 = arith.constant dense<0.000000e+00> : vector<8x4x8xf32>
    %122 = tpu.matmul %121, %27, %cst_44 {dimension_numbers = #tpu.dot_dimension_numbers<[2], [1], [1], [2], [0, 0, 0, 1, 1, 2], [0], [0]>} : vector<8x4x8xf32>, vector<8x8x8xf32>, vector<8x4x8xf32> -> vector<8x4x8xf32>
    "tpu.trace_stop"() : () -> ()
    %123 = vector.extract_strided_slice %122 {offsets = [0, 0, 0], sizes = [8, 1, 8], strides = [1, 1, 1]} : vector<8x4x8xf32> to vector<8x1x8xf32>
    %124 = vector.shape_cast %123 : vector<8x1x8xf32> to vector<8x8xf32>
    %125 = vector.shape_cast %124 : vector<8x8xf32> to vector<1x8x8xf32>
    %126 = vector.extract_strided_slice %122 {offsets = [0, 1, 0], sizes = [8, 1, 8], strides = [1, 1, 1]} : vector<8x4x8xf32> to vector<8x1x8xf32>
    %127 = vector.shape_cast %126 : vector<8x1x8xf32> to vector<8x8xf32>
    %128 = vector.shape_cast %127 : vector<8x8xf32> to vector<1x8x8xf32>
    %129 = vector.extract_strided_slice %122 {offsets = [0, 2, 0], sizes = [8, 1, 8], strides = [1, 1, 1]} : vector<8x4x8xf32> to vector<8x1x8xf32>
    %130 = vector.shape_cast %129 : vector<8x1x8xf32> to vector<8x8xf32>
    %131 = vector.shape_cast %130 : vector<8x8xf32> to vector<1x8x8xf32>
    %132 = vector.extract_strided_slice %122 {offsets = [0, 3, 0], sizes = [8, 1, 8], strides = [1, 1, 1]} : vector<8x4x8xf32> to vector<8x1x8xf32>
    %133 = vector.shape_cast %132 : vector<8x1x8xf32> to vector<8x8xf32>
    %134 = vector.shape_cast %133 : vector<8x8xf32> to vector<1x8x8xf32>
    %135 = tpu.concatenate %125, %128, %131, %134 in 0 : vector<1x8x8xf32>, vector<1x8x8xf32>, vector<1x8x8xf32>, vector<1x8x8xf32> -> vector<4x8x8xf32>
    %136 = arith.addf %96, %135 : vector<4x8x8xf32>
    "tpu.trace_start"() <{level = 10 : i32, message = "hqd,hdo->hqo"}> : () -> ()
    %cst_45 = arith.constant dense<0.000000e+00> : vector<4x8x32xf32>
    %137 = tpu.matmul %136, %3, %cst_45 {dimension_numbers = #tpu.dot_dimension_numbers<[2], [1], [1], [2], [0, 0, 0, 1, 1, 2], [0], [0]>} : vector<4x8x8xf32>, vector<4x8x32xf32>, vector<4x8x32xf32> -> vector<4x8x32xf32>
    "tpu.trace_stop"() : () -> ()
    %cst_46 = arith.constant dense<0.000000e+00> : vector<8x32xf32>
    %138 = vector.multi_reduction <add>, %137, %cst_46 [0] : vector<4x8x32xf32> to vector<8x32xf32>
    %c0_47 = arith.constant 0 : index
    %c0_48 = arith.constant 0 : index
    %139 = vector.load %arg13[%c0_47, %c0_48] : memref<1x32xf32, #tpu.memory_space<vmem>>, vector<1x32xf32>
    %140 = vector.broadcast %139 : vector<1x32xf32> to vector<8x32xf32>
    %141 = arith.addf %138, %140 : vector<8x32xf32>
    %142 = arith.addf %11, %141 : vector<8x32xf32>
    %cst_49 = arith.constant dense<0.000000e+00> : vector<8xf32>
    %143 = vector.multi_reduction <add>, %142, %cst_49 [1] : vector<8x32xf32> to vector<8xf32>
    %144 = vector.shape_cast %143 : vector<8xf32> to vector<8x1xf32>
    %cst_50 = arith.constant 3.200000e+01 : f32
    %145 = vector.broadcast %cst_50 : f32 to vector<8x1xf32>
    %146 = arith.divf %144, %145 : vector<8x1xf32>
    %147 = vector.broadcast %146 : vector<8x1xf32> to vector<8x32xf32>
    %148 = arith.subf %142, %147 : vector<8x32xf32>
    %149 = arith.mulf %148, %148 : vector<8x32xf32>
    %cst_51 = arith.constant dense<0.000000e+00> : vector<8xf32>
    %150 = vector.multi_reduction <add>, %149, %cst_51 [1] : vector<8x32xf32> to vector<8xf32>
    %151 = vector.shape_cast %150 : vector<8xf32> to vector<8x1xf32>
    %cst_52 = arith.constant 3.200000e+01 : f32
    %152 = vector.broadcast %cst_52 : f32 to vector<8x1xf32>
    %153 = arith.divf %151, %152 : vector<8x1xf32>
    %154 = vector.broadcast %146 : vector<8x1xf32> to vector<8x32xf32>
    %155 = arith.subf %142, %154 : vector<8x32xf32>
    %cst_53 = arith.constant 9.99999974E-6 : f32
    %156 = vector.broadcast %cst_53 : f32 to vector<8x1xf32>
    %157 = arith.addf %153, %156 : vector<8x1xf32>
    %158 = math.rsqrt %157 : vector<8x1xf32>
    %159 = vector.broadcast %158 : vector<8x1xf32> to vector<8x32xf32>
    %160 = arith.mulf %155, %159 : vector<8x32xf32>
    %c0_54 = arith.constant 0 : index
    %c0_55 = arith.constant 0 : index
    %161 = vector.load %arg14[%c0_54, %c0_55] : memref<1x32xf32, #tpu.memory_space<vmem>>, vector<1x32xf32>
    %162 = vector.broadcast %161 : vector<1x32xf32> to vector<8x32xf32>
    %163 = arith.mulf %160, %162 : vector<8x32xf32>
    %c0_56 = arith.constant 0 : index
    %c0_57 = arith.constant 0 : index
    %164 = vector.load %arg15[%c0_56, %c0_57] : memref<1x32xf32, #tpu.memory_space<vmem>>, vector<1x32xf32>
    %165 = vector.broadcast %164 : vector<1x32xf32> to vector<8x32xf32>
    %166 = arith.addf %163, %165 : vector<8x32xf32>
    %c0_58 = arith.constant 0 : index
    %c0_59 = arith.constant 0 : index
    %167 = vector.load %arg16[%c0_58, %c0_59] : memref<32x64xf32, #tpu.memory_space<vmem>>, vector<32x64xf32>
    %cst_60 = arith.constant dense<0.000000e+00> : vector<8x64xf32>
    %168 = tpu.matmul %166, %167, %cst_60 {dimension_numbers = #tpu.dot_dimension_numbers<[1], [0], [0], [1], [0, 0, 1, 1], [], []>} : vector<8x32xf32>, vector<32x64xf32>, vector<8x64xf32> -> vector<8x64xf32>
    %c0_61 = arith.constant 0 : index
    %c0_62 = arith.constant 0 : index
    %169 = vector.load %arg17[%c0_61, %c0_62] : memref<1x64xf32, #tpu.memory_space<vmem>>, vector<1x64xf32>
    %170 = vector.broadcast %169 : vector<1x64xf32> to vector<8x64xf32>
    %171 = arith.addf %168, %170 : vector<8x64xf32>
    %cst_63 = arith.constant 0.000000e+00 : f32
    %172 = vector.broadcast %cst_63 : f32 to vector<8x64xf32>
    %173 = arith.maximumf %171, %172 : vector<8x64xf32>
    %c0_64 = arith.constant 0 : index
    %c0_65 = arith.constant 0 : index
    %174 = vector.load %arg18[%c0_64, %c0_65] : memref<64x32xf32, #tpu.memory_space<vmem>>, vector<64x32xf32>
    %cst_66 = arith.constant dense<0.000000e+00> : vector<8x32xf32>
    %175 = tpu.matmul %173, %174, %cst_66 {dimension_numbers = #tpu.dot_dimension_numbers<[1], [0], [0], [1], [0, 0, 1, 1], [], []>} : vector<8x64xf32>, vector<64x32xf32>, vector<8x32xf32> -> vector<8x32xf32>
    %c0_67 = arith.constant 0 : index
    %c0_68 = arith.constant 0 : index
    %176 = vector.load %arg19[%c0_67, %c0_68] : memref<1x32xf32, #tpu.memory_space<vmem>>, vector<1x32xf32>
    %177 = vector.broadcast %176 : vector<1x32xf32> to vector<8x32xf32>
    %178 = arith.addf %175, %177 : vector<8x32xf32>
    %179 = arith.addf %166, %178 : vector<8x32xf32>
    %cst_69 = arith.constant dense<0.000000e+00> : vector<8xf32>
    %180 = vector.multi_reduction <add>, %179, %cst_69 [1] : vector<8x32xf32> to vector<8xf32>
    %181 = vector.shape_cast %180 : vector<8xf32> to vector<8x1xf32>
    %cst_70 = arith.constant 3.200000e+01 : f32
    %182 = vector.broadcast %cst_70 : f32 to vector<8x1xf32>
    %183 = arith.divf %181, %182 : vector<8x1xf32>
    %184 = vector.broadcast %183 : vector<8x1xf32> to vector<8x32xf32>
    %185 = arith.subf %179, %184 : vector<8x32xf32>
    %186 = arith.mulf %185, %185 : vector<8x32xf32>
    %cst_71 = arith.constant dense<0.000000e+00> : vector<8xf32>
    %187 = vector.multi_reduction <add>, %186, %cst_71 [1] : vector<8x32xf32> to vector<8xf32>
    %188 = vector.shape_cast %187 : vector<8xf32> to vector<8x1xf32>
    %cst_72 = arith.constant 3.200000e+01 : f32
    %189 = vector.broadcast %cst_72 : f32 to vector<8x1xf32>
    %190 = arith.divf %188, %189 : vector<8x1xf32>
    %191 = vector.broadcast %183 : vector<8x1xf32> to vector<8x32xf32>
    %192 = arith.subf %179, %191 : vector<8x32xf32>
    %cst_73 = arith.constant 9.99999974E-6 : f32
    %193 = vector.broadcast %cst_73 : f32 to vector<8x1xf32>
    %194 = arith.addf %190, %193 : vector<8x1xf32>
    %195 = math.rsqrt %194 : vector<8x1xf32>
    %196 = vector.broadcast %195 : vector<8x1xf32> to vector<8x32xf32>
    %197 = arith.mulf %192, %196 : vector<8x32xf32>
    %c0_74 = arith.constant 0 : index
    %c0_75 = arith.constant 0 : index
    %198 = vector.load %arg20[%c0_74, %c0_75] : memref<1x32xf32, #tpu.memory_space<vmem>>, vector<1x32xf32>
    %199 = vector.broadcast %198 : vector<1x32xf32> to vector<8x32xf32>
    %200 = arith.mulf %197, %199 : vector<8x32xf32>
    %c0_76 = arith.constant 0 : index
    %c0_77 = arith.constant 0 : index
    %201 = vector.load %arg21[%c0_76, %c0_77] : memref<1x32xf32, #tpu.memory_space<vmem>>, vector<1x32xf32>
    %202 = vector.broadcast %201 : vector<1x32xf32> to vector<8x32xf32>
    %203 = arith.addf %200, %202 : vector<8x32xf32>
    %c0_78 = arith.constant 0 : index
    %c0_79 = arith.constant 0 : index
    %c0_80 = arith.constant 0 : index
    %204 = vector.load %arg22[%c0_78, %c0_79, %c0_80] : memref<1x8x32xf32, #tpu.memory_space<vmem>>, vector<1x8x32xf32>
    %205 = vector.shape_cast %204 : vector<1x8x32xf32> to vector<8x32xf32>
    %206 = vector.shape_cast %203 : vector<8x32xf32> to vector<1x8x32xf32>
    tpu.vector_store %arg22[%c0_78, %c0_79, %c0_80], %206 {strides = array<i32>} : memref<1x8x32xf32, #tpu.memory_space<vmem>>, vector<1x8x32xf32>,
    return
  }
  func.func @transform_0(%arg0: i32) -> (i32, i32, i32) {
    %c0_i32 = arith.constant 0 : i32
    %c0_i32_0 = arith.constant 0 : i32
    %c0_i32_1 = arith.constant 0 : i32
    return %arg0, %c0_i32, %c0_i32_0 : i32, i32, i32
  }
  func.func @transform_1(%arg0: i32) -> (i32, i32, i32) {
    %c0_i32 = arith.constant 0 : i32
    %c0_i32_0 = arith.constant 0 : i32
    %c0_i32_1 = arith.constant 0 : i32
    return %arg0, %c0_i32, %c0_i32_0 : i32, i32, i32
  }
  func.func @transform_2(%arg0: i32) -> (i32, i32, i32, i32) {
    %c0_i32 = arith.constant 0 : i32
    %c0_i32_0 = arith.constant 0 : i32
    %c0_i32_1 = arith.constant 0 : i32
    %c0_i32_2 = arith.constant 0 : i32
    return %arg0, %c0_i32, %c0_i32_0, %c0_i32_1 : i32, i32, i32, i32
  }
  func.func @transform_3(%arg0: i32) -> (i32, i32, i32, i32) {
    %c0_i32 = arith.constant 0 : i32
    %c0_i32_0 = arith.constant 0 : i32
    %c0_i32_1 = arith.constant 0 : i32
    %c0_i32_2 = arith.constant 0 : i32
    return %arg0, %c0_i32, %c0_i32_0, %c0_i32_1 : i32, i32, i32, i32
  }
  func.func @transform_4(%arg0: i32) -> (i32, i32, i32, i32) {
    %c0_i32 = arith.constant 0 : i32
    %c0_i32_0 = arith.constant 0 : i32
    %c0_i32_1 = arith.constant 0 : i32
    %c0_i32_2 = arith.constant 0 : i32
    return %arg0, %c0_i32, %c0_i32_0, %c0_i32_1 : i32, i32, i32, i32
  }
  func.func @transform_5(%arg0: i32) -> (i32, i32, i32) {
    %c0_i32 = arith.constant 0 : i32
    %c0_i32_0 = arith.constant 0 : i32
    %c0_i32_1 = arith.constant 0 : i32
    %c0_i32_2 = arith.constant 0 : i32
    return %c0_i32, %c0_i32_0, %c0_i32_1 : i32, i32, i32
  }
  func.func @transform_6(%arg0: i32) -> (i32, i32) {
    %c0_i32 = arith.constant 0 : i32
    %c0_i32_0 = arith.constant 0 : i32
    %c0_i32_1 = arith.constant 0 : i32
    return %c0_i32, %c0_i32_0 : i32, i32
  }
  func.func @transform_7(%arg0: i32) -> (i32, i32, i32) {
    %c0_i32 = arith.constant 0 : i32
    %c0_i32_0 = arith.constant 0 : i32
    %c0_i32_1 = arith.constant 0 : i32
    %c0_i32_2 = arith.constant 0 : i32
    return %c0_i32, %c0_i32_0, %c0_i32_1 : i32, i32, i32
  }
  func.func @transform_8(%arg0: i32) -> (i32, i32) {
    %c0_i32 = arith.constant 0 : i32
    %c0_i32_0 = arith.constant 0 : i32
    %c0_i32_1 = arith.constant 0 : i32
    return %c0_i32, %c0_i32_0 : i32, i32
  }
  func.func @transform_9(%arg0: i32) -> (i32, i32, i32) {
    %c0_i32 = arith.constant 0 : i32
    %c0_i32_0 = arith.constant 0 : i32
    %c0_i32_1 = arith.constant 0 : i32
    %c0_i32_2 = arith.constant 0 : i32
    return %c0_i32, %c0_i32_0, %c0_i32_1 : i32, i32, i32
  }
  func.func @transform_10(%arg0: i32) -> (i32, i32) {
    %c0_i32 = arith.constant 0 : i32
    %c0_i32_0 = arith.constant 0 : i32
    %c0_i32_1 = arith.constant 0 : i32
    return %c0_i32, %c0_i32_0 : i32, i32
  }
  func.func @transform_11(%arg0: i32) -> (i32, i32, i32) {
    %c0_i32 = arith.constant 0 : i32
    %c0_i32_0 = arith.constant 0 : i32
    %c0_i32_1 = arith.constant 0 : i32
    %c0_i32_2 = arith.constant 0 : i32
    return %c0_i32, %c0_i32_0, %c0_i32_1 : i32, i32, i32
  }
  func.func @transform_12(%arg0: i32) -> (i32, i32) {
    %c0_i32 = arith.constant 0 : i32
    %c0_i32_0 = arith.constant 0 : i32
    %c0_i32_1 = arith.constant 0 : i32
    return %c0_i32, %c0_i32_0 : i32, i32
  }
  func.func @transform_13(%arg0: i32) -> (i32, i32) {
    %c0_i32 = arith.constant 0 : i32
    %c0_i32_0 = arith.constant 0 : i32
    %c0_i32_1 = arith.constant 0 : i32
    return %c0_i32, %c0_i32_0 : i32, i32
  }
  func.func @transform_14(%arg0: i32) -> (i32, i32) {
    %c0_i32 = arith.constant 0 : i32
    %c0_i32_0 = arith.constant 0 : i32
    %c0_i32_1 = arith.constant 0 : i32
    return %c0_i32, %c0_i32_0 : i32, i32
  }
  func.func @transform_15(%arg0: i32) -> (i32, i32) {
    %c0_i32 = arith.constant 0 : i32
    %c0_i32_0 = arith.constant 0 : i32
    %c0_i32_1 = arith.constant 0 : i32
    return %c0_i32, %c0_i32_0 : i32, i32
  }
  func.func @transform_16(%arg0: i32) -> (i32, i32) {
    %c0_i32 = arith.constant 0 : i32
    %c0_i32_0 = arith.constant 0 : i32
    %c0_i32_1 = arith.constant 0 : i32
    return %c0_i32, %c0_i32_0 : i32, i32
  }
  func.func @transform_17(%arg0: i32) -> (i32, i32) {
    %c0_i32 = arith.constant 0 : i32
    %c0_i32_0 = arith.constant 0 : i32
    %c0_i32_1 = arith.constant 0 : i32
    return %c0_i32, %c0_i32_0 : i32, i32
  }
  func.func @transform_18(%arg0: i32) -> (i32, i32) {
    %c0_i32 = arith.constant 0 : i32
    %c0_i32_0 = arith.constant 0 : i32
    %c0_i32_1 = arith.constant 0 : i32
    return %c0_i32, %c0_i32_0 : i32, i32
  }
  func.func @transform_19(%arg0: i32) -> (i32, i32) {
    %c0_i32 = arith.constant 0 : i32
    %c0_i32_0 = arith.constant 0 : i32
    %c0_i32_1 = arith.constant 0 : i32
    return %c0_i32, %c0_i32_0 : i32, i32
  }
  func.func @transform_20(%arg0: i32) -> (i32, i32) {
    %c0_i32 = arith.constant 0 : i32
    %c0_i32_0 = arith.constant 0 : i32
    %c0_i32_1 = arith.constant 0 : i32
    return %c0_i32, %c0_i32_0 : i32, i32
  }
  func.func @transform_21(%arg0: i32) -> (i32, i32, i32) {
    %c0_i32 = arith.constant 0 : i32
    %c0_i32_0 = arith.constant 0 : i32
    %c0_i32_1 = arith.constant 0 : i32
    return %arg0, %c0_i32, %c0_i32_0 : i32, i32, i32
  }
}

</mosaic_0001>

<llo_original>
// kernel: tpu_custom_call.1
$region0: #{tpu_custom_call.1}
  #allocation0 [shape = 'u32[]', space=smem, size = 0x4, offset = 0x4, fixed_abs, tag = 'smem constant byte address 0x4 - core index']
  #allocation1 [shape = 'u32[144,128]{1,0:T(1,128)}', space=vmem, size = 0x12000, scoped, tag = 'internal scratch']
  %s0 = inlined_call_operand.vmem [shape: f32[2,8,32], index: 0, kind: input, shape index: {}]
  %s1 = inlined_call_operand.vmem [shape: f32[2,8,8], index: 1, kind: input, shape index: {}]
  %s2 = inlined_call_operand.vmem [shape: f32[2,8,8,8], index: 2, kind: input, shape index: {}]
  %s3 = inlined_call_operand.vmem [shape: f32[2,8,8,8], index: 3, kind: input, shape index: {}]
  %s4 = inlined_call_operand.vmem [shape: f32[2,8,8,8], index: 4, kind: input, shape index: {}]
  %s5 = inlined_call_operand.vmem [shape: f32[4,32,8], index: 5, kind: input, shape index: {}]
  %s6 = inlined_call_operand.vmem [shape: f32[4,8], index: 6, kind: input, shape index: {}]
  %s7 = inlined_call_operand.vmem [shape: f32[4,32,8], index: 7, kind: input, shape index: {}]
  %s8 = inlined_call_operand.vmem [shape: f32[4,8], index: 8, kind: input, shape index: {}]
  %s9 = inlined_call_operand.vmem [shape: f32[4,32,8], index: 9, kind: input, shape index: {}]
  %s10 = inlined_call_operand.vmem [shape: f32[4,8], index: 10, kind: input, shape index: {}]
  %s11 = inlined_call_operand.vmem [shape: f32[4,8,32], index: 11, kind: input, shape index: {}]
  %s12 = inlined_call_operand.vmem [shape: f32[1,32], index: 12, kind: input, shape index: {}]
  %s13 = inlined_call_operand.vmem [shape: f32[1,32], index: 13, kind: input, shape index: {}]
  %s14 = inlined_call_operand.vmem [shape: f32[1,32], index: 14, kind: input, shape index: {}]
  %s15 = inlined_call_operand.vmem [shape: f32[32,64], index: 15, kind: input, shape index: {}]
  %s16 = inlined_call_operand.vmem [shape: f32[1,64], index: 16, kind: input, shape index: {}]
  %s17 = inlined_call_operand.vmem [shape: f32[64,32], index: 17, kind: input, shape index: {}]
  %s18 = inlined_call_operand.vmem [shape: f32[1,32], index: 18, kind: input, shape index: {}]
  %s19 = inlined_call_operand.vmem [shape: f32[1,32], index: 19, kind: input, shape index: {}]
  %s20 = inlined_call_operand.vmem [shape: f32[1,32], index: 20, kind: input, shape index: {}]
  %s21 = inlined_call_operand.hbm [shape: f32[2,8,32], index: 21, kind: output, shape index: {}]
  %s22 = sld [smem:[#allocation0]]
  $region117: #{tpu_custom_call.1} parent=0
    _
  %s24 = ssub.s32 1, %s22
  %s25 = scalar_select 0, %s24, %s22
  $region1: #{tpu_custom_call.1} parent=0
    #allocation2 [shape = 'u8[8192]{0}', space=vmem, size = 0x2000, scoped, tag = 'output window, operand 0']
    #allocation3 [shape = 's32[2]{0}', space=sflag, size = 0x8, scoped, tag = 'scoped memory for tpu_custom_call.1']
    %26 = vsyncpa [#allocation3], 0
    %s27 = scalar_lea.sflag [#allocation3], 1
    %28 = vsyncpa %s27, 0
    loop: start=0, step=1, limit=4
    $region2: #{tpu_custom_call.1} parent=1 // loop_pre_header
      _
    $region3: #{tpu_custom_call.1} parent=1 // loop_header
      %s30 = sphi 0, %s34
      %p31 = scmp.ge.s32.totalorder %s30, 4
      %s40 = sphi 0, %s42
      %s43 = sphi 0, %s40
      %s44 = sphi 0, %s43
      %s60 = sphi 0, %s44
      %s66 = sphi 0, %s68
      %s69 = sphi 0, %s66
      %s70 = sphi 0, %s69
      %s86 = sphi 0, %s70
      %s92 = sphi 0, %s94
      %s95 = sphi 0, %s92
      %s96 = sphi 0, %s95
      %s112 = sphi 0, %s96
      %s118 = sphi 0, %s120
      %s121 = sphi 0, %s118
      %s122 = sphi 0, %s121
      %s138 = sphi 0, %s122
      %s144 = sphi 0, %s146
      %s147 = sphi 0, %s144
      %s148 = sphi 0, %s147
      %s164 = sphi 0, %s148
      %s168 = sphi 0, %s168
      %s170 = sphi 0, %s168
      %s171 = sphi 0, %s170
      %s185 = sphi 0, %s171
      %s189 = sphi 0, %s189
      %s191 = sphi 0, %s189
      %s192 = sphi 0, %s191
      %s206 = sphi 0, %s192
      %s210 = sphi 0, %s210
      %s212 = sphi 0, %s210
      %s213 = sphi 0, %s212
      %s227 = sphi 0, %s213
      %s231 = sphi 0, %s231
      %s233 = sphi 0, %s231
      %s234 = sphi 0, %s233
      %s248 = sphi 0, %s234
      %s252 = sphi 0, %s252
      %s254 = sphi 0, %s252
      %s255 = sphi 0, %s254
      %s269 = sphi 0, %s255
      %s273 = sphi 0, %s273
      %s275 = sphi 0, %s273
      %s276 = sphi 0, %s275
      %s290 = sphi 0, %s276
      %s294 = sphi 0, %s294
      %s296 = sphi 0, %s294
      %s297 = sphi 0, %s296
      %s311 = sphi 0, %s297
      %s315 = sphi 0, %s315
      %s317 = sphi 0, %s315
      %s318 = sphi 0, %s317
      %s332 = sphi 0, %s318
      %s336 = sphi 0, %s336
      %s338 = sphi 0, %s336
      %s339 = sphi 0, %s338
      %s353 = sphi 0, %s339
      %s357 = sphi 0, %s357
      %s359 = sphi 0, %s357
      %s360 = sphi 0, %s359
      %s374 = sphi 0, %s360
      %s378 = sphi 0, %s378
      %s380 = sphi 0, %s378
      %s381 = sphi 0, %s380
      %s395 = sphi 0, %s381
      %s399 = sphi 0, %s399
      %s401 = sphi 0, %s399
      %s402 = sphi 0, %s401
      %s416 = sphi 0, %s402
      %s420 = sphi 0, %s420
      %s422 = sphi 0, %s420
      %s423 = sphi 0, %s422
      %s437 = sphi 0, %s423
      %s441 = sphi 0, %s441
      %s443 = sphi 0, %s441
      %s444 = sphi 0, %s443
      %s458 = sphi 0, %s444
      %s462 = sphi 0, %s462
      %s464 = sphi 0, %s462
      %s465 = sphi 0, %s464
      %s479 = sphi 0, %s465
      %s483 = sphi 0, %s483
      %s485 = sphi 0, %s483
      %s486 = sphi 0, %s485
      %s500 = sphi 0, %s486
      %s506 = sphi 0, %s508
      %s509 = sphi 0, %s506
      %s510 = sphi 0, %s509
      %s526 = sphi 0, %s510
    $region4: #{tpu_custom_call.1} parent=1 // loop_header_branch
      %33 = sbr.rel (%p31) target = $region8
    $region5: #{tpu_custom_call.1} parent=1 // loop_body
      %s35 = ssub.s32 %s30, 1
      %s36 = ssub.s32 %s30, 2
      %s37 = sadd.s32 %s30, 1
      %s38 = ssub.s32 %s30, %s37
      %p39 = scmp.eq.s32.totalorder %s38, 0
      %s41 = sadd.s32 %s40, 1
      %s42 = scalar_select %p39, %s40, %s41
      %p45 = pneg %p39
      %p46 = scmp.eq.s32.totalorder %s30, 1
      %p47 = por %p45, %p46
      %p48 = scmp.ne.s32.totalorder %s40, %s43
      %p49 = scmp.eq.s32.totalorder %s30, 0
      %p50 = por %p48, %p49
      %p51 = scmp.ne.s32.totalorder %s40, %s43
      %p52 = scmp.eq.s32.totalorder %s35, 1
      %p53 = por %p51, %p52
      %p54 = scmp.ne.s32.totalorder %s43, %s44
      %p55 = scmp.eq.s32.totalorder %s35, 0
      %p56 = por %p54, %p55
      %p57 = scmp.ne.s32.totalorder %s43, %s44
      %p58 = scmp.eq.s32.totalorder %s36, 1
      %p59 = por %p57, %p58
      %p61 = scmp.ne.s32.totalorder %s44, %s60
      %p62 = scmp.eq.s32.totalorder %s36, 0
      %p63 = por %p61, %p62
      %s64 = ssub.s32 %s30, %s37
      %p65 = scmp.eq.s32.totalorder %s64, 0
      %s67 = sadd.s32 %s66, 1
      %s68 = scalar_select %p65, %s66, %s67
      %p71 = pneg %p65
      %p72 = scmp.eq.s32.totalorder %s30, 1
      %p73 = por %p71, %p72
      %p74 = scmp.ne.s32.totalorder %s66, %s69
      %p75 = scmp.eq.s32.totalorder %s30, 0
      %p76 = por %p74, %p75
      %p77 = scmp.ne.s32.totalorder %s66, %s69
      %p78 = scmp.eq.s32.totalorder %s35, 1
      %p79 = por %p77, %p78
      %p80 = scmp.ne.s32.totalorder %s69, %s70
      %p81 = scmp.eq.s32.totalorder %s35, 0
      %p82 = por %p80, %p81
      %p83 = scmp.ne.s32.totalorder %s69, %s70
      %p84 = scmp.eq.s32.totalorder %s36, 1
      %p85 = por %p83, %p84
      %p87 = scmp.ne.s32.totalorder %s70, %s86
      %p88 = scmp.eq.s32.totalorder %s36, 0
      %p89 = por %p87, %p88
      %s90 = ssub.s32 %s30, %s37
      %p91 = scmp.eq.s32.totalorder %s90, 0
      %s93 = sadd.s32 %s92, 1
      %s94 = scalar_select %p91, %s92, %s93
      %p97 = pneg %p91
      %p98 = scmp.eq.s32.totalorder %s30, 1
      %p99 = por %p97, %p98
      %p100 = scmp.ne.s32.totalorder %s92, %s95
      %p101 = scmp.eq.s32.totalorder %s30, 0
      %p102 = por %p100, %p101
      %p103 = scmp.ne.s32.totalorder %s92, %s95
      %p104 = scmp.eq.s32.totalorder %s35, 1
      %p105 = por %p103, %p104
      %p106 = scmp.ne.s32.totalorder %s95, %s96
      %p107 = scmp.eq.s32.totalorder %s35, 0
      %p108 = por %p106, %p107
      %p109 = scmp.ne.s32.totalorder %s95, %s96
      %p110 = scmp.eq.s32.totalorder %s36, 1
      %p111 = por %p109, %p110
      %p113 = scmp.ne.s32.totalorder %s96, %s112
      %p114 = scmp.eq.s32.totalorder %s36, 0
      %p115 = por %p113, %p114
      %s116 = ssub.s32 %s30, %s37
      %p117 = scmp.eq.s32.totalorder %s116, 0
      %s119 = sadd.s32 %s118, 1
      %s120 = scalar_select %p117, %s118, %s119
      %p123 = pneg %p117
      %p124 = scmp.eq.s32.totalorder %s30, 1
      %p125 = por %p123, %p124
      %p126 = scmp.ne.s32.totalorder %s118, %s121
      %p127 = scmp.eq.s32.totalorder %s30, 0
      %p128 = por %p126, %p127
      %p129 = scmp.ne.s32.totalorder %s118, %s121
      %p130 = scmp.eq.s32.totalorder %s35, 1
      %p131 = por %p129, %p130
      %p132 = scmp.ne.s32.totalorder %s121, %s122
      %p133 = scmp.eq.s32.totalorder %s35, 0
      %p134 = por %p132, %p133
      %p135 = scmp.ne.s32.totalorder %s121, %s122
      %p136 = scmp.eq.s32.totalorder %s36, 1
      %p137 = por %p135, %p136
      %p139 = scmp.ne.s32.totalorder %s122, %s138
      %p140 = scmp.eq.s32.totalorder %s36, 0
      %p141 = por %p139, %p140
      %s142 = ssub.s32 %s30, %s37
      %p143 = scmp.eq.s32.totalorder %s142, 0
      %s145 = sadd.s32 %s144, 1
      %s146 = scalar_select %p143, %s144, %s145
      %p149 = pneg %p143
      %p150 = scmp.eq.s32.totalorder %s30, 1
      %p151 = por %p149, %p150
      %p152 = scmp.ne.s32.totalorder %s144, %s147
      %p153 = scmp.eq.s32.totalorder %s30, 0
      %p154 = por %p152, %p153
      %p155 = scmp.ne.s32.totalorder %s144, %s147
      %p156 = scmp.eq.s32.totalorder %s35, 1
      %p157 = por %p155, %p156
      %p158 = scmp.ne.s32.totalorder %s147, %s148
      %p159 = scmp.eq.s32.totalorder %s35, 0
      %p160 = por %p158, %p159
      %p161 = scmp.ne.s32.totalorder %s147, %s148
      %p162 = scmp.eq.s32.totalorder %s36, 1
      %p163 = por %p161, %p162
      %p165 = scmp.ne.s32.totalorder %s148, %s164
      %p166 = scmp.eq.s32.totalorder %s36, 0
      %p167 = por %p165, %p166
      %s169 = sadd.s32 %s168, 1
      %p172 = scmp.eq.s32.totalorder %s30, 1
      %p173 = scmp.ne.s32.totalorder %s168, %s170
      %p174 = scmp.eq.s32.totalorder %s30, 0
      %p175 = por %p173, %p174
      %p176 = scmp.ne.s32.totalorder %s168, %s170
      %p177 = scmp.eq.s32.totalorder %s35, 1
      %p178 = por %p176, %p177
      %p179 = scmp.ne.s32.totalorder %s170, %s171
      %p180 = scmp.eq.s32.totalorder %s35, 0
      %p181 = por %p179, %p180
      %p182 = scmp.ne.s32.totalorder %s170, %s171
      %p183 = scmp.eq.s32.totalorder %s36, 1
      %p184 = por %p182, %p183
      %p186 = scmp.ne.s32.totalorder %s171, %s185
      %p187 = scmp.eq.s32.totalorder %s36, 0
      %p188 = por %p186, %p187
      %s190 = sadd.s32 %s189, 1
      %p193 = scmp.eq.s32.totalorder %s30, 1
      %p194 = scmp.ne.s32.totalorder %s189, %s191
      %p195 = scmp.eq.s32.totalorder %s30, 0
      %p196 = por %p194, %p195
      %p197 = scmp.ne.s32.totalorder %s189, %s191
      %p198 = scmp.eq.s32.totalorder %s35, 1
      %p199 = por %p197, %p198
      %p200 = scmp.ne.s32.totalorder %s191, %s192
      %p201 = scmp.eq.s32.totalorder %s35, 0
      %p202 = por %p200, %p201
      %p203 = scmp.ne.s32.totalorder %s191, %s192
      %p204 = scmp.eq.s32.totalorder %s36, 1
      %p205 = por %p203, %p204
      %p207 = scmp.ne.s32.totalorder %s192, %s206
      %p208 = scmp.eq.s32.totalorder %s36, 0
      %p209 = por %p207, %p208
      %s211 = sadd.s32 %s210, 1
      %p214 = scmp.eq.s32.totalorder %s30, 1
      %p215 = scmp.ne.s32.totalorder %s210, %s212
      %p216 = scmp.eq.s32.totalorder %s30, 0
      %p217 = por %p215, %p216
      %p218 = scmp.ne.s32.totalorder %s210, %s212
      %p219 = scmp.eq.s32.totalorder %s35, 1
      %p220 = por %p218, %p219
      %p221 = scmp.ne.s32.totalorder %s212, %s213
      %p222 = scmp.eq.s32.totalorder %s35, 0
      %p223 = por %p221, %p222
      %p224 = scmp.ne.s32.totalorder %s212, %s213
      %p225 = scmp.eq.s32.totalorder %s36, 1
      %p226 = por %p224, %p225
      %p228 = scmp.ne.s32.totalorder %s213, %s227
      %p229 = scmp.eq.s32.totalorder %s36, 0
      %p230 = por %p228, %p229
      %s232 = sadd.s32 %s231, 1
      %p235 = scmp.eq.s32.totalorder %s30, 1
      %p236 = scmp.ne.s32.totalorder %s231, %s233
      %p237 = scmp.eq.s32.totalorder %s30, 0
      %p238 = por %p236, %p237
      %p239 = scmp.ne.s32.totalorder %s231, %s233
      %p240 = scmp.eq.s32.totalorder %s35, 1
      %p241 = por %p239, %p240
      %p242 = scmp.ne.s32.totalorder %s233, %s234
      %p243 = scmp.eq.s32.totalorder %s35, 0
      %p244 = por %p242, %p243
      %p245 = scmp.ne.s32.totalorder %s233, %s234
      %p246 = scmp.eq.s32.totalorder %s36, 1
      %p247 = por %p245, %p246
      %p249 = scmp.ne.s32.totalorder %s234, %s248
      %p250 = scmp.eq.s32.totalorder %s36, 0
      %p251 = por %p249, %p250
      %s253 = sadd.s32 %s252, 1
      %p256 = scmp.eq.s32.totalorder %s30, 1
      %p257 = scmp.ne.s32.totalorder %s252, %s254
      %p258 = scmp.eq.s32.totalorder %s30, 0
      %p259 = por %p257, %p258
      %p260 = scmp.ne.s32.totalorder %s252, %s254
      %p261 = scmp.eq.s32.totalorder %s35, 1
      %p262 = por %p260, %p261
      %p263 = scmp.ne.s32.totalorder %s254, %s255
      %p264 = scmp.eq.s32.totalorder %s35, 0
      %p265 = por %p263, %p264
      %p266 = scmp.ne.s32.totalorder %s254, %s255
      %p267 = scmp.eq.s32.totalorder %s36, 1
      %p268 = por %p266, %p267
      %p270 = scmp.ne.s32.totalorder %s255, %s269
      %p271 = scmp.eq.s32.totalorder %s36, 0
      %p272 = por %p270, %p271
      %s274 = sadd.s32 %s273, 1
      %p277 = scmp.eq.s32.totalorder %s30, 1
      %p278 = scmp.ne.s32.totalorder %s273, %s275
      %p279 = scmp.eq.s32.totalorder %s30, 0
      %p280 = por %p278, %p279
      %p281 = scmp.ne.s32.totalorder %s273, %s275
      %p282 = scmp.eq.s32.totalorder %s35, 1
      %p283 = por %p281, %p282
      %p284 = scmp.ne.s32.totalorder %s275, %s276
      %p285 = scmp.eq.s32.totalorder %s35, 0
      %p286 = por %p284, %p285
      %p287 = scmp.ne.s32.totalorder %s275, %s276
      %p288 = scmp.eq.s32.totalorder %s36, 1
      %p289 = por %p287, %p288
      %p291 = scmp.ne.s32.totalorder %s276, %s290
      %p292 = scmp.eq.s32.totalorder %s36, 0
      %p293 = por %p291, %p292
      %s295 = sadd.s32 %s294, 1
      %p298 = scmp.eq.s32.totalorder %s30, 1
      %p299 = scmp.ne.s32.totalorder %s294, %s296
      %p300 = scmp.eq.s32.totalorder %s30, 0
      %p301 = por %p299, %p300
      %p302 = scmp.ne.s32.totalorder %s294, %s296
      %p303 = scmp.eq.s32.totalorder %s35, 1
      %p304 = por %p302, %p303
      %p305 = scmp.ne.s32.totalorder %s296, %s297
      %p306 = scmp.eq.s32.totalorder %s35, 0
      %p307 = por %p305, %p306
      %p308 = scmp.ne.s32.totalorder %s296, %s297
      %p309 = scmp.eq.s32.totalorder %s36, 1
      %p310 = por %p308, %p309
      %p312 = scmp.ne.s32.totalorder %s297, %s311
      %p313 = scmp.eq.s32.totalorder %s36, 0
      %p314 = por %p312, %p313
      %s316 = sadd.s32 %s315, 1
      %p319 = scmp.eq.s32.totalorder %s30, 1
      %p320 = scmp.ne.s32.totalorder %s315, %s317
      %p321 = scmp.eq.s32.totalorder %s30, 0
      %p322 = por %p320, %p321
      %p323 = scmp.ne.s32.totalorder %s315, %s317
      %p324 = scmp.eq.s32.totalorder %s35, 1
      %p325 = por %p323, %p324
      %p326 = scmp.ne.s32.totalorder %s317, %s318
      %p327 = scmp.eq.s32.totalorder %s35, 0
      %p328 = por %p326, %p327
      %p329 = scmp.ne.s32.totalorder %s317, %s318
      %p330 = scmp.eq.s32.totalorder %s36, 1
      %p331 = por %p329, %p330
      %p333 = scmp.ne.s32.totalorder %s318, %s332
      %p334 = scmp.eq.s32.totalorder %s36, 0
      %p335 = por %p333, %p334
      %s337 = sadd.s32 %s336, 1
      %p340 = scmp.eq.s32.totalorder %s30, 1
      %p341 = scmp.ne.s32.totalorder %s336, %s338
      %p342 = scmp.eq.s32.totalorder %s30, 0
      %p343 = por %p341, %p342
      %p344 = scmp.ne.s32.totalorder %s336, %s338
      %p345 = scmp.eq.s32.totalorder %s35, 1
      %p346 = por %p344, %p345
      %p347 = scmp.ne.s32.totalorder %s338, %s339
      %p348 = scmp.eq.s32.totalorder %s35, 0
      %p349 = por %p347, %p348
      %p350 = scmp.ne.s32.totalorder %s338, %s339
      %p351 = scmp.eq.s32.totalorder %s36, 1
      %p352 = por %p350, %p351
      %p354 = scmp.ne.s32.totalorder %s339, %s353
      %p355 = scmp.eq.s32.totalorder %s36, 0
      %p356 = por %p354, %p355
      %s358 = sadd.s32 %s357, 1
      %p361 = scmp.eq.s32.totalorder %s30, 1
      %p362 = scmp.ne.s32.totalorder %s357, %s359
      %p363 = scmp.eq.s32.totalorder %s30, 0
      %p364 = por %p362, %p363
      %p365 = scmp.ne.s32.totalorder %s357, %s359
      %p366 = scmp.eq.s32.totalorder %s35, 1
      %p367 = por %p365, %p366
      %p368 = scmp.ne.s32.totalorder %s359, %s360
      %p369 = scmp.eq.s32.totalorder %s35, 0
      %p370 = por %p368, %p369
      %p371 = scmp.ne.s32.totalorder %s359, %s360
      %p372 = scmp.eq.s32.totalorder %s36, 1
      %p373 = por %p371, %p372
      %p375 = scmp.ne.s32.totalorder %s360, %s374
      %p376 = scmp.eq.s32.totalorder %s36, 0
      %p377 = por %p375, %p376
      %s379 = sadd.s32 %s378, 1
      %p382 = scmp.eq.s32.totalorder %s30, 1
      %p383 = scmp.ne.s32.totalorder %s378, %s380
      %p384 = scmp.eq.s32.totalorder %s30, 0
      %p385 = por %p383, %p384
      %p386 = scmp.ne.s32.totalorder %s378, %s380
      %p387 = scmp.eq.s32.totalorder %s35, 1
      %p388 = por %p386, %p387
      %p389 = scmp.ne.s32.totalorder %s380, %s381
      %p390 = scmp.eq.s32.totalorder %s35, 0
      %p391 = por %p389, %p390
      %p392 = scmp.ne.s32.totalorder %s380, %s381
      %p393 = scmp.eq.s32.totalorder %s36, 1
      %p394 = por %p392, %p393
      %p396 = scmp.ne.s32.totalorder %s381, %s395
      %p397 = scmp.eq.s32.totalorder %s36, 0
      %p398 = por %p396, %p397
      %s400 = sadd.s32 %s399, 1
      %p403 = scmp.eq.s32.totalorder %s30, 1
      %p404 = scmp.ne.s32.totalorder %s399, %s401
      %p405 = scmp.eq.s32.totalorder %s30, 0
      %p406 = por %p404, %p405
      %p407 = scmp.ne.s32.totalorder %s399, %s401
      %p408 = scmp.eq.s32.totalorder %s35, 1
      %p409 = por %p407, %p408
      %p410 = scmp.ne.s32.totalorder %s401, %s402
      %p411 = scmp.eq.s32.totalorder %s35, 0
      %p412 = por %p410, %p411
      %p413 = scmp.ne.s32.totalorder %s401, %s402
      %p414 = scmp.eq.s32.totalorder %s36, 1
      %p415 = por %p413, %p414
      %p417 = scmp.ne.s32.totalorder %s402, %s416
      %p418 = scmp.eq.s32.totalorder %s36, 0
      %p419 = por %p417, %p418
      %s421 = sadd.s32 %s420, 1
      %p424 = scmp.eq.s32.totalorder %s30, 1
      %p425 = scmp.ne.s32.totalorder %s420, %s422
      %p426 = scmp.eq.s32.totalorder %s30, 0
      %p427 = por %p425, %p426
      %p428 = scmp.ne.s32.totalorder %s420, %s422
      %p429 = scmp.eq.s32.totalorder %s35, 1
      %p430 = por %p428, %p429
      %p431 = scmp.ne.s32.totalorder %s422, %s423
      %p432 = scmp.eq.s32.totalorder %s35, 0
      %p433 = por %p431, %p432
      %p434 = scmp.ne.s32.totalorder %s422, %s423
      %p435 = scmp.eq.s32.totalorder %s36, 1
      %p436 = por %p434, %p435
      %p438 = scmp.ne.s32.totalorder %s423, %s437
      %p439 = scmp.eq.s32.totalorder %s36, 0
      %p440 = por %p438, %p439
      %s442 = sadd.s32 %s441, 1
      %p445 = scmp.eq.s32.totalorder %s30, 1
      %p446 = scmp.ne.s32.totalorder %s441, %s443
      %p447 = scmp.eq.s32.totalorder %s30, 0
      %p448 = por %p446, %p447
      %p449 = scmp.ne.s32.totalorder %s441, %s443
      %p450 = scmp.eq.s32.totalorder %s35, 1
      %p451 = por %p449, %p450
      %p452 = scmp.ne.s32.totalorder %s443, %s444
      %p453 = scmp.eq.s32.totalorder %s35, 0
      %p454 = por %p452, %p453
      %p455 = scmp.ne.s32.totalorder %s443, %s444
      %p456 = scmp.eq.s32.totalorder %s36, 1
      %p457 = por %p455, %p456
      %p459 = scmp.ne.s32.totalorder %s444, %s458
      %p460 = scmp.eq.s32.totalorder %s36, 0
      %p461 = por %p459, %p460
      %s463 = sadd.s32 %s462, 1
      %p466 = scmp.eq.s32.totalorder %s30, 1
      %p467 = scmp.ne.s32.totalorder %s462, %s464
      %p468 = scmp.eq.s32.totalorder %s30, 0
      %p469 = por %p467, %p468
      %p470 = scmp.ne.s32.totalorder %s462, %s464
      %p471 = scmp.eq.s32.totalorder %s35, 1
      %p472 = por %p470, %p471
      %p473 = scmp.ne.s32.totalorder %s464, %s465
      %p474 = scmp.eq.s32.totalorder %s35, 0
      %p475 = por %p473, %p474
      %p476 = scmp.ne.s32.totalorder %s464, %s465
      %p477 = scmp.eq.s32.totalorder %s36, 1
      %p478 = por %p476, %p477
      %p480 = scmp.ne.s32.totalorder %s465, %s479
      %p481 = scmp.eq.s32.totalorder %s36, 0
      %p482 = por %p480, %p481
      %s484 = sadd.s32 %s483, 1
      %p487 = scmp.eq.s32.totalorder %s30, 1
      %p488 = scmp.ne.s32.totalorder %s483, %s485
      %p489 = scmp.eq.s32.totalorder %s30, 0
      %p490 = por %p488, %p489
      %p491 = scmp.ne.s32.totalorder %s483, %s485
      %p492 = scmp.eq.s32.totalorder %s35, 1
      %p493 = por %p491, %p492
      %p494 = scmp.ne.s32.totalorder %s485, %s486
      %p495 = scmp.eq.s32.totalorder %s35, 0
      %p496 = por %p494, %p495
      %p497 = scmp.ne.s32.totalorder %s485, %s486
      %p498 = scmp.eq.s32.totalorder %s36, 1
      %p499 = por %p497, %p498
      %p501 = scmp.ne.s32.totalorder %s486, %s500
      %p502 = scmp.eq.s32.totalorder %s36, 0
      %p503 = por %p501, %p502
      %s504 = ssub.s32 %s30, %s37
      %p505 = scmp.eq.s32.totalorder %s504, 0
      %s507 = sadd.s32 %s506, 1
      %s508 = scalar_select %p505, %s506, %s507
      %p511 = pneg %p505
      %p512 = scmp.eq.s32.totalorder %s30, 1
      %p513 = por %p511, %p512
      %p514 = scmp.ne.s32.totalorder %s506, %s509
      %p515 = scmp.eq.s32.totalorder %s30, 0
      %p516 = por %p514, %p515
      %p517 = scmp.ne.s32.totalorder %s506, %s509
      %p518 = scmp.eq.s32.totalorder %s35, 1
      %p519 = por %p517, %p518
      %p520 = scmp.ne.s32.totalorder %s509, %s510
      %p521 = scmp.eq.s32.totalorder %s35, 0
      %p522 = por %p520, %p521
      %p523 = scmp.ne.s32.totalorder %s509, %s510
      %p524 = scmp.eq.s32.totalorder %s36, 1
      %p525 = por %p523, %p524
      %p527 = scmp.ne.s32.totalorder %s510, %s526
      %p528 = scmp.eq.s32.totalorder %s36, 0
      %p529 = por %p527, %p528
      %p530 = scmp.le.s32.totalorder 1, %s30
      %p531 = scmp.lt.s32.totalorder %s30, 3
      %p532 = pnand %p530, %p531
      %p533 = pneg %p532
      // Predicated region
      $region9: #{tpu_custom_call.1} parent=5 // pred_check
        _
      $region10: #{tpu_custom_call.1} parent=5 // pred_check_branch
        %535 = sbr.rel (%p532) target = $region12
      $region11: #{tpu_custom_call.1} parent=5 // pred_region
        %s536 = ssub.s32 %s30, 1
        // Predicated region
        $region13: #{tpu_custom_call.1} parent=11 // pred_check
          %p537 = pneg %p181
        $region14: #{tpu_custom_call.1} parent=11 // pred_check_branch
          %539 = sbr.rel (%p537) target = $region16
        $region15: #{tpu_custom_call.1} parent=11 // pred_region
          _
        $region16: #{tpu_custom_call.1} parent=11 // pred_fallthru
          _
        // Predicated region
        $region17: #{tpu_custom_call.1} parent=11 // pred_check
          %p540 = pneg %p202
        $region18: #{tpu_custom_call.1} parent=11 // pred_check_branch
          %542 = sbr.rel (%p540) target = $region20
        $region19: #{tpu_custom_call.1} parent=11 // pred_region
          _
        $region20: #{tpu_custom_call.1} parent=11 // pred_fallthru
          _
        // Predicated region
        $region21: #{tpu_custom_call.1} parent=11 // pred_check
          %p543 = pneg %p223
        $region22: #{tpu_custom_call.1} parent=11 // pred_check_branch
          %545 = sbr.rel (%p543) target = $region24
        $region23: #{tpu_custom_call.1} parent=11 // pred_region
          _
        $region24: #{tpu_custom_call.1} parent=11 // pred_fallthru
          _
        // Predicated region
        $region25: #{tpu_custom_call.1} parent=11 // pred_check
          %p546 = pneg %p244
        $region26: #{tpu_custom_call.1} parent=11 // pred_check_branch
          %548 = sbr.rel (%p546) target = $region28
        $region27: #{tpu_custom_call.1} parent=11 // pred_region
          _
        $region28: #{tpu_custom_call.1} parent=11 // pred_fallthru
          _
        // Predicated region
        $region29: #{tpu_custom_call.1} parent=11 // pred_check
          %p549 = pneg %p265
        $region30: #{tpu_custom_call.1} parent=11 // pred_check_branch
          %551 = sbr.rel (%p549) target = $region32
        $region31: #{tpu_custom_call.1} parent=11 // pred_region
          _
        $region32: #{tpu_custom_call.1} parent=11 // pred_fallthru
          _
        // Predicated region
        $region33: #{tpu_custom_call.1} parent=11 // pred_check
          %p552 = pneg %p286
        $region34: #{tpu_custom_call.1} parent=11 // pred_check_branch
          %554 = sbr.rel (%p552) target = $region36
        $region35: #{tpu_custom_call.1} parent=11 // pred_region
          _
        $region36: #{tpu_custom_call.1} parent=11 // pred_fallthru
          _
        // Predicated region
        $region37: #{tpu_custom_call.1} parent=11 // pred_check
          %p555 = pneg %p307
        $region38: #{tpu_custom_call.1} parent=11 // pred_check_branch
          %557 = sbr.rel (%p555) target = $region40
        $region39: #{tpu_custom_call.1} parent=11 // pred_region
          _
        $region40: #{tpu_custom_call.1} parent=11 // pred_fallthru
          _
        // Predicated region
        $region41: #{tpu_custom_call.1} parent=11 // pred_check
          %p558 = pneg %p328
        $region42: #{tpu_custom_call.1} parent=11 // pred_check_branch
          %560 = sbr.rel (%p558) target = $region44
        $region43: #{tpu_custom_call.1} parent=11 // pred_region
          _
        $region44: #{tpu_custom_call.1} parent=11 // pred_fallthru
          _
        // Predicated region
        $region45: #{tpu_custom_call.1} parent=11 // pred_check
          %p561 = pneg %p349
        $region46: #{tpu_custom_call.1} parent=11 // pred_check_branch
          %563 = sbr.rel (%p561) target = $region48
        $region47: #{tpu_custom_call.1} parent=11 // pred_region
          _
        $region48: #{tpu_custom_call.1} parent=11 // pred_fallthru
          _
        // Predicated region
        $region49: #{tpu_custom_call.1} parent=11 // pred_check
          %p564 = pneg %p370
        $region50: #{tpu_custom_call.1} parent=11 // pred_check_branch
          %566 = sbr.rel (%p564) target = $region52
        $region51: #{tpu_custom_call.1} parent=11 // pred_region
          _
        $region52: #{tpu_custom_call.1} parent=11 // pred_fallthru
          _
        // Predicated region
        $region53: #{tpu_custom_call.1} parent=11 // pred_check
          %p567 = pneg %p391
        $region54: #{tpu_custom_call.1} parent=11 // pred_check_branch
          %569 = sbr.rel (%p567) target = $region56
        $region55: #{tpu_custom_call.1} parent=11 // pred_region
          _
        $region56: #{tpu_custom_call.1} parent=11 // pred_fallthru
          _
        // Predicated region
        $region57: #{tpu_custom_call.1} parent=11 // pred_check
          %p570 = pneg %p412
        $region58: #{tpu_custom_call.1} parent=11 // pred_check_branch
          %572 = sbr.rel (%p570) target = $region60
        $region59: #{tpu_custom_call.1} parent=11 // pred_region
          _
        $region60: #{tpu_custom_call.1} parent=11 // pred_fallthru
          _
        // Predicated region
        $region61: #{tpu_custom_call.1} parent=11 // pred_check
          %p573 = pneg %p433
        $region62: #{tpu_custom_call.1} parent=11 // pred_check_branch
          %575 = sbr.rel (%p573) target = $region64
        $region63: #{tpu_custom_call.1} parent=11 // pred_region
          _
        $region64: #{tpu_custom_call.1} parent=11 // pred_fallthru
          _
        // Predicated region
        $region65: #{tpu_custom_call.1} parent=11 // pred_check
          %p576 = pneg %p454
        $region66: #{tpu_custom_call.1} parent=11 // pred_check_branch
          %578 = sbr.rel (%p576) target = $region68
        $region67: #{tpu_custom_call.1} parent=11 // pred_region
          _
        $region68: #{tpu_custom_call.1} parent=11 // pred_fallthru
          _
        // Predicated region
        $region69: #{tpu_custom_call.1} parent=11 // pred_check
          %p579 = pneg %p475
        $region70: #{tpu_custom_call.1} parent=11 // pred_check_branch
          %581 = sbr.rel (%p579) target = $region72
        $region71: #{tpu_custom_call.1} parent=11 // pred_region
          _
        $region72: #{tpu_custom_call.1} parent=11 // pred_fallthru
          _
        // Predicated region
        $region73: #{tpu_custom_call.1} parent=11 // pred_check
          %p582 = pneg %p496
        $region74: #{tpu_custom_call.1} parent=11 // pred_check_branch
          %584 = sbr.rel (%p582) target = $region76
        $region75: #{tpu_custom_call.1} parent=11 // pred_region
          _
        $region76: #{tpu_custom_call.1} parent=11 // pred_fallthru
          _
      $region12: #{tpu_custom_call.1} parent=5 // pred_fallthru
        _
      %p585 = scmp.lt.s32.totalorder %s30, 2
      // Predicated region
      $region77: #{tpu_custom_call.1} parent=5 // pred_check
        %p586 = pneg %p585
      $region78: #{tpu_custom_call.1} parent=5 // pred_check_branch
        %588 = sbr.rel (%p586) target = $region80
      $region79: #{tpu_custom_call.1} parent=5 // pred_region
        // Predicated region
        $region81: #{tpu_custom_call.1} parent=79 // pred_check
          %p589 = pneg %p50
        $region82: #{tpu_custom_call.1} parent=79 // pred_check_branch
          %591 = sbr.rel (%p589) target = $region84
        $region83: #{tpu_custom_call.1} parent=79 // pred_region
          %p592 = scmp.lt.s32.totalorder %s30, 1
          %s593 = scalar_select %p592, %s30, 1
          %s594 = smul.addr %s593, 8
          %s595 = scalar_lea.vmem %s0, %s594
        $region84: #{tpu_custom_call.1} parent=79 // pred_fallthru
          _
        // Predicated region
        $region85: #{tpu_custom_call.1} parent=79 // pred_check
          %p596 = pneg %p76
        $region86: #{tpu_custom_call.1} parent=79 // pred_check_branch
          %598 = sbr.rel (%p596) target = $region88
        $region87: #{tpu_custom_call.1} parent=79 // pred_region
          %p599 = scmp.lt.s32.totalorder %s30, 1
          %s600 = scalar_select %p599, %s30, 1
          %s601 = smul.addr %s600, 8
          %s602 = scalar_lea.vmem %s1, %s601
        $region88: #{tpu_custom_call.1} parent=79 // pred_fallthru
          _
        // Predicated region
        $region89: #{tpu_custom_call.1} parent=79 // pred_check
          %p603 = pneg %p102
        $region90: #{tpu_custom_call.1} parent=79 // pred_check_branch
          %605 = sbr.rel (%p603) target = $region92
        $region91: #{tpu_custom_call.1} parent=79 // pred_region
          %p606 = scmp.lt.s32.totalorder %s30, 1
          %s607 = scalar_select %p606, %s30, 1
          %s608 = smul.addr %s607, 8
          %s609 = smul.addr %s608, 8
          %s610 = scalar_lea.vmem %s2, %s609
        $region92: #{tpu_custom_call.1} parent=79 // pred_fallthru
          _
        // Predicated region
        $region93: #{tpu_custom_call.1} parent=79 // pred_check
          %p611 = pneg %p128
        $region94: #{tpu_custom_call.1} parent=79 // pred_check_branch
          %613 = sbr.rel (%p611) target = $region96
        $region95: #{tpu_custom_call.1} parent=79 // pred_region
          %p614 = scmp.lt.s32.totalorder %s30, 1
          %s615 = scalar_select %p614, %s30, 1
          %s616 = smul.addr %s615, 8
          %s617 = smul.addr %s616, 8
          %s618 = scalar_lea.vmem %s3, %s617
        $region96: #{tpu_custom_call.1} parent=79 // pred_fallthru
          _
        // Predicated region
        $region97: #{tpu_custom_call.1} parent=79 // pred_check
          %p619 = pneg %p154
        $region98: #{tpu_custom_call.1} parent=79 // pred_check_branch
          %621 = sbr.rel (%p619) target = $region100
        $region99: #{tpu_custom_call.1} parent=79 // pred_region
          %p622 = scmp.lt.s32.totalorder %s30, 1
          %s623 = scalar_select %p622, %s30, 1
          %s624 = smul.addr %s623, 8
          %s625 = smul.addr %s624, 8
          %s626 = scalar_lea.vmem %s4, %s625
        $region100: #{tpu_custom_call.1} parent=79 // pred_fallthru
          _
      $region80: #{tpu_custom_call.1} parent=5 // pred_fallthru
        _
      %p627 = scmp.le.s32.totalorder 1, %s30
      %p628 = scmp.lt.s32.totalorder %s30, 3
      %p629 = pnand %p627, %p628
      %p630 = pneg %p629
      // Predicated region
      $region101: #{tpu_custom_call.1} parent=5 // pred_check
        _
      $region102: #{tpu_custom_call.1} parent=5 // pred_check_branch
        %632 = sbr.rel (%p629) target = $region104
      $region103: #{tpu_custom_call.1} parent=5 // pred_region
        %s633 = ssub.s32 %s30, 1
        %p634 = scmp.lt.s32.totalorder %s35, 1
        %s635 = scalar_select %p634, %s35, 1
        %s636 = smul.addr %s635, 8
        %s637 = scalar_lea.vmem %s0, %s636
        %p638 = pneg %p56
        %p639 = pneg %p53
        %p640 = scmp.lt.s32.totalorder %s35, 1
        %s641 = scalar_select %p640, %s35, 1
        %s642 = smul.addr %s641, 8
        %s643 = scalar_lea.vmem %s1, %s642
        %p644 = pneg %p82
        %p645 = pneg %p79
        %p646 = scmp.lt.s32.totalorder %s35, 1
        %s647 = scalar_select %p646, %s35, 1
        %s648 = smul.addr %s647, 8
        %s649 = smul.addr %s648, 8
        %s650 = scalar_lea.vmem %s2, %s649
        %p651 = pneg %p108
        %p652 = pneg %p105
        %p653 = scmp.lt.s32.totalorder %s35, 1
        %s654 = scalar_select %p653, %s35, 1
        %s655 = smul.addr %s654, 8
        %s656 = smul.addr %s655, 8
        %s657 = scalar_lea.vmem %s3, %s656
        %p658 = pneg %p134
        %p659 = pneg %p131
        %p660 = scmp.lt.s32.totalorder %s35, 1
        %s661 = scalar_select %p660, %s35, 1
        %s662 = smul.addr %s661, 8
        %s663 = smul.addr %s662, 8
        %s664 = scalar_lea.vmem %s4, %s663
        %p665 = pneg %p160
        %p666 = pneg %p157
        %p667 = pneg %p181
        %p668 = pneg %p178
        %p669 = pneg %p202
        %p670 = pneg %p199
        %p671 = pneg %p223
        %p672 = pneg %p220
        %p673 = pneg %p244
        %p674 = pneg %p241
        %p675 = pneg %p265
        %p676 = pneg %p262
        %p677 = pneg %p286
        %p678 = pneg %p283
        %p679 = pneg %p307
        %p680 = pneg %p304
        %p681 = pneg %p328
        %p682 = pneg %p325
        %p683 = pneg %p349
        %p684 = pneg %p346
        %p685 = pneg %p370
        %p686 = pneg %p367
        %p687 = pneg %p391
        %p688 = pneg %p388
        %p689 = pneg %p412
        %p690 = pneg %p409
        %p691 = pneg %p433
        %p692 = pneg %p430
        %p693 = pneg %p454
        %p694 = pneg %p451
        %p695 = pneg %p475
        %p696 = pneg %p472
        %p697 = pneg %p496
        %p698 = pneg %p493
        %p699 = pneg %p522
        %p700 = pneg %p519
        %s701 = sand.u32 %s509, 1
        %s702 = scalar_lea.sflag [#allocation3], %s701
        %s703 = sand.u32 %s509, 1
        %s704 = smul.addr %s703, 8
        %s705 = scalar_lea.vmem [#allocation2], %s704
        %p706 = scmp.lt.s32.totalorder %s35, 1
        %s707 = scalar_select %p706, %s35, 1
        %s708 = smul.addr %s707, 8
        %s709 = scalar_lea.vmem %s0, %s708
        %p710 = scmp.lt.s32.totalorder %s35, 1
        %s711 = scalar_select %p710, %s35, 1
        %s712 = smul.addr %s711, 8
        %s713 = scalar_lea.vmem %s1, %s712
        %p714 = scmp.lt.s32.totalorder %s35, 1
        %s715 = scalar_select %p714, %s35, 1
        %s716 = smul.addr %s715, 8
        %s717 = smul.addr %s716, 8
        %s718 = scalar_lea.vmem %s2, %s717
        %p719 = scmp.lt.s32.totalorder %s35, 1
        %s720 = scalar_select %p719, %s35, 1
        %s721 = smul.addr %s720, 8
        %s722 = smul.addr %s721, 8
        %s723 = scalar_lea.vmem %s3, %s722
        %p724 = scmp.lt.s32.totalorder %s35, 1
        %s725 = scalar_select %p724, %s35, 1
        %s726 = smul.addr %s725, 8
        %s727 = smul.addr %s726, 8
        %s728 = scalar_lea.vmem %s4, %s727
        %v729 = vld [vmem:[%s5] sm:$0xff]
        %v730 = vld [vmem:[%s5 + $0x8] sm:$0xff]
        %v731 = vld [vmem:[%s5 + $0x10] sm:$0xff]
        %v732 = vld [vmem:[%s5 + $0x18] sm:$0xff]
        %v733 = vld [vmem:[%s5 + $0x20] sm:$0xff]
        %v734 = vld [vmem:[%s5 + $0x28] sm:$0xff]
        %v735 = vld [vmem:[%s5 + $0x30] sm:$0xff]
        %v736 = vld [vmem:[%s5 + $0x38] sm:$0xff]
        %v737 = vld [vmem:[%s5 + $0x40] sm:$0xff]
        %v738 = vld [vmem:[%s5 + $0x48] sm:$0xff]
        %v739 = vld [vmem:[%s5 + $0x50] sm:$0xff]
        %v740 = vld [vmem:[%s5 + $0x58] sm:$0xff]
        %v741 = vld [vmem:[%s5 + $0x60] sm:$0xff]
        %v742 = vld [vmem:[%s5 + $0x68] sm:$0xff]
        %v743 = vld [vmem:[%s5 + $0x70] sm:$0xff]
        %v744 = vld [vmem:[%s5 + $0x78] sm:$0xff]
        %v745 = vld [vmem:[%s7] sm:$0xff]
        %v746 = vld [vmem:[%s7 + $0x8] sm:$0xff]
        %v747 = vld [vmem:[%s7 + $0x10] sm:$0xff]
        %v748 = vld [vmem:[%s7 + $0x18] sm:$0xff]
        %v749 = vld [vmem:[%s7 + $0x20] sm:$0xff]
        %v750 = vld [vmem:[%s7 + $0x28] sm:$0xff]
        %v751 = vld [vmem:[%s7 + $0x30] sm:$0xff]
        %v752 = vld [vmem:[%s7 + $0x38] sm:$0xff]
        %v753 = vld [vmem:[%s7 + $0x40] sm:$0xff]
        %v754 = vld [vmem:[%s7 + $0x48] sm:$0xff]
        %v755 = vld [vmem:[%s7 + $0x50] sm:$0xff]
        %v756 = vld [vmem:[%s7 + $0x58] sm:$0xff]
        %v757 = vld [vmem:[%s7 + $0x60] sm:$0xff]
        %v758 = vld [vmem:[%s7 + $0x68] sm:$0xff]
        %v759 = vld [vmem:[%s7 + $0x70] sm:$0xff]
        %v760 = vld [vmem:[%s7 + $0x78] sm:$0xff]
        %v761 = vld [vmem:[%s9] sm:$0xff]
        %v762 = vld [vmem:[%s9 + $0x8] sm:$0xff]
        %v763 = vld [vmem:[%s9 + $0x10] sm:$0xff]
        %v764 = vld [vmem:[%s9 + $0x18] sm:$0xff]
        %v765 = vld [vmem:[%s9 + $0x20] sm:$0xff]
        %v766 = vld [vmem:[%s9 + $0x28] sm:$0xff]
        %v767 = vld [vmem:[%s9 + $0x30] sm:$0xff]
        %v768 = vld [vmem:[%s9 + $0x38] sm:$0xff]
        %v769 = vld [vmem:[%s9 + $0x40] sm:$0xff]
        %v770 = vld [vmem:[%s9 + $0x48] sm:$0xff]
        %v771 = vld [vmem:[%s9 + $0x50] sm:$0xff]
        %v772 = vld [vmem:[%s9 + $0x58] sm:$0xff]
        %v773 = vld [vmem:[%s9 + $0x60] sm:$0xff]
        %v774 = vld [vmem:[%s9 + $0x68] sm:$0xff]
        %v775 = vld [vmem:[%s9 + $0x70] sm:$0xff]
        %v776 = vld [vmem:[%s9 + $0x78] sm:$0xff]
        %v777 = vld [vmem:[%s11] sm:$0xff]
        %v778 = vld [vmem:[%s11 + $0x8] sm:$0xff]
        %v779 = vld [vmem:[%s11 + $0x10] sm:$0xff]
        %v780 = vld [vmem:[%s11 + $0x18] sm:$0xff]
        %v781 = vld [vmem:[%s6] sm:$0xf]
        %v784 = vunpack.c.l.s4 1966171168
        %v785 = vunpack.c.0.s8 %v784
        %v786 = vlaneseq
        %v787 = vshrl.u32 %v786, 7
        %v788 = vsub.s32 %v785, %v787
        %v789 = vrot.slane %v781, %v788
        %v790 = vcombine.high %v789, %v789
        %v792 = vunpack.c.l.s4 1966171168
        %v793 = vunpack.c.0.s8 %v792
        %v794 = vlaneseq
        %v795 = vshrl.u32 %v794, 7
        %v796 = vsub.s32 %v793, %v795
        %v797 = vrot.slane %v789, %v796
        %v799 = vunpack.c.l.s4 1966171168
        %v800 = vunpack.c.0.s8 %v799
        %v801 = vlaneseq
        %v802 = vshrl.u32 %v801, 7
        %v803 = vsub.s32 %v800, %v802
        %v804 = vrot.slane %v790, %v803
        %v805 = vcombine.high %v797, %v797
        %v806 = vcombine.high %v804, %v804
        %v807 = vld [vmem:[%s8] sm:$0xf]
        %v810 = vunpack.c.l.s4 1966171168
        %v811 = vunpack.c.0.s8 %v810
        %v812 = vlaneseq
        %v813 = vshrl.u32 %v812, 7
        %v814 = vsub.s32 %v811, %v813
        %v815 = vrot.slane %v807, %v814
        %v816 = vcombine.high %v815, %v815
        %v818 = vunpack.c.l.s4 1966171168
        %v819 = vunpack.c.0.s8 %v818
        %v820 = vlaneseq
        %v821 = vshrl.u32 %v820, 7
        %v822 = vsub.s32 %v819, %v821
        %v823 = vrot.slane %v815, %v822
        %v825 = vunpack.c.l.s4 1966171168
        %v826 = vunpack.c.0.s8 %v825
        %v827 = vlaneseq
        %v828 = vshrl.u32 %v827, 7
        %v829 = vsub.s32 %v826, %v828
        %v830 = vrot.slane %v816, %v829
        %v831 = vcombine.high %v823, %v823
        %v832 = vcombine.high %v830, %v830
        %v833 = vld [vmem:[%s10] sm:$0xf]
        %v836 = vunpack.c.l.s4 1966171168
        %v837 = vunpack.c.0.s8 %v836
        %v838 = vlaneseq
        %v839 = vshrl.u32 %v838, 7
        %v840 = vsub.s32 %v837, %v839
        %v841 = vrot.slane %v833, %v840
        %v842 = vcombine.high %v841, %v841
        %v844 = vunpack.c.l.s4 1966171168
        %v845 = vunpack.c.0.s8 %v844
        %v846 = vlaneseq
        %v847 = vshrl.u32 %v846, 7
        %v848 = vsub.s32 %v845, %v847
        %v849 = vrot.slane %v841, %v848
        %v851 = vunpack.c.l.s4 1966171168
        %v852 = vunpack.c.0.s8 %v851
        %v853 = vlaneseq
        %v854 = vshrl.u32 %v853, 7
        %v855 = vsub.s32 %v852, %v854
        %v856 = vrot.slane %v842, %v855
        %v857 = vcombine.high %v849, %v849
        %v858 = vcombine.high %v856, %v856
        %v859 = vld [vmem:[%s709] sm:$0xff]
        %v860 = vlaneseq
        %v861 = vshrl.u32 %v860, 7
        %v862 = vsub.s32 0, %v861
        %v863 = vrot.slane %v797, %v862
        %v864 = vlaneseq
        %v865 = vshrl.u32 %v864, 7
        %v866 = vsub.s32 0, %v865
        %v867 = vrot.slane %v804, %v866
        %v868 = vlaneseq
        %v869 = vshrl.u32 %v868, 7
        %v870 = vsub.s32 0, %v869
        %v871 = vrot.slane %v805, %v870
        %v872 = vlaneseq
        %v873 = vshrl.u32 %v872, 7
        %v874 = vsub.s32 0, %v873
        %v875 = vrot.slane %v806, %v874
        %vm880 = vcmask 261120
        %v882 = vsel %vm880, %v859, 0
        %884 = vmatprep.subr.mxu0 0.0
        %885 = vmatpush1.msra.mxu0 %v729
        %886 = vmatprep.subr.mxu0 0.0
        %887 = vmatpush1.msra.mxu0 %v730
        %888 = vmatprep.subr.mxu0 0.0
        %889 = vmatpush1.msra.mxu0 %v731
        %890 = vmatprep.subr.mxu0 0.0
        %891 = vmatpush1.msra.mxu0 %v732
        %892 = vmatprep.subr.mxu0 0.0
        %893 = vmatpush1.msra.mxu0 0.0
        %894 = vmatprep.subr.mxu0 0.0
        %895 = vmatpush1.msra.mxu0 0.0
        %896 = vmatprep.subr.mxu0 0.0
        %897 = vmatpush1.msra.mxu0 0.0
        %898 = vmatprep.subr.mxu0 0.0
        %899 = vmatpush1.msra.mxu0 0.0
        %900 = vmatprep.subr.mxu0 0.0
        %901 = vmatpush1.msra.mxu0 0.0
        %902 = vmatprep.subr.mxu0 0.0
        %903 = vmatpush1.msra.mxu0 0.0
        %904 = vmatprep.subr.mxu0 0.0
        %905 = vmatpush1.msra.mxu0 0.0
        %906 = vmatprep.subr.mxu0 0.0
        %907 = vmatpush1.msra.mxu0 0.0
        %908 = vmatprep.subr.mxu0 0.0
        %909 = vmatpush1.msra.mxu0 0.0
        %910 = vmatprep.subr.mxu0 0.0
        %911 = vmatpush1.msra.mxu0 0.0
        %912 = vmatprep.subr.mxu0 0.0
        %913 = vmatpush1.msra.mxu0 0.0
        %914 = vmatprep.subr.mxu0 0.0
        %915 = vmatpush1.msra.mxu0 0.0
        %916 = vmatprep.subr.mxu0 0.0
        %917 = vmatpush1.msra.mxu0 0.0
        %918 = vmatprep.subr.mxu0 0.0
        %919 = vmatpush1.msra.mxu0 0.0
        %920 = vmatprep.subr.mxu0 0.0
        %921 = vmatpush1.msra.mxu0 0.0
        %922 = vmatprep.subr.mxu0 0.0
        %923 = vmatpush1.msra.mxu0 0.0
        %924 = vmatprep.subr.mxu0 0.0
        %925 = vmatpush1.msra.mxu0 0.0
        %926 = vmatprep.subr.mxu0 0.0
        %927 = vmatpush1.msra.mxu0 0.0
        %928 = vmatprep.subr.mxu0 0.0
        %929 = vmatpush1.msra.mxu0 0.0
        %930 = vmatprep.subr.mxu0 0.0
        %931 = vmatpush1.msra.mxu0 0.0
        %932 = vmatprep.subr.mxu0 0.0
        %933 = vmatpush1.msra.mxu0 0.0
        %934 = vmatprep.subr.mxu0 0.0
        %935 = vmatpush1.msra.mxu0 0.0
        %936 = vmatprep.subr.mxu0 0.0
        %937 = vmatpush1.msra.mxu0 0.0
        %938 = vmatprep.subr.mxu0 0.0
        %939 = vmatpush1.msra.mxu0 0.0
        %940 = vmatprep.subr.mxu0 0.0
        %941 = vmatpush1.msra.mxu0 0.0
        %942 = vmatprep.subr.mxu0 0.0
        %943 = vmatpush1.msra.mxu0 0.0
        %944 = vmatprep.subr.mxu0 0.0
        %945 = vmatpush1.msra.mxu0 0.0
        %946 = vmatprep.subr.mxu0 0.0
        %947 = vmatpush1.msra.mxu0 0.0
        %948 = vmatprep.mubr.f32.mxu0 0.0
        %949 = vmatmul.mubr.f32.gmra.mrb[0].mxu0 %v882
        %v950 = vpop.f32.mrb[0].mxu0
        %v951 = vadd.f32 %v863, %v950
        %v952 = vpop.f32.mrb[0].mxu0
        %953 = vdwg.mxu0
        %954 = vmatprep.subr.mxu0 0.0
        %955 = vmatpush1.msra.mxu0 %v733
        %956 = vmatprep.subr.mxu0 0.0
        %957 = vmatpush1.msra.mxu0 %v734
        %958 = vmatprep.subr.mxu0 0.0
        %959 = vmatpush1.msra.mxu0 %v735
        %960 = vmatprep.subr.mxu0 0.0
        %961 = vmatpush1.msra.mxu0 %v736
        %962 = vmatprep.subr.mxu0 0.0
        %963 = vmatpush1.msra.mxu0 0.0
        %964 = vmatprep.subr.mxu0 0.0
        %965 = vmatpush1.msra.mxu0 0.0
        %966 = vmatprep.subr.mxu0 0.0
        %967 = vmatpush1.msra.mxu0 0.0
        %968 = vmatprep.subr.mxu0 0.0
        %969 = vmatpush1.msra.mxu0 0.0
        %970 = vmatprep.subr.mxu0 0.0
        %971 = vmatpush1.msra.mxu0 0.0
        %972 = vmatprep.subr.mxu0 0.0
        %973 = vmatpush1.msra.mxu0 0.0
        %974 = vmatprep.subr.mxu0 0.0
        %975 = vmatpush1.msra.mxu0 0.0
        %976 = vmatprep.subr.mxu0 0.0
        %977 = vmatpush1.msra.mxu0 0.0
        %978 = vmatprep.subr.mxu0 0.0
        %979 = vmatpush1.msra.mxu0 0.0
        %980 = vmatprep.subr.mxu0 0.0
        %981 = vmatpush1.msra.mxu0 0.0
        %982 = vmatprep.subr.mxu0 0.0
        %983 = vmatpush1.msra.mxu0 0.0
        %984 = vmatprep.subr.mxu0 0.0
        %985 = vmatpush1.msra.mxu0 0.0
        %986 = vmatprep.subr.mxu0 0.0
        %987 = vmatpush1.msra.mxu0 0.0
        %988 = vmatprep.subr.mxu0 0.0
        %989 = vmatpush1.msra.mxu0 0.0
        %990 = vmatprep.subr.mxu0 0.0
        %991 = vmatpush1.msra.mxu0 0.0
        %992 = vmatprep.subr.mxu0 0.0
        %993 = vmatpush1.msra.mxu0 0.0
        %994 = vmatprep.subr.mxu0 0.0
        %995 = vmatpush1.msra.mxu0 0.0
        %996 = vmatprep.subr.mxu0 0.0
        %997 = vmatpush1.msra.mxu0 0.0
        %998 = vmatprep.subr.mxu0 0.0
        %999 = vmatpush1.msra.mxu0 0.0
        %1000 = vmatprep.subr.mxu0 0.0
        %1001 = vmatpush1.msra.mxu0 0.0
        %1002 = vmatprep.subr.mxu0 0.0
        %1003 = vmatpush1.msra.mxu0 0.0
        %1004 = vmatprep.subr.mxu0 0.0
        %1005 = vmatpush1.msra.mxu0 0.0
        %1006 = vmatprep.subr.mxu0 0.0
        %1007 = vmatpush1.msra.mxu0 0.0
        %1008 = vmatprep.subr.mxu0 0.0
        %1009 = vmatpush1.msra.mxu0 0.0
        %1010 = vmatprep.subr.mxu0 0.0
        %1011 = vmatpush1.msra.mxu0 0.0
        %1012 = vmatprep.subr.mxu0 0.0
        %1013 = vmatpush1.msra.mxu0 0.0
        %1014 = vmatprep.subr.mxu0 0.0
        %1015 = vmatpush1.msra.mxu0 0.0
        %1016 = vmatprep.subr.mxu0 0.0
        %1017 = vmatpush1.msra.mxu0 0.0
        %1018 = vmatprep.mubr.f32.mxu0 0.0
        %1019 = vmatmul.mubr.f32.gmra.mrb[0].mxu0 %v882
        %v1020 = vpop.f32.mrb[0].mxu0
        %v1021 = vadd.f32 %v867, %v1020
        %v1022 = vpop.f32.mrb[0].mxu0
        %1023 = vdwg.mxu0
        %1024 = vmatprep.subr.mxu0 0.0
        %1025 = vmatpush1.msra.mxu0 %v737
        %1026 = vmatprep.subr.mxu0 0.0
        %1027 = vmatpush1.msra.mxu0 %v738
        %1028 = vmatprep.subr.mxu0 0.0
        %1029 = vmatpush1.msra.mxu0 %v739
        %1030 = vmatprep.subr.mxu0 0.0
        %1031 = vmatpush1.msra.mxu0 %v740
        %1032 = vmatprep.subr.mxu0 0.0
        %1033 = vmatpush1.msra.mxu0 0.0
        %1034 = vmatprep.subr.mxu0 0.0
        %1035 = vmatpush1.msra.mxu0 0.0
        %1036 = vmatprep.subr.mxu0 0.0
        %1037 = vmatpush1.msra.mxu0 0.0
        %1038 = vmatprep.subr.mxu0 0.0
        %1039 = vmatpush1.msra.mxu0 0.0
        %1040 = vmatprep.subr.mxu0 0.0
        %1041 = vmatpush1.msra.mxu0 0.0
        %1042 = vmatprep.subr.mxu0 0.0
        %1043 = vmatpush1.msra.mxu0 0.0
        %1044 = vmatprep.subr.mxu0 0.0
        %1045 = vmatpush1.msra.mxu0 0.0
        %1046 = vmatprep.subr.mxu0 0.0
        %1047 = vmatpush1.msra.mxu0 0.0
        %1048 = vmatprep.subr.mxu0 0.0
        %1049 = vmatpush1.msra.mxu0 0.0
        %1050 = vmatprep.subr.mxu0 0.0
        %1051 = vmatpush1.msra.mxu0 0.0
        %1052 = vmatprep.subr.mxu0 0.0
        %1053 = vmatpush1.msra.mxu0 0.0
        %1054 = vmatprep.subr.mxu0 0.0
        %1055 = vmatpush1.msra.mxu0 0.0
        %1056 = vmatprep.subr.mxu0 0.0
        %1057 = vmatpush1.msra.mxu0 0.0
        %1058 = vmatprep.subr.mxu0 0.0
        %1059 = vmatpush1.msra.mxu0 0.0
        %1060 = vmatprep.subr.mxu0 0.0
        %1061 = vmatpush1.msra.mxu0 0.0
        %1062 = vmatprep.subr.mxu0 0.0
        %1063 = vmatpush1.msra.mxu0 0.0
        %1064 = vmatprep.subr.mxu0 0.0
        %1065 = vmatpush1.msra.mxu0 0.0
        %1066 = vmatprep.subr.mxu0 0.0
        %1067 = vmatpush1.msra.mxu0 0.0
        %1068 = vmatprep.subr.mxu0 0.0
        %1069 = vmatpush1.msra.mxu0 0.0
        %1070 = vmatprep.subr.mxu0 0.0
        %1071 = vmatpush1.msra.mxu0 0.0
        %1072 = vmatprep.subr.mxu0 0.0
        %1073 = vmatpush1.msra.mxu0 0.0
        %1074 = vmatprep.subr.mxu0 0.0
        %1075 = vmatpush1.msra.mxu0 0.0
        %1076 = vmatprep.subr.mxu0 0.0
        %1077 = vmatpush1.msra.mxu0 0.0
        %1078 = vmatprep.subr.mxu0 0.0
        %1079 = vmatpush1.msra.mxu0 0.0
        %1080 = vmatprep.subr.mxu0 0.0
        %1081 = vmatpush1.msra.mxu0 0.0
        %1082 = vmatprep.subr.mxu0 0.0
        %1083 = vmatpush1.msra.mxu0 0.0
        %1084 = vmatprep.subr.mxu0 0.0
        %1085 = vmatpush1.msra.mxu0 0.0
        %1086 = vmatprep.subr.mxu0 0.0
        %1087 = vmatpush1.msra.mxu0 0.0
        %1088 = vmatprep.mubr.f32.mxu0 0.0
        %1089 = vmatmul.mubr.f32.gmra.mrb[0].mxu0 %v882
        %v1090 = vpop.f32.mrb[0].mxu0
        %v1091 = vadd.f32 %v871, %v1090
        %v1092 = vpop.f32.mrb[0].mxu0
        %1093 = vdwg.mxu0
        %1094 = vmatprep.subr.mxu0 0.0
        %1095 = vmatpush1.msra.mxu0 %v741
        %1096 = vmatprep.subr.mxu0 0.0
        %1097 = vmatpush1.msra.mxu0 %v742
        %1098 = vmatprep.subr.mxu0 0.0
        %1099 = vmatpush1.msra.mxu0 %v743
        %1100 = vmatprep.subr.mxu0 0.0
        %1101 = vmatpush1.msra.mxu0 %v744
        %1102 = vmatprep.subr.mxu0 0.0
        %1103 = vmatpush1.msra.mxu0 0.0
        %1104 = vmatprep.subr.mxu0 0.0
        %1105 = vmatpush1.msra.mxu0 0.0
        %1106 = vmatprep.subr.mxu0 0.0
        %1107 = vmatpush1.msra.mxu0 0.0
        %1108 = vmatprep.subr.mxu0 0.0
        %1109 = vmatpush1.msra.mxu0 0.0
        %1110 = vmatprep.subr.mxu0 0.0
        %1111 = vmatpush1.msra.mxu0 0.0
        %1112 = vmatprep.subr.mxu0 0.0
        %1113 = vmatpush1.msra.mxu0 0.0
        %1114 = vmatprep.subr.mxu0 0.0
        %1115 = vmatpush1.msra.mxu0 0.0
        %1116 = vmatprep.subr.mxu0 0.0
        %1117 = vmatpush1.msra.mxu0 0.0
        %1118 = vmatprep.subr.mxu0 0.0
        %1119 = vmatpush1.msra.mxu0 0.0
        %1120 = vmatprep.subr.mxu0 0.0
        %1121 = vmatpush1.msra.mxu0 0.0
        %1122 = vmatprep.subr.mxu0 0.0
        %1123 = vmatpush1.msra.mxu0 0.0
        %1124 = vmatprep.subr.mxu0 0.0
        %1125 = vmatpush1.msra.mxu0 0.0
        %1126 = vmatprep.subr.mxu0 0.0
        %1127 = vmatpush1.msra.mxu0 0.0
        %1128 = vmatprep.subr.mxu0 0.0
        %1129 = vmatpush1.msra.mxu0 0.0
        %1130 = vmatprep.subr.mxu0 0.0
        %1131 = vmatpush1.msra.mxu0 0.0
        %1132 = vmatprep.subr.mxu0 0.0
        %1133 = vmatpush1.msra.mxu0 0.0
        %1134 = vmatprep.subr.mxu0 0.0
        %1135 = vmatpush1.msra.mxu0 0.0
        %1136 = vmatprep.subr.mxu0 0.0
        %1137 = vmatpush1.msra.mxu0 0.0
        %1138 = vmatprep.subr.mxu0 0.0
        %1139 = vmatpush1.msra.mxu0 0.0
        %1140 = vmatprep.subr.mxu0 0.0
        %1141 = vmatpush1.msra.mxu0 0.0
        %1142 = vmatprep.subr.mxu0 0.0
        %1143 = vmatpush1.msra.mxu0 0.0
        %1144 = vmatprep.subr.mxu0 0.0
        %1145 = vmatpush1.msra.mxu0 0.0
        %1146 = vmatprep.subr.mxu0 0.0
        %1147 = vmatpush1.msra.mxu0 0.0
        %1148 = vmatprep.subr.mxu0 0.0
        %1149 = vmatpush1.msra.mxu0 0.0
        %1150 = vmatprep.subr.mxu0 0.0
        %1151 = vmatpush1.msra.mxu0 0.0
        %1152 = vmatprep.subr.mxu0 0.0
        %1153 = vmatpush1.msra.mxu0 0.0
        %1154 = vmatprep.subr.mxu0 0.0
        %1155 = vmatpush1.msra.mxu0 0.0
        %1156 = vmatprep.subr.mxu0 0.0
        %1157 = vmatpush1.msra.mxu0 0.0
        %1158 = vmatprep.mubr.f32.mxu0 0.0
        %1159 = vmatmul.mubr.f32.gmra.mrb[0].mxu0 %v882
        %v1160 = vpop.f32.mrb[0].mxu0
        %v1161 = vadd.f32 %v875, %v1160
        %v1162 = vpop.f32.mrb[0].mxu0
        %1163 = vdwg.mxu0
        %v1164 = vlaneseq
        %v1165 = vshrl.u32 %v1164, 7
        %v1166 = vsub.s32 0, %v1165
        %v1167 = vrot.slane %v823, %v1166
        %v1168 = vlaneseq
        %v1169 = vshrl.u32 %v1168, 7
        %v1170 = vsub.s32 0, %v1169
        %v1171 = vrot.slane %v830, %v1170
        %v1172 = vlaneseq
        %v1173 = vshrl.u32 %v1172, 7
        %v1174 = vsub.s32 0, %v1173
        %v1175 = vrot.slane %v831, %v1174
        %v1176 = vlaneseq
        %v1177 = vshrl.u32 %v1176, 7
        %v1178 = vsub.s32 0, %v1177
        %v1179 = vrot.slane %v832, %v1178
        %1184 = vmatprep.subr.mxu0 0.0
        %1185 = vmatpush1.msra.mxu0 %v745
        %1186 = vmatprep.subr.mxu0 0.0
        %1187 = vmatpush1.msra.mxu0 %v746
        %1188 = vmatprep.subr.mxu0 0.0
        %1189 = vmatpush1.msra.mxu0 %v747
        %1190 = vmatprep.subr.mxu0 0.0
        %1191 = vmatpush1.msra.mxu0 %v748
        %1192 = vmatprep.subr.mxu0 0.0
        %1193 = vmatpush1.msra.mxu0 0.0
        %1194 = vmatprep.subr.mxu0 0.0
        %1195 = vmatpush1.msra.mxu0 0.0
        %1196 = vmatprep.subr.mxu0 0.0
        %1197 = vmatpush1.msra.mxu0 0.0
        %1198 = vmatprep.subr.mxu0 0.0
        %1199 = vmatpush1.msra.mxu0 0.0
        %1200 = vmatprep.subr.mxu0 0.0
        %1201 = vmatpush1.msra.mxu0 0.0
        %1202 = vmatprep.subr.mxu0 0.0
        %1203 = vmatpush1.msra.mxu0 0.0
        %1204 = vmatprep.subr.mxu0 0.0
        %1205 = vmatpush1.msra.mxu0 0.0
        %1206 = vmatprep.subr.mxu0 0.0
        %1207 = vmatpush1.msra.mxu0 0.0
        %1208 = vmatprep.subr.mxu0 0.0
        %1209 = vmatpush1.msra.mxu0 0.0
        %1210 = vmatprep.subr.mxu0 0.0
        %1211 = vmatpush1.msra.mxu0 0.0
        %1212 = vmatprep.subr.mxu0 0.0
        %1213 = vmatpush1.msra.mxu0 0.0
        %1214 = vmatprep.subr.mxu0 0.0
        %1215 = vmatpush1.msra.mxu0 0.0
        %1216 = vmatprep.subr.mxu0 0.0
        %1217 = vmatpush1.msra.mxu0 0.0
        %1218 = vmatprep.subr.mxu0 0.0
        %1219 = vmatpush1.msra.mxu0 0.0
        %1220 = vmatprep.subr.mxu0 0.0
        %1221 = vmatpush1.msra.mxu0 0.0
        %1222 = vmatprep.subr.mxu0 0.0
        %1223 = vmatpush1.msra.mxu0 0.0
        %1224 = vmatprep.subr.mxu0 0.0
        %1225 = vmatpush1.msra.mxu0 0.0
        %1226 = vmatprep.subr.mxu0 0.0
        %1227 = vmatpush1.msra.mxu0 0.0
        %1228 = vmatprep.subr.mxu0 0.0
        %1229 = vmatpush1.msra.mxu0 0.0
        %1230 = vmatprep.subr.mxu0 0.0
        %1231 = vmatpush1.msra.mxu0 0.0
        %1232 = vmatprep.subr.mxu0 0.0
        %1233 = vmatpush1.msra.mxu0 0.0
        %1234 = vmatprep.subr.mxu0 0.0
        %1235 = vmatpush1.msra.mxu0 0.0
        %1236 = vmatprep.subr.mxu0 0.0
        %1237 = vmatpush1.msra.mxu0 0.0
        %1238 = vmatprep.subr.mxu0 0.0
        %1239 = vmatpush1.msra.mxu0 0.0
        %1240 = vmatprep.subr.mxu0 0.0
        %1241 = vmatpush1.msra.mxu0 0.0
        %1242 = vmatprep.subr.mxu0 0.0
        %1243 = vmatpush1.msra.mxu0 0.0
        %1244 = vmatprep.subr.mxu0 0.0
        %1245 = vmatpush1.msra.mxu0 0.0
        %1246 = vmatprep.subr.mxu0 0.0
        %1247 = vmatpush1.msra.mxu0 0.0
        %1248 = vmatprep.mubr.f32.mxu0 0.0
        %1249 = vmatmul.mubr.f32.gmra.mrb[0].mxu0 %v882
        %v1250 = vpop.f32.mrb[0].mxu0
        %v1251 = vadd.f32 %v1167, %v1250
        %v1252 = vpop.f32.mrb[0].mxu0
        %1253 = vdwg.mxu0
        %1254 = vmatprep.subr.mxu0 0.0
        %1255 = vmatpush1.msra.mxu0 %v749
        %1256 = vmatprep.subr.mxu0 0.0
        %1257 = vmatpush1.msra.mxu0 %v750
        %1258 = vmatprep.subr.mxu0 0.0
        %1259 = vmatpush1.msra.mxu0 %v751
        %1260 = vmatprep.subr.mxu0 0.0
        %1261 = vmatpush1.msra.mxu0 %v752
        %1262 = vmatprep.subr.mxu0 0.0
        %1263 = vmatpush1.msra.mxu0 0.0
        %1264 = vmatprep.subr.mxu0 0.0
        %1265 = vmatpush1.msra.mxu0 0.0
        %1266 = vmatprep.subr.mxu0 0.0
        %1267 = vmatpush1.msra.mxu0 0.0
        %1268 = vmatprep.subr.mxu0 0.0
        %1269 = vmatpush1.msra.mxu0 0.0
        %1270 = vmatprep.subr.mxu0 0.0
        %1271 = vmatpush1.msra.mxu0 0.0
        %1272 = vmatprep.subr.mxu0 0.0
        %1273 = vmatpush1.msra.mxu0 0.0
        %1274 = vmatprep.subr.mxu0 0.0
        %1275 = vmatpush1.msra.mxu0 0.0
        %1276 = vmatprep.subr.mxu0 0.0
        %1277 = vmatpush1.msra.mxu0 0.0
        %1278 = vmatprep.subr.mxu0 0.0
        %1279 = vmatpush1.msra.mxu0 0.0
        %1280 = vmatprep.subr.mxu0 0.0
        %1281 = vmatpush1.msra.mxu0 0.0
        %1282 = vmatprep.subr.mxu0 0.0
        %1283 = vmatpush1.msra.mxu0 0.0
        %1284 = vmatprep.subr.mxu0 0.0
        %1285 = vmatpush1.msra.mxu0 0.0
        %1286 = vmatprep.subr.mxu0 0.0
        %1287 = vmatpush1.msra.mxu0 0.0
        %1288 = vmatprep.subr.mxu0 0.0
        %1289 = vmatpush1.msra.mxu0 0.0
        %1290 = vmatprep.subr.mxu0 0.0
        %1291 = vmatpush1.msra.mxu0 0.0
        %1292 = vmatprep.subr.mxu0 0.0
        %1293 = vmatpush1.msra.mxu0 0.0
        %1294 = vmatprep.subr.mxu0 0.0
        %1295 = vmatpush1.msra.mxu0 0.0
        %1296 = vmatprep.subr.mxu0 0.0
        %1297 = vmatpush1.msra.mxu0 0.0
        %1298 = vmatprep.subr.mxu0 0.0
        %1299 = vmatpush1.msra.mxu0 0.0
        %1300 = vmatprep.subr.mxu0 0.0
        %1301 = vmatpush1.msra.mxu0 0.0
        %1302 = vmatprep.subr.mxu0 0.0
        %1303 = vmatpush1.msra.mxu0 0.0
        %1304 = vmatprep.subr.mxu0 0.0
        %1305 = vmatpush1.msra.mxu0 0.0
        %1306 = vmatprep.subr.mxu0 0.0
        %1307 = vmatpush1.msra.mxu0 0.0
        %1308 = vmatprep.subr.mxu0 0.0
        %1309 = vmatpush1.msra.mxu0 0.0
        %1310 = vmatprep.subr.mxu0 0.0
        %1311 = vmatpush1.msra.mxu0 0.0
        %1312 = vmatprep.subr.mxu0 0.0
        %1313 = vmatpush1.msra.mxu0 0.0
        %1314 = vmatprep.subr.mxu0 0.0
        %1315 = vmatpush1.msra.mxu0 0.0
        %1316 = vmatprep.subr.mxu0 0.0
        %1317 = vmatpush1.msra.mxu0 0.0
        %1318 = vmatprep.mubr.f32.mxu0 0.0
        %1319 = vmatmul.mubr.f32.gmra.mrb[0].mxu0 %v882
        %v1320 = vpop.f32.mrb[0].mxu0
        %v1321 = vadd.f32 %v1171, %v1320
        %v1322 = vpop.f32.mrb[0].mxu0
        %1323 = vdwg.mxu0
        %1324 = vmatprep.subr.mxu0 0.0
        %1325 = vmatpush1.msra.mxu0 %v753
        %1326 = vmatprep.subr.mxu0 0.0
        %1327 = vmatpush1.msra.mxu0 %v754
        %1328 = vmatprep.subr.mxu0 0.0
        %1329 = vmatpush1.msra.mxu0 %v755
        %1330 = vmatprep.subr.mxu0 0.0
        %1331 = vmatpush1.msra.mxu0 %v756
        %1332 = vmatprep.subr.mxu0 0.0
        %1333 = vmatpush1.msra.mxu0 0.0
        %1334 = vmatprep.subr.mxu0 0.0
        %1335 = vmatpush1.msra.mxu0 0.0
        %1336 = vmatprep.subr.mxu0 0.0
        %1337 = vmatpush1.msra.mxu0 0.0
        %1338 = vmatprep.subr.mxu0 0.0
        %1339 = vmatpush1.msra.mxu0 0.0
        %1340 = vmatprep.subr.mxu0 0.0
        %1341 = vmatpush1.msra.mxu0 0.0
        %1342 = vmatprep.subr.mxu0 0.0
        %1343 = vmatpush1.msra.mxu0 0.0
        %1344 = vmatprep.subr.mxu0 0.0
        %1345 = vmatpush1.msra.mxu0 0.0
        %1346 = vmatprep.subr.mxu0 0.0
        %1347 = vmatpush1.msra.mxu0 0.0
        %1348 = vmatprep.subr.mxu0 0.0
        %1349 = vmatpush1.msra.mxu0 0.0
        %1350 = vmatprep.subr.mxu0 0.0
        %1351 = vmatpush1.msra.mxu0 0.0
        %1352 = vmatprep.subr.mxu0 0.0
        %1353 = vmatpush1.msra.mxu0 0.0
        %1354 = vmatprep.subr.mxu0 0.0
        %1355 = vmatpush1.msra.mxu0 0.0
        %1356 = vmatprep.subr.mxu0 0.0
        %1357 = vmatpush1.msra.mxu0 0.0
        %1358 = vmatprep.subr.mxu0 0.0
        %1359 = vmatpush1.msra.mxu0 0.0
        %1360 = vmatprep.subr.mxu0 0.0
        %1361 = vmatpush1.msra.mxu0 0.0
        %1362 = vmatprep.subr.mxu0 0.0
        %1363 = vmatpush1.msra.mxu0 0.0
        %1364 = vmatprep.subr.mxu0 0.0
        %1365 = vmatpush1.msra.mxu0 0.0
        %1366 = vmatprep.subr.mxu0 0.0
        %1367 = vmatpush1.msra.mxu0 0.0
        %1368 = vmatprep.subr.mxu0 0.0
        %1369 = vmatpush1.msra.mxu0 0.0
        %1370 = vmatprep.subr.mxu0 0.0
        %1371 = vmatpush1.msra.mxu0 0.0
        %1372 = vmatprep.subr.mxu0 0.0
        %1373 = vmatpush1.msra.mxu0 0.0
        %1374 = vmatprep.subr.mxu0 0.0
        %1375 = vmatpush1.msra.mxu0 0.0
        %1376 = vmatprep.subr.mxu0 0.0
        %1377 = vmatpush1.msra.mxu0 0.0
        %1378 = vmatprep.subr.mxu0 0.0
        %1379 = vmatpush1.msra.mxu0 0.0
        %1380 = vmatprep.subr.mxu0 0.0
        %1381 = vmatpush1.msra.mxu0 0.0
        %1382 = vmatprep.subr.mxu0 0.0
        %1383 = vmatpush1.msra.mxu0 0.0
        %1384 = vmatprep.subr.mxu0 0.0
        %1385 = vmatpush1.msra.mxu0 0.0
        %1386 = vmatprep.subr.mxu0 0.0
        %1387 = vmatpush1.msra.mxu0 0.0
        %1388 = vmatprep.mubr.f32.mxu0 0.0
        %1389 = vmatmul.mubr.f32.gmra.mrb[0].mxu0 %v882
        %v1390 = vpop.f32.mrb[0].mxu0
        %v1391 = vadd.f32 %v1175, %v1390
        %v1392 = vpop.f32.mrb[0].mxu0
        %1393 = vdwg.mxu0
        %1394 = vmatprep.subr.mxu0 0.0
        %1395 = vmatpush1.msra.mxu0 %v757
        %1396 = vmatprep.subr.mxu0 0.0
        %1397 = vmatpush1.msra.mxu0 %v758
        %1398 = vmatprep.subr.mxu0 0.0
        %1399 = vmatpush1.msra.mxu0 %v759
        %1400 = vmatprep.subr.mxu0 0.0
        %1401 = vmatpush1.msra.mxu0 %v760
        %1402 = vmatprep.subr.mxu0 0.0
        %1403 = vmatpush1.msra.mxu0 0.0
        %1404 = vmatprep.subr.mxu0 0.0
        %1405 = vmatpush1.msra.mxu0 0.0
        %1406 = vmatprep.subr.mxu0 0.0
        %1407 = vmatpush1.msra.mxu0 0.0
        %1408 = vmatprep.subr.mxu0 0.0
        %1409 = vmatpush1.msra.mxu0 0.0
        %1410 = vmatprep.subr.mxu0 0.0
        %1411 = vmatpush1.msra.mxu0 0.0
        %1412 = vmatprep.subr.mxu0 0.0
        %1413 = vmatpush1.msra.mxu0 0.0
        %1414 = vmatprep.subr.mxu0 0.0
        %1415 = vmatpush1.msra.mxu0 0.0
        %1416 = vmatprep.subr.mxu0 0.0
        %1417 = vmatpush1.msra.mxu0 0.0
        %1418 = vmatprep.subr.mxu0 0.0
        %1419 = vmatpush1.msra.mxu0 0.0
        %1420 = vmatprep.subr.mxu0 0.0
        %1421 = vmatpush1.msra.mxu0 0.0
        %1422 = vmatprep.subr.mxu0 0.0
        %1423 = vmatpush1.msra.mxu0 0.0
        %1424 = vmatprep.subr.mxu0 0.0
        %1425 = vmatpush1.msra.mxu0 0.0
        %1426 = vmatprep.subr.mxu0 0.0
        %1427 = vmatpush1.msra.mxu0 0.0
        %1428 = vmatprep.subr.mxu0 0.0
        %1429 = vmatpush1.msra.mxu0 0.0
        %1430 = vmatprep.subr.mxu0 0.0
        %1431 = vmatpush1.msra.mxu0 0.0
        %1432 = vmatprep.subr.mxu0 0.0
        %1433 = vmatpush1.msra.mxu0 0.0
        %1434 = vmatprep.subr.mxu0 0.0
        %1435 = vmatpush1.msra.mxu0 0.0
        %1436 = vmatprep.subr.mxu0 0.0
        %1437 = vmatpush1.msra.mxu0 0.0
        %1438 = vmatprep.subr.mxu0 0.0
        %1439 = vmatpush1.msra.mxu0 0.0
        %1440 = vmatprep.subr.mxu0 0.0
        %1441 = vmatpush1.msra.mxu0 0.0
        %1442 = vmatprep.subr.mxu0 0.0
        %1443 = vmatpush1.msra.mxu0 0.0
        %1444 = vmatprep.subr.mxu0 0.0
        %1445 = vmatpush1.msra.mxu0 0.0
        %1446 = vmatprep.subr.mxu0 0.0
        %1447 = vmatpush1.msra.mxu0 0.0
        %1448 = vmatprep.subr.mxu0 0.0
        %1449 = vmatpush1.msra.mxu0 0.0
        %1450 = vmatprep.subr.mxu0 0.0
        %1451 = vmatpush1.msra.mxu0 0.0
        %1452 = vmatprep.subr.mxu0 0.0
        %1453 = vmatpush1.msra.mxu0 0.0
        %1454 = vmatprep.subr.mxu0 0.0
        %1455 = vmatpush1.msra.mxu0 0.0
        %1456 = vmatprep.subr.mxu0 0.0
        %1457 = vmatpush1.msra.mxu0 0.0
        %1458 = vmatprep.mubr.f32.mxu0 0.0
        %1459 = vmatmul.mubr.f32.gmra.mrb[0].mxu0 %v882
        %v1460 = vpop.f32.mrb[0].mxu0
        %v1461 = vadd.f32 %v1179, %v1460
        %v1462 = vpop.f32.mrb[0].mxu0
        %1463 = vdwg.mxu0
        %v1464 = vlaneseq
        %v1465 = vshrl.u32 %v1464, 7
        %v1466 = vsub.s32 0, %v1465
        %v1467 = vrot.slane %v849, %v1466
        %v1468 = vlaneseq
        %v1469 = vshrl.u32 %v1468, 7
        %v1470 = vsub.s32 0, %v1469
        %v1471 = vrot.slane %v856, %v1470
        %v1472 = vlaneseq
        %v1473 = vshrl.u32 %v1472, 7
        %v1474 = vsub.s32 0, %v1473
        %v1475 = vrot.slane %v857, %v1474
        %v1476 = vlaneseq
        %v1477 = vshrl.u32 %v1476, 7
        %v1478 = vsub.s32 0, %v1477
        %v1479 = vrot.slane %v858, %v1478
        %1484 = vmatprep.subr.mxu0 0.0
        %1485 = vmatpush1.msra.mxu0 %v761
        %1486 = vmatprep.subr.mxu0 0.0
        %1487 = vmatpush1.msra.mxu0 %v762
        %1488 = vmatprep.subr.mxu0 0.0
        %1489 = vmatpush1.msra.mxu0 %v763
        %1490 = vmatprep.subr.mxu0 0.0
        %1491 = vmatpush1.msra.mxu0 %v764
        %1492 = vmatprep.subr.mxu0 0.0
        %1493 = vmatpush1.msra.mxu0 0.0
        %1494 = vmatprep.subr.mxu0 0.0
        %1495 = vmatpush1.msra.mxu0 0.0
        %1496 = vmatprep.subr.mxu0 0.0
        %1497 = vmatpush1.msra.mxu0 0.0
        %1498 = vmatprep.subr.mxu0 0.0
        %1499 = vmatpush1.msra.mxu0 0.0
        %1500 = vmatprep.subr.mxu0 0.0
        %1501 = vmatpush1.msra.mxu0 0.0
        %1502 = vmatprep.subr.mxu0 0.0
        %1503 = vmatpush1.msra.mxu0 0.0
        %1504 = vmatprep.subr.mxu0 0.0
        %1505 = vmatpush1.msra.mxu0 0.0
        %1506 = vmatprep.subr.mxu0 0.0
        %1507 = vmatpush1.msra.mxu0 0.0
        %1508 = vmatprep.subr.mxu0 0.0
        %1509 = vmatpush1.msra.mxu0 0.0
        %1510 = vmatprep.subr.mxu0 0.0
        %1511 = vmatpush1.msra.mxu0 0.0
        %1512 = vmatprep.subr.mxu0 0.0
        %1513 = vmatpush1.msra.mxu0 0.0
        %1514 = vmatprep.subr.mxu0 0.0
        %1515 = vmatpush1.msra.mxu0 0.0
        %1516 = vmatprep.subr.mxu0 0.0
        %1517 = vmatpush1.msra.mxu0 0.0
        %1518 = vmatprep.subr.mxu0 0.0
        %1519 = vmatpush1.msra.mxu0 0.0
        %1520 = vmatprep.subr.mxu0 0.0
        %1521 = vmatpush1.msra.mxu0 0.0
        %1522 = vmatprep.subr.mxu0 0.0
        %1523 = vmatpush1.msra.mxu0 0.0
        %1524 = vmatprep.subr.mxu0 0.0
        %1525 = vmatpush1.msra.mxu0 0.0
        %1526 = vmatprep.subr.mxu0 0.0
        %1527 = vmatpush1.msra.mxu0 0.0
        %1528 = vmatprep.subr.mxu0 0.0
        %1529 = vmatpush1.msra.mxu0 0.0
        %1530 = vmatprep.subr.mxu0 0.0
        %1531 = vmatpush1.msra.mxu0 0.0
        %1532 = vmatprep.subr.mxu0 0.0
        %1533 = vmatpush1.msra.mxu0 0.0
        %1534 = vmatprep.subr.mxu0 0.0
        %1535 = vmatpush1.msra.mxu0 0.0
        %1536 = vmatprep.subr.mxu0 0.0
        %1537 = vmatpush1.msra.mxu0 0.0
        %1538 = vmatprep.subr.mxu0 0.0
        %1539 = vmatpush1.msra.mxu0 0.0
        %1540 = vmatprep.subr.mxu0 0.0
        %1541 = vmatpush1.msra.mxu0 0.0
        %1542 = vmatprep.subr.mxu0 0.0
        %1543 = vmatpush1.msra.mxu0 0.0
        %1544 = vmatprep.subr.mxu0 0.0
        %1545 = vmatpush1.msra.mxu0 0.0
        %1546 = vmatprep.subr.mxu0 0.0
        %1547 = vmatpush1.msra.mxu0 0.0
        %1548 = vmatprep.mubr.f32.mxu0 0.0
        %1549 = vmatmul.mubr.f32.gmra.mrb[0].mxu0 %v882
        %v1550 = vpop.f32.mrb[0].mxu0
        %v1551 = vadd.f32 %v1467, %v1550
        %v1552 = vpop.f32.mrb[0].mxu0
        %1553 = vdwg.mxu0
        %1554 = vmatprep.subr.mxu0 0.0
        %1555 = vmatpush1.msra.mxu0 %v765
        %1556 = vmatprep.subr.mxu0 0.0
        %1557 = vmatpush1.msra.mxu0 %v766
        %1558 = vmatprep.subr.mxu0 0.0
        %1559 = vmatpush1.msra.mxu0 %v767
        %1560 = vmatprep.subr.mxu0 0.0
        %1561 = vmatpush1.msra.mxu0 %v768
        %1562 = vmatprep.subr.mxu0 0.0
        %1563 = vmatpush1.msra.mxu0 0.0
        %1564 = vmatprep.subr.mxu0 0.0
        %1565 = vmatpush1.msra.mxu0 0.0
        %1566 = vmatprep.subr.mxu0 0.0
        %1567 = vmatpush1.msra.mxu0 0.0
        %1568 = vmatprep.subr.mxu0 0.0
        %1569 = vmatpush1.msra.mxu0 0.0
        %1570 = vmatprep.subr.mxu0 0.0
        %1571 = vmatpush1.msra.mxu0 0.0
        %1572 = vmatprep.subr.mxu0 0.0
        %1573 = vmatpush1.msra.mxu0 0.0
        %1574 = vmatprep.subr.mxu0 0.0
        %1575 = vmatpush1.msra.mxu0 0.0
        %1576 = vmatprep.subr.mxu0 0.0
        %1577 = vmatpush1.msra.mxu0 0.0
        %1578 = vmatprep.subr.mxu0 0.0
        %1579 = vmatpush1.msra.mxu0 0.0
        %1580 = vmatprep.subr.mxu0 0.0
        %1581 = vmatpush1.msra.mxu0 0.0
        %1582 = vmatprep.subr.mxu0 0.0
        %1583 = vmatpush1.msra.mxu0 0.0
        %1584 = vmatprep.subr.mxu0 0.0
        %1585 = vmatpush1.msra.mxu0 0.0
        %1586 = vmatprep.subr.mxu0 0.0
        %1587 = vmatpush1.msra.mxu0 0.0
        %1588 = vmatprep.subr.mxu0 0.0
        %1589 = vmatpush1.msra.mxu0 0.0
        %1590 = vmatprep.subr.mxu0 0.0
        %1591 = vmatpush1.msra.mxu0 0.0
        %1592 = vmatprep.subr.mxu0 0.0
        %1593 = vmatpush1.msra.mxu0 0.0
        %1594 = vmatprep.subr.mxu0 0.0
        %1595 = vmatpush1.msra.mxu0 0.0
        %1596 = vmatprep.subr.mxu0 0.0
        %1597 = vmatpush1.msra.mxu0 0.0
        %1598 = vmatprep.subr.mxu0 0.0
        %1599 = vmatpush1.msra.mxu0 0.0
        %1600 = vmatprep.subr.mxu0 0.0
        %1601 = vmatpush1.msra.mxu0 0.0
        %1602 = vmatprep.subr.mxu0 0.0
        %1603 = vmatpush1.msra.mxu0 0.0
        %1604 = vmatprep.subr.mxu0 0.0
        %1605 = vmatpush1.msra.mxu0 0.0
        %1606 = vmatprep.subr.mxu0 0.0
        %1607 = vmatpush1.msra.mxu0 0.0
        %1608 = vmatprep.subr.mxu0 0.0
        %1609 = vmatpush1.msra.mxu0 0.0
        %1610 = vmatprep.subr.mxu0 0.0
        %1611 = vmatpush1.msra.mxu0 0.0
        %1612 = vmatprep.subr.mxu0 0.0
        %1613 = vmatpush1.msra.mxu0 0.0
        %1614 = vmatprep.subr.mxu0 0.0
        %1615 = vmatpush1.msra.mxu0 0.0
        %1616 = vmatprep.subr.mxu0 0.0
        %1617 = vmatpush1.msra.mxu0 0.0
        %1618 = vmatprep.mubr.f32.mxu0 0.0
        %1619 = vmatmul.mubr.f32.gmra.mrb[0].mxu0 %v882
        %v1620 = vpop.f32.mrb[0].mxu0
        %v1621 = vadd.f32 %v1471, %v1620
        %v1622 = vpop.f32.mrb[0].mxu0
        %1623 = vdwg.mxu0
        %1624 = vmatprep.subr.mxu0 0.0
        %1625 = vmatpush1.msra.mxu0 %v769
        %1626 = vmatprep.subr.mxu0 0.0
        %1627 = vmatpush1.msra.mxu0 %v770
        %1628 = vmatprep.subr.mxu0 0.0
        %1629 = vmatpush1.msra.mxu0 %v771
        %1630 = vmatprep.subr.mxu0 0.0
        %1631 = vmatpush1.msra.mxu0 %v772
        %1632 = vmatprep.subr.mxu0 0.0
        %1633 = vmatpush1.msra.mxu0 0.0
        %1634 = vmatprep.subr.mxu0 0.0
        %1635 = vmatpush1.msra.mxu0 0.0
        %1636 = vmatprep.subr.mxu0 0.0
        %1637 = vmatpush1.msra.mxu0 0.0
        %1638 = vmatprep.subr.mxu0 0.0
        %1639 = vmatpush1.msra.mxu0 0.0
        %1640 = vmatprep.subr.mxu0 0.0
        %1641 = vmatpush1.msra.mxu0 0.0
        %1642 = vmatprep.subr.mxu0 0.0
        %1643 = vmatpush1.msra.mxu0 0.0
        %1644 = vmatprep.subr.mxu0 0.0
        %1645 = vmatpush1.msra.mxu0 0.0
        %1646 = vmatprep.subr.mxu0 0.0
        %1647 = vmatpush1.msra.mxu0 0.0
        %1648 = vmatprep.subr.mxu0 0.0
        %1649 = vmatpush1.msra.mxu0 0.0
        %1650 = vmatprep.subr.mxu0 0.0
        %1651 = vmatpush1.msra.mxu0 0.0
        %1652 = vmatprep.subr.mxu0 0.0
        %1653 = vmatpush1.msra.mxu0 0.0
        %1654 = vmatprep.subr.mxu0 0.0
        %1655 = vmatpush1.msra.mxu0 0.0
        %1656 = vmatprep.subr.mxu0 0.0
        %1657 = vmatpush1.msra.mxu0 0.0
        %1658 = vmatprep.subr.mxu0 0.0
        %1659 = vmatpush1.msra.mxu0 0.0
        %1660 = vmatprep.subr.mxu0 0.0
        %1661 = vmatpush1.msra.mxu0 0.0
        %1662 = vmatprep.subr.mxu0 0.0
        %1663 = vmatpush1.msra.mxu0 0.0
        %1664 = vmatprep.subr.mxu0 0.0
        %1665 = vmatpush1.msra.mxu0 0.0
        %1666 = vmatprep.subr.mxu0 0.0
        %1667 = vmatpush1.msra.mxu0 0.0
        %1668 = vmatprep.subr.mxu0 0.0
        %1669 = vmatpush1.msra.mxu0 0.0
        %1670 = vmatprep.subr.mxu0 0.0
        %1671 = vmatpush1.msra.mxu0 0.0
        %1672 = vmatprep.subr.mxu0 0.0
        %1673 = vmatpush1.msra.mxu0 0.0
        %1674 = vmatprep.subr.mxu0 0.0
        %1675 = vmatpush1.msra.mxu0 0.0
        %1676 = vmatprep.subr.mxu0 0.0
        %1677 = vmatpush1.msra.mxu0 0.0
        %1678 = vmatprep.subr.mxu0 0.0
        %1679 = vmatpush1.msra.mxu0 0.0
        %1680 = vmatprep.subr.mxu0 0.0
        %1681 = vmatpush1.msra.mxu0 0.0
        %1682 = vmatprep.subr.mxu0 0.0
        %1683 = vmatpush1.msra.mxu0 0.0
        %1684 = vmatprep.subr.mxu0 0.0
        %1685 = vmatpush1.msra.mxu0 0.0
        %1686 = vmatprep.subr.mxu0 0.0
        %1687 = vmatpush1.msra.mxu0 0.0
        %1688 = vmatprep.mubr.f32.mxu0 0.0
        %1689 = vmatmul.mubr.f32.gmra.mrb[0].mxu0 %v882
        %v1690 = vpop.f32.mrb[0].mxu0
        %v1691 = vadd.f32 %v1475, %v1690
        %v1692 = vpop.f32.mrb[0].mxu0
        %1693 = vdwg.mxu0
        %1694 = vmatprep.subr.mxu0 0.0
        %1695 = vmatpush1.msra.mxu0 %v773
        %1696 = vmatprep.subr.mxu0 0.0
        %1697 = vmatpush1.msra.mxu0 %v774
        %1698 = vmatprep.subr.mxu0 0.0
        %1699 = vmatpush1.msra.mxu0 %v775
        %1700 = vmatprep.subr.mxu0 0.0
        %1701 = vmatpush1.msra.mxu0 %v776
        %1702 = vmatprep.subr.mxu0 0.0
        %1703 = vmatpush1.msra.mxu0 0.0
        %1704 = vmatprep.subr.mxu0 0.0
        %1705 = vmatpush1.msra.mxu0 0.0
        %1706 = vmatprep.subr.mxu0 0.0
        %1707 = vmatpush1.msra.mxu0 0.0
        %1708 = vmatprep.subr.mxu0 0.0
        %1709 = vmatpush1.msra.mxu0 0.0
        %1710 = vmatprep.subr.mxu0 0.0
        %1711 = vmatpush1.msra.mxu0 0.0
        %1712 = vmatprep.subr.mxu0 0.0
        %1713 = vmatpush1.msra.mxu0 0.0
        %1714 = vmatprep.subr.mxu0 0.0
        %1715 = vmatpush1.msra.mxu0 0.0
        %1716 = vmatprep.subr.mxu0 0.0
        %1717 = vmatpush1.msra.mxu0 0.0
        %1718 = vmatprep.subr.mxu0 0.0
        %1719 = vmatpush1.msra.mxu0 0.0
        %1720 = vmatprep.subr.mxu0 0.0
        %1721 = vmatpush1.msra.mxu0 0.0
        %1722 = vmatprep.subr.mxu0 0.0
        %1723 = vmatpush1.msra.mxu0 0.0
        %1724 = vmatprep.subr.mxu0 0.0
        %1725 = vmatpush1.msra.mxu0 0.0
        %1726 = vmatprep.subr.mxu0 0.0
        %1727 = vmatpush1.msra.mxu0 0.0
        %1728 = vmatprep.subr.mxu0 0.0
        %1729 = vmatpush1.msra.mxu0 0.0
        %1730 = vmatprep.subr.mxu0 0.0
        %1731 = vmatpush1.msra.mxu0 0.0
        %1732 = vmatprep.subr.mxu0 0.0
        %1733 = vmatpush1.msra.mxu0 0.0
        %1734 = vmatprep.subr.mxu0 0.0
        %1735 = vmatpush1.msra.mxu0 0.0
        %1736 = vmatprep.subr.mxu0 0.0
        %1737 = vmatpush1.msra.mxu0 0.0
        %1738 = vmatprep.subr.mxu0 0.0
        %1739 = vmatpush1.msra.mxu0 0.0
        %1740 = vmatprep.subr.mxu0 0.0
        %1741 = vmatpush1.msra.mxu0 0.0
        %1742 = vmatprep.subr.mxu0 0.0
        %1743 = vmatpush1.msra.mxu0 0.0
        %1744 = vmatprep.subr.mxu0 0.0
        %1745 = vmatpush1.msra.mxu0 0.0
        %1746 = vmatprep.subr.mxu0 0.0
        %1747 = vmatpush1.msra.mxu0 0.0
        %1748 = vmatprep.subr.mxu0 0.0
        %1749 = vmatpush1.msra.mxu0 0.0
        %1750 = vmatprep.subr.mxu0 0.0
        %1751 = vmatpush1.msra.mxu0 0.0
        %1752 = vmatprep.subr.mxu0 0.0
        %1753 = vmatpush1.msra.mxu0 0.0
        %1754 = vmatprep.subr.mxu0 0.0
        %1755 = vmatpush1.msra.mxu0 0.0
        %1756 = vmatprep.subr.mxu0 0.0
        %1757 = vmatpush1.msra.mxu0 0.0
        %1758 = vmatprep.mubr.f32.mxu0 0.0
        %1759 = vmatmul.mubr.f32.gmra.mrb[0].mxu0 %v882
        %v1760 = vpop.f32.mrb[0].mxu0
        %v1761 = vadd.f32 %v1479, %v1760
        %v1762 = vpop.f32.mrb[0].mxu0
        %1763 = vdwg.mxu0
        %v1764 = vld [vmem:[%s718] sm:$0xff]
        %v1765 = vld [vmem:[%s718 + $0x8] sm:$0xff]
        %v1766 = vld [vmem:[%s718 + $0x10] sm:$0xff]
        %v1767 = vld [vmem:[%s718 + $0x18] sm:$0xff]
        %v1768 = vld [vmem:[%s718 + $0x20] sm:$0xff]
        %v1769 = vld [vmem:[%s718 + $0x28] sm:$0xff]
        %v1770 = vld [vmem:[%s718 + $0x30] sm:$0xff]
        %v1771 = vld [vmem:[%s718 + $0x38] sm:$0xff]
        %v1772 = vld [vmem:[%s723] sm:$0xff]
        %v1773 = vld [vmem:[%s723 + $0x8] sm:$0xff]
        %v1774 = vld [vmem:[%s723 + $0x10] sm:$0xff]
        %v1775 = vld [vmem:[%s723 + $0x18] sm:$0xff]
        %v1776 = vld [vmem:[%s723 + $0x20] sm:$0xff]
        %v1777 = vld [vmem:[%s723 + $0x28] sm:$0xff]
        %v1778 = vld [vmem:[%s723 + $0x30] sm:$0xff]
        %v1779 = vld [vmem:[%s723 + $0x38] sm:$0xff]
        %v1780 = vld [vmem:[%s728] sm:$0xff]
        %v1781 = vld [vmem:[%s728 + $0x8] sm:$0xff]
        %v1782 = vld [vmem:[%s728 + $0x10] sm:$0xff]
        %v1783 = vld [vmem:[%s728 + $0x18] sm:$0xff]
        %v1784 = vld [vmem:[%s728 + $0x20] sm:$0xff]
        %v1785 = vld [vmem:[%s728 + $0x28] sm:$0xff]
        %v1786 = vld [vmem:[%s728 + $0x30] sm:$0xff]
        %v1787 = vld [vmem:[%s728 + $0x38] sm:$0xff]
        %v1792 = vrot.slane %v951, 1
        %v1793 = vrot.slane %v1021, 1
        %v1794 = vrot.slane %v1091, 1
        %v1795 = vrot.slane %v1161, 1
        %v1796 = vrot.slane %v951, 2
        %v1797 = vrot.slane %v1021, 2
        %v1798 = vrot.slane %v1091, 2
        %v1799 = vrot.slane %v1161, 2
        %v1800 = vrot.slane %v951, 3
        %v1801 = vrot.slane %v1021, 3
        %v1802 = vrot.slane %v1091, 3
        %v1803 = vrot.slane %v1161, 3
        %v1804 = vrot.slane %v951, 4
        %v1805 = vrot.slane %v1021, 4
        %v1806 = vrot.slane %v1091, 4
        %v1807 = vrot.slane %v1161, 4
        %v1808 = vrot.slane %v951, 5
        %v1809 = vrot.slane %v1021, 5
        %v1810 = vrot.slane %v1091, 5
        %v1811 = vrot.slane %v1161, 5
        %v1812 = vrot.slane %v951, 6
        %v1813 = vrot.slane %v1021, 6
        %v1814 = vrot.slane %v1091, 6
        %v1815 = vrot.slane %v1161, 6
        %v1816 = vrot.slane %v951, 7
        %v1817 = vrot.slane %v1021, 7
        %v1818 = vrot.slane %v1091, 7
        %v1819 = vrot.slane %v1161, 7
        %vm1820 = vcmask 1041409
        %v1821 = vsel %vm1820, %v1817, %v951
        %vm1822 = vcmask 1042434
        %v1823 = vsel %vm1822, %v1814, %v1821
        %vm1824 = vcmask 1043459
        %v1825 = vsel %vm1824, %v1811, %v1823
        %vm1826 = vcmask 64512
        %v1827 = vsel %vm1826, %v1825, 0
        %v1830 = vsel %vm1826, %v1764, 0
        %1832 = vmatprep.subr.mxu0 0.0
        %1833 = vmatpush1.xpose.msra.mxu0 %v1830
        %1834 = vmatprep.subr.mxu0 0.0
        %1835 = vmatpush1.xpose.msra.mxu0 0.0
        %1836 = vmatprep.subr.mxu0 0.0
        %1837 = vmatpush1.xpose.msra.mxu0 0.0
        %1838 = vmatprep.subr.mxu0 0.0
        %1839 = vmatpush1.xpose.msra.mxu0 0.0
        %1840 = vmatprep.subr.mxu0 0.0
        %1841 = vmatpush1.xpose.msra.mxu0 0.0
        %1842 = vmatprep.subr.mxu0 0.0
        %1843 = vmatpush1.xpose.msra.mxu0 0.0
        %1844 = vmatprep.subr.mxu0 0.0
        %1845 = vmatpush1.xpose.msra.mxu0 0.0
        %1846 = vmatprep.subr.mxu0 0.0
        %1847 = vmatpush1.xpose.msra.mxu0 0.0
        %1848 = vmatprep.subr.mxu0 0.0
        %1849 = vmatpush1.xpose.msra.mxu0 0.0
        %1850 = vmatprep.subr.mxu0 0.0
        %1851 = vmatpush1.xpose.msra.mxu0 0.0
        %1852 = vmatprep.subr.mxu0 0.0
        %1853 = vmatpush1.xpose.msra.mxu0 0.0
        %1854 = vmatprep.subr.mxu0 0.0
        %1855 = vmatpush1.xpose.msra.mxu0 0.0
        %1856 = vmatprep.subr.mxu0 0.0
        %1857 = vmatpush1.xpose.msra.mxu0 0.0
        %1858 = vmatprep.subr.mxu0 0.0
        %1859 = vmatpush1.xpose.msra.mxu0 0.0
        %1860 = vmatprep.subr.mxu0 0.0
        %1861 = vmatpush1.xpose.msra.mxu0 0.0
        %1862 = vmatprep.subr.mxu0 0.0
        %1863 = vmatpush1.xpose.msra.mxu0 0.0
        %1864 = vmatprep.subr.mxu0 0.0
        %1865 = vmatpush1.xpose.msra.mxu0 0.0
        %1866 = vmatprep.subr.mxu0 0.0
        %1867 = vmatpush1.xpose.msra.mxu0 0.0
        %1868 = vmatprep.subr.mxu0 0.0
        %1869 = vmatpush1.xpose.msra.mxu0 0.0
        %1870 = vmatprep.subr.mxu0 0.0
        %1871 = vmatpush1.xpose.msra.mxu0 0.0
        %1872 = vmatprep.subr.mxu0 0.0
        %1873 = vmatpush1.xpose.msra.mxu0 0.0
        %1874 = vmatprep.subr.mxu0 0.0
        %1875 = vmatpush1.xpose.msra.mxu0 0.0
        %1876 = vmatprep.subr.mxu0 0.0
        %1877 = vmatpush1.xpose.msra.mxu0 0.0
        %1878 = vmatprep.subr.mxu0 0.0
        %1879 = vmatpush1.xpose.msra.mxu0 0.0
        %1880 = vmatprep.subr.mxu0 0.0
        %1881 = vmatpush1.xpose.msra.mxu0 0.0
        %1882 = vmatprep.subr.mxu0 0.0
        %1883 = vmatpush1.xpose.msra.mxu0 0.0
        %1884 = vmatprep.subr.mxu0 0.0
        %1885 = vmatpush1.xpose.msra.mxu0 0.0
        %1886 = vmatprep.subr.mxu0 0.0
        %1887 = vmatpush1.xpose.msra.mxu0 0.0
        %1888 = vmatprep.subr.mxu0 0.0
        %1889 = vmatpush1.xpose.msra.mxu0 0.0
        %1890 = vmatprep.subr.mxu0 0.0
        %1891 = vmatpush1.xpose.msra.mxu0 0.0
        %1892 = vmatprep.subr.mxu0 0.0
        %1893 = vmatpush1.xpose.msra.mxu0 0.0
        %1894 = vmatprep.subr.mxu0 0.0
        %1895 = vmatpush1.xpose.msra.mxu0 0.0
        %1896 = vmatprep.mubr.f32.mxu0 0.0
        %1897 = vmatmul.mubr.f32.gmra.mrb[0].mxu0 %v1827
        %v1898 = vpop.f32.mrb[0].mxu0
        %v1899 = vadd.f32 0.0, %v1898
        %v1900 = vpop.f32.mrb[0].mxu0
        %1901 = vdwg.mxu0
        %v1902 = vrot.slane %v1793, 7
        %v1903 = vsel %vm1820, %v1902, %v1792
        %v1904 = vrot.slane %v1794, 6
        %v1905 = vsel %vm1822, %v1904, %v1903
        %v1906 = vrot.slane %v1795, 5
        %v1907 = vsel %vm1824, %v1906, %v1905
        %v1908 = vsel %vm1826, %v1907, 0
        %v1911 = vsel %vm1826, %v1765, 0
        %1913 = vmatprep.subr.mxu0 0.0
        %1914 = vmatpush1.xpose.msra.mxu0 %v1911
        %1915 = vmatprep.subr.mxu0 0.0
        %1916 = vmatpush1.xpose.msra.mxu0 0.0
        %1917 = vmatprep.subr.mxu0 0.0
        %1918 = vmatpush1.xpose.msra.mxu0 0.0
        %1919 = vmatprep.subr.mxu0 0.0
        %1920 = vmatpush1.xpose.msra.mxu0 0.0
        %1921 = vmatprep.subr.mxu0 0.0
        %1922 = vmatpush1.xpose.msra.mxu0 0.0
        %1923 = vmatprep.subr.mxu0 0.0
        %1924 = vmatpush1.xpose.msra.mxu0 0.0
        %1925 = vmatprep.subr.mxu0 0.0
        %1926 = vmatpush1.xpose.msra.mxu0 0.0
        %1927 = vmatprep.subr.mxu0 0.0
        %1928 = vmatpush1.xpose.msra.mxu0 0.0
        %1929 = vmatprep.subr.mxu0 0.0
        %1930 = vmatpush1.xpose.msra.mxu0 0.0
        %1931 = vmatprep.subr.mxu0 0.0
        %1932 = vmatpush1.xpose.msra.mxu0 0.0
        %1933 = vmatprep.subr.mxu0 0.0
        %1934 = vmatpush1.xpose.msra.mxu0 0.0
        %1935 = vmatprep.subr.mxu0 0.0
        %1936 = vmatpush1.xpose.msra.mxu0 0.0
        %1937 = vmatprep.subr.mxu0 0.0
        %1938 = vmatpush1.xpose.msra.mxu0 0.0
        %1939 = vmatprep.subr.mxu0 0.0
        %1940 = vmatpush1.xpose.msra.mxu0 0.0
        %1941 = vmatprep.subr.mxu0 0.0
        %1942 = vmatpush1.xpose.msra.mxu0 0.0
        %1943 = vmatprep.subr.mxu0 0.0
        %1944 = vmatpush1.xpose.msra.mxu0 0.0
        %1945 = vmatprep.subr.mxu0 0.0
        %1946 = vmatpush1.xpose.msra.mxu0 0.0
        %1947 = vmatprep.subr.mxu0 0.0
        %1948 = vmatpush1.xpose.msra.mxu0 0.0
        %1949 = vmatprep.subr.mxu0 0.0
        %1950 = vmatpush1.xpose.msra.mxu0 0.0
        %1951 = vmatprep.subr.mxu0 0.0
        %1952 = vmatpush1.xpose.msra.mxu0 0.0
        %1953 = vmatprep.subr.mxu0 0.0
        %1954 = vmatpush1.xpose.msra.mxu0 0.0
        %1955 = vmatprep.subr.mxu0 0.0
        %1956 = vmatpush1.xpose.msra.mxu0 0.0
        %1957 = vmatprep.subr.mxu0 0.0
        %1958 = vmatpush1.xpose.msra.mxu0 0.0
        %1959 = vmatprep.subr.mxu0 0.0
        %1960 = vmatpush1.xpose.msra.mxu0 0.0
        %1961 = vmatprep.subr.mxu0 0.0
        %1962 = vmatpush1.xpose.msra.mxu0 0.0
        %1963 = vmatprep.subr.mxu0 0.0
        %1964 = vmatpush1.xpose.msra.mxu0 0.0
        %1965 = vmatprep.subr.mxu0 0.0
        %1966 = vmatpush1.xpose.msra.mxu0 0.0
        %1967 = vmatprep.subr.mxu0 0.0
        %1968 = vmatpush1.xpose.msra.mxu0 0.0
        %1969 = vmatprep.subr.mxu0 0.0
        %1970 = vmatpush1.xpose.msra.mxu0 0.0
        %1971 = vmatprep.subr.mxu0 0.0
        %1972 = vmatpush1.xpose.msra.mxu0 0.0
        %1973 = vmatprep.subr.mxu0 0.0
        %1974 = vmatpush1.xpose.msra.mxu0 0.0
        %1975 = vmatprep.subr.mxu0 0.0
        %1976 = vmatpush1.xpose.msra.mxu0 0.0
        %1977 = vmatprep.mubr.f32.mxu0 0.0
        %1978 = vmatmul.mubr.f32.gmra.mrb[0].mxu0 %v1908
        %v1979 = vpop.f32.mrb[0].mxu0
        %v1980 = vadd.f32 0.0, %v1979
        %v1981 = vpop.f32.mrb[0].mxu0
        %1982 = vdwg.mxu0
        %v1983 = vrot.slane %v1797, 7
        %v1984 = vsel %vm1820, %v1983, %v1796
        %v1985 = vrot.slane %v1798, 6
        %v1986 = vsel %vm1822, %v1985, %v1984
        %v1987 = vrot.slane %v1799, 5
        %v1988 = vsel %vm1824, %v1987, %v1986
        %v1989 = vsel %vm1826, %v1988, 0
        %v1992 = vsel %vm1826, %v1766, 0
        %1994 = vmatprep.subr.mxu0 0.0
        %1995 = vmatpush1.xpose.msra.mxu0 %v1992
        %1996 = vmatprep.subr.mxu0 0.0
        %1997 = vmatpush1.xpose.msra.mxu0 0.0
        %1998 = vmatprep.subr.mxu0 0.0
        %1999 = vmatpush1.xpose.msra.mxu0 0.0
        %2000 = vmatprep.subr.mxu0 0.0
        %2001 = vmatpush1.xpose.msra.mxu0 0.0
        %2002 = vmatprep.subr.mxu0 0.0
        %2003 = vmatpush1.xpose.msra.mxu0 0.0
        %2004 = vmatprep.subr.mxu0 0.0
        %2005 = vmatpush1.xpose.msra.mxu0 0.0
        %2006 = vmatprep.subr.mxu0 0.0
        %2007 = vmatpush1.xpose.msra.mxu0 0.0
        %2008 = vmatprep.subr.mxu0 0.0
        %2009 = vmatpush1.xpose.msra.mxu0 0.0
        %2010 = vmatprep.subr.mxu0 0.0
        %2011 = vmatpush1.xpose.msra.mxu0 0.0
        %2012 = vmatprep.subr.mxu0 0.0
        %2013 = vmatpush1.xpose.msra.mxu0 0.0
        %2014 = vmatprep.subr.mxu0 0.0
        %2015 = vmatpush1.xpose.msra.mxu0 0.0
        %2016 = vmatprep.subr.mxu0 0.0
        %2017 = vmatpush1.xpose.msra.mxu0 0.0
        %2018 = vmatprep.subr.mxu0 0.0
        %2019 = vmatpush1.xpose.msra.mxu0 0.0
        %2020 = vmatprep.subr.mxu0 0.0
        %2021 = vmatpush1.xpose.msra.mxu0 0.0
        %2022 = vmatprep.subr.mxu0 0.0
        %2023 = vmatpush1.xpose.msra.mxu0 0.0
        %2024 = vmatprep.subr.mxu0 0.0
        %2025 = vmatpush1.xpose.msra.mxu0 0.0
        %2026 = vmatprep.subr.mxu0 0.0
        %2027 = vmatpush1.xpose.msra.mxu0 0.0
        %2028 = vmatprep.subr.mxu0 0.0
        %2029 = vmatpush1.xpose.msra.mxu0 0.0
        %2030 = vmatprep.subr.mxu0 0.0
        %2031 = vmatpush1.xpose.msra.mxu0 0.0
        %2032 = vmatprep.subr.mxu0 0.0
        %2033 = vmatpush1.xpose.msra.mxu0 0.0
        %2034 = vmatprep.subr.mxu0 0.0
        %2035 = vmatpush1.xpose.msra.mxu0 0.0
        %2036 = vmatprep.subr.mxu0 0.0
        %2037 = vmatpush1.xpose.msra.mxu0 0.0
        %2038 = vmatprep.subr.mxu0 0.0
        %2039 = vmatpush1.xpose.msra.mxu0 0.0
        %2040 = vmatprep.subr.mxu0 0.0
        %2041 = vmatpush1.xpose.msra.mxu0 0.0
        %2042 = vmatprep.subr.mxu0 0.0
        %2043 = vmatpush1.xpose.msra.mxu0 0.0
        %2044 = vmatprep.subr.mxu0 0.0
        %2045 = vmatpush1.xpose.msra.mxu0 0.0
        %2046 = vmatprep.subr.mxu0 0.0
        %2047 = vmatpush1.xpose.msra.mxu0 0.0
        %2048 = vmatprep.subr.mxu0 0.0
        %2049 = vmatpush1.xpose.msra.mxu0 0.0
        %2050 = vmatprep.subr.mxu0 0.0
        %2051 = vmatpush1.xpose.msra.mxu0 0.0
        %2052 = vmatprep.subr.mxu0 0.0
        %2053 = vmatpush1.xpose.msra.mxu0 0.0
        %2054 = vmatprep.subr.mxu0 0.0
        %2055 = vmatpush1.xpose.msra.mxu0 0.0
        %2056 = vmatprep.subr.mxu0 0.0
        %2057 = vmatpush1.xpose.msra.mxu0 0.0
        %2058 = vmatprep.mubr.f32.mxu0 0.0
        %2059 = vmatmul.mubr.f32.gmra.mrb[0].mxu0 %v1989
        %v2060 = vpop.f32.mrb[0].mxu0
        %v2061 = vadd.f32 0.0, %v2060
        %v2062 = vpop.f32.mrb[0].mxu0
        %2063 = vdwg.mxu0
        %v2064 = vrot.slane %v1801, 7
        %v2065 = vsel %vm1820, %v2064, %v1800
        %v2066 = vrot.slane %v1802, 6
        %v2067 = vsel %vm1822, %v2066, %v2065
        %v2068 = vrot.slane %v1803, 5
        %v2069 = vsel %vm1824, %v2068, %v2067
        %v2070 = vsel %vm1826, %v2069, 0
        %v2073 = vsel %vm1826, %v1767, 0
        %2075 = vmatprep.subr.mxu0 0.0
        %2076 = vmatpush1.xpose.msra.mxu0 %v2073
        %2077 = vmatprep.subr.mxu0 0.0
        %2078 = vmatpush1.xpose.msra.mxu0 0.0
        %2079 = vmatprep.subr.mxu0 0.0
        %2080 = vmatpush1.xpose.msra.mxu0 0.0
        %2081 = vmatprep.subr.mxu0 0.0
        %2082 = vmatpush1.xpose.msra.mxu0 0.0
        %2083 = vmatprep.subr.mxu0 0.0
        %2084 = vmatpush1.xpose.msra.mxu0 0.0
        %2085 = vmatprep.subr.mxu0 0.0
        %2086 = vmatpush1.xpose.msra.mxu0 0.0
        %2087 = vmatprep.subr.mxu0 0.0
        %2088 = vmatpush1.xpose.msra.mxu0 0.0
        %2089 = vmatprep.subr.mxu0 0.0
        %2090 = vmatpush1.xpose.msra.mxu0 0.0
        %2091 = vmatprep.subr.mxu0 0.0
        %2092 = vmatpush1.xpose.msra.mxu0 0.0
        %2093 = vmatprep.subr.mxu0 0.0
        %2094 = vmatpush1.xpose.msra.mxu0 0.0
        %2095 = vmatprep.subr.mxu0 0.0
        %2096 = vmatpush1.xpose.msra.mxu0 0.0
        %2097 = vmatprep.subr.mxu0 0.0
        %2098 = vmatpush1.xpose.msra.mxu0 0.0
        %2099 = vmatprep.subr.mxu0 0.0
        %2100 = vmatpush1.xpose.msra.mxu0 0.0
        %2101 = vmatprep.subr.mxu0 0.0
        %2102 = vmatpush1.xpose.msra.mxu0 0.0
        %2103 = vmatprep.subr.mxu0 0.0
        %2104 = vmatpush1.xpose.msra.mxu0 0.0
        %2105 = vmatprep.subr.mxu0 0.0
        %2106 = vmatpush1.xpose.msra.mxu0 0.0
        %2107 = vmatprep.subr.mxu0 0.0
        %2108 = vmatpush1.xpose.msra.mxu0 0.0
        %2109 = vmatprep.subr.mxu0 0.0
        %2110 = vmatpush1.xpose.msra.mxu0 0.0
        %2111 = vmatprep.subr.mxu0 0.0
        %2112 = vmatpush1.xpose.msra.mxu0 0.0
        %2113 = vmatprep.subr.mxu0 0.0
        %2114 = vmatpush1.xpose.msra.mxu0 0.0
        %2115 = vmatprep.subr.mxu0 0.0
        %2116 = vmatpush1.xpose.msra.mxu0 0.0
        %2117 = vmatprep.subr.mxu0 0.0
        %2118 = vmatpush1.xpose.msra.mxu0 0.0
        %2119 = vmatprep.subr.mxu0 0.0
        %2120 = vmatpush1.xpose.msra.mxu0 0.0
        %2121 = vmatprep.subr.mxu0 0.0
        %2122 = vmatpush1.xpose.msra.mxu0 0.0
        %2123 = vmatprep.subr.mxu0 0.0
        %2124 = vmatpush1.xpose.msra.mxu0 0.0
        %2125 = vmatprep.subr.mxu0 0.0
        %2126 = vmatpush1.xpose.msra.mxu0 0.0
        %2127 = vmatprep.subr.mxu0 0.0
        %2128 = vmatpush1.xpose.msra.mxu0 0.0
        %2129 = vmatprep.subr.mxu0 0.0
        %2130 = vmatpush1.xpose.msra.mxu0 0.0
        %2131 = vmatprep.subr.mxu0 0.0
        %2132 = vmatpush1.xpose.msra.mxu0 0.0
        %2133 = vmatprep.subr.mxu0 0.0
        %2134 = vmatpush1.xpose.msra.mxu0 0.0
        %2135 = vmatprep.subr.mxu0 0.0
        %2136 = vmatpush1.xpose.msra.mxu0 0.0
        %2137 = vmatprep.subr.mxu0 0.0
        %2138 = vmatpush1.xpose.msra.mxu0 0.0
        %2139 = vmatprep.mubr.f32.mxu0 0.0
        %2140 = vmatmul.mubr.f32.gmra.mrb[0].mxu0 %v2070
        %v2141 = vpop.f32.mrb[0].mxu0
        %v2142 = vadd.f32 0.0, %v2141
        %v2143 = vpop.f32.mrb[0].mxu0
        %2144 = vdwg.mxu0
        %v2145 = vrot.slane %v1805, 7
        %v2146 = vsel %vm1820, %v2145, %v1804
        %v2147 = vrot.slane %v1806, 6
        %v2148 = vsel %vm1822, %v2147, %v2146
        %v2149 = vrot.slane %v1807, 5
        %v2150 = vsel %vm1824, %v2149, %v2148
        %v2151 = vsel %vm1826, %v2150, 0
        %v2154 = vsel %vm1826, %v1768, 0
        %2156 = vmatprep.subr.mxu0 0.0
        %2157 = vmatpush1.xpose.msra.mxu0 %v2154
        %2158 = vmatprep.subr.mxu0 0.0
        %2159 = vmatpush1.xpose.msra.mxu0 0.0
        %2160 = vmatprep.subr.mxu0 0.0
        %2161 = vmatpush1.xpose.msra.mxu0 0.0
        %2162 = vmatprep.subr.mxu0 0.0
        %2163 = vmatpush1.xpose.msra.mxu0 0.0
        %2164 = vmatprep.subr.mxu0 0.0
        %2165 = vmatpush1.xpose.msra.mxu0 0.0
        %2166 = vmatprep.subr.mxu0 0.0
        %2167 = vmatpush1.xpose.msra.mxu0 0.0
        %2168 = vmatprep.subr.mxu0 0.0
        %2169 = vmatpush1.xpose.msra.mxu0 0.0
        %2170 = vmatprep.subr.mxu0 0.0
        %2171 = vmatpush1.xpose.msra.mxu0 0.0
        %2172 = vmatprep.subr.mxu0 0.0
        %2173 = vmatpush1.xpose.msra.mxu0 0.0
        %2174 = vmatprep.subr.mxu0 0.0
        %2175 = vmatpush1.xpose.msra.mxu0 0.0
        %2176 = vmatprep.subr.mxu0 0.0
        %2177 = vmatpush1.xpose.msra.mxu0 0.0
        %2178 = vmatprep.subr.mxu0 0.0
        %2179 = vmatpush1.xpose.msra.mxu0 0.0
        %2180 = vmatprep.subr.mxu0 0.0
        %2181 = vmatpush1.xpose.msra.mxu0 0.0
        %2182 = vmatprep.subr.mxu0 0.0
        %2183 = vmatpush1.xpose.msra.mxu0 0.0
        %2184 = vmatprep.subr.mxu0 0.0
        %2185 = vmatpush1.xpose.msra.mxu0 0.0
        %2186 = vmatprep.subr.mxu0 0.0
        %2187 = vmatpush1.xpose.msra.mxu0 0.0
        %2188 = vmatprep.subr.mxu0 0.0
        %2189 = vmatpush1.xpose.msra.mxu0 0.0
        %2190 = vmatprep.subr.mxu0 0.0
        %2191 = vmatpush1.xpose.msra.mxu0 0.0
        %2192 = vmatprep.subr.mxu0 0.0
        %2193 = vmatpush1.xpose.msra.mxu0 0.0
        %2194 = vmatprep.subr.mxu0 0.0
        %2195 = vmatpush1.xpose.msra.mxu0 0.0
        %2196 = vmatprep.subr.mxu0 0.0
        %2197 = vmatpush1.xpose.msra.mxu0 0.0
        %2198 = vmatprep.subr.mxu0 0.0
        %2199 = vmatpush1.xpose.msra.mxu0 0.0
        %2200 = vmatprep.subr.mxu0 0.0
        %2201 = vmatpush1.xpose.msra.mxu0 0.0
        %2202 = vmatprep.subr.mxu0 0.0
        %2203 = vmatpush1.xpose.msra.mxu0 0.0
        %2204 = vmatprep.subr.mxu0 0.0
        %2205 = vmatpush1.xpose.msra.mxu0 0.0
        %2206 = vmatprep.subr.mxu0 0.0
        %2207 = vmatpush1.xpose.msra.mxu0 0.0
        %2208 = vmatprep.subr.mxu0 0.0
        %2209 = vmatpush1.xpose.msra.mxu0 0.0
        %2210 = vmatprep.subr.mxu0 0.0
        %2211 = vmatpush1.xpose.msra.mxu0 0.0
        %2212 = vmatprep.subr.mxu0 0.0
        %2213 = vmatpush1.xpose.msra.mxu0 0.0
        %2214 = vmatprep.subr.mxu0 0.0
        %2215 = vmatpush1.xpose.msra.mxu0 0.0
        %2216 = vmatprep.subr.mxu0 0.0
        %2217 = vmatpush1.xpose.msra.mxu0 0.0
        %2218 = vmatprep.subr.mxu0 0.0
        %2219 = vmatpush1.xpose.msra.mxu0 0.0
        %2220 = vmatprep.mubr.f32.mxu0 0.0
        %2221 = vmatmul.mubr.f32.gmra.mrb[0].mxu0 %v2151
        %v2222 = vpop.f32.mrb[0].mxu0
        %v2223 = vadd.f32 0.0, %v2222
        %v2224 = vpop.f32.mrb[0].mxu0
        %2225 = vdwg.mxu0
        %v2226 = vrot.slane %v1809, 7
        %v2227 = vsel %vm1820, %v2226, %v1808
        %v2228 = vrot.slane %v1810, 6
        %v2229 = vsel %vm1822, %v2228, %v2227
        %v2230 = vrot.slane %v1811, 5
        %v2231 = vsel %vm1824, %v2230, %v2229
        %v2232 = vsel %vm1826, %v2231, 0
        %v2235 = vsel %vm1826, %v1769, 0
        %2237 = vmatprep.subr.mxu0 0.0
        %2238 = vmatpush1.xpose.msra.mxu0 %v2235
        %2239 = vmatprep.subr.mxu0 0.0
        %2240 = vmatpush1.xpose.msra.mxu0 0.0
        %2241 = vmatprep.subr.mxu0 0.0
        %2242 = vmatpush1.xpose.msra.mxu0 0.0
        %2243 = vmatprep.subr.mxu0 0.0
        %2244 = vmatpush1.xpose.msra.mxu0 0.0
        %2245 = vmatprep.subr.mxu0 0.0
        %2246 = vmatpush1.xpose.msra.mxu0 0.0
        %2247 = vmatprep.subr.mxu0 0.0
        %2248 = vmatpush1.xpose.msra.mxu0 0.0
        %2249 = vmatprep.subr.mxu0 0.0
        %2250 = vmatpush1.xpose.msra.mxu0 0.0
        %2251 = vmatprep.subr.mxu0 0.0
        %2252 = vmatpush1.xpose.msra.mxu0 0.0
        %2253 = vmatprep.subr.mxu0 0.0
        %2254 = vmatpush1.xpose.msra.mxu0 0.0
        %2255 = vmatprep.subr.mxu0 0.0
        %2256 = vmatpush1.xpose.msra.mxu0 0.0
        %2257 = vmatprep.subr.mxu0 0.0
        %2258 = vmatpush1.xpose.msra.mxu0 0.0
        %2259 = vmatprep.subr.mxu0 0.0
        %2260 = vmatpush1.xpose.msra.mxu0 0.0
        %2261 = vmatprep.subr.mxu0 0.0
        %2262 = vmatpush1.xpose.msra.mxu0 0.0
        %2263 = vmatprep.subr.mxu0 0.0
        %2264 = vmatpush1.xpose.msra.mxu0 0.0
        %2265 = vmatprep.subr.mxu0 0.0
        %2266 = vmatpush1.xpose.msra.mxu0 0.0
        %2267 = vmatprep.subr.mxu0 0.0
        %2268 = vmatpush1.xpose.msra.mxu0 0.0
        %2269 = vmatprep.subr.mxu0 0.0
        %2270 = vmatpush1.xpose.msra.mxu0 0.0
        %2271 = vmatprep.subr.mxu0 0.0
        %2272 = vmatpush1.xpose.msra.mxu0 0.0
        %2273 = vmatprep.subr.mxu0 0.0
        %2274 = vmatpush1.xpose.msra.mxu0 0.0
        %2275 = vmatprep.subr.mxu0 0.0
        %2276 = vmatpush1.xpose.msra.mxu0 0.0
        %2277 = vmatprep.subr.mxu0 0.0
        %2278 = vmatpush1.xpose.msra.mxu0 0.0
        %2279 = vmatprep.subr.mxu0 0.0
        %2280 = vmatpush1.xpose.msra.mxu0 0.0
        %2281 = vmatprep.subr.mxu0 0.0
        %2282 = vmatpush1.xpose.msra.mxu0 0.0
        %2283 = vmatprep.subr.mxu0 0.0
        %2284 = vmatpush1.xpose.msra.mxu0 0.0
        %2285 = vmatprep.subr.mxu0 0.0
        %2286 = vmatpush1.xpose.msra.mxu0 0.0
        %2287 = vmatprep.subr.mxu0 0.0
        %2288 = vmatpush1.xpose.msra.mxu0 0.0
        %2289 = vmatprep.subr.mxu0 0.0
        %2290 = vmatpush1.xpose.msra.mxu0 0.0
        %2291 = vmatprep.subr.mxu0 0.0
        %2292 = vmatpush1.xpose.msra.mxu0 0.0
        %2293 = vmatprep.subr.mxu0 0.0
        %2294 = vmatpush1.xpose.msra.mxu0 0.0
        %2295 = vmatprep.subr.mxu0 0.0
        %2296 = vmatpush1.xpose.msra.mxu0 0.0
        %2297 = vmatprep.subr.mxu0 0.0
        %2298 = vmatpush1.xpose.msra.mxu0 0.0
        %2299 = vmatprep.subr.mxu0 0.0
        %2300 = vmatpush1.xpose.msra.mxu0 0.0
        %2301 = vmatprep.mubr.f32.mxu0 0.0
        %2302 = vmatmul.mubr.f32.gmra.mrb[0].mxu0 %v2232
        %v2303 = vpop.f32.mrb[0].mxu0
        %v2304 = vadd.f32 0.0, %v2303
        %v2305 = vpop.f32.mrb[0].mxu0
        %2306 = vdwg.mxu0
        %v2307 = vrot.slane %v1813, 7
        %v2308 = vsel %vm1820, %v2307, %v1812
        %v2309 = vrot.slane %v1814, 6
        %v2310 = vsel %vm1822, %v2309, %v2308
        %v2311 = vrot.slane %v1815, 5
        %v2312 = vsel %vm1824, %v2311, %v2310
        %v2313 = vsel %vm1826, %v2312, 0
        %v2316 = vsel %vm1826, %v1770, 0
        %2318 = vmatprep.subr.mxu0 0.0
        %2319 = vmatpush1.xpose.msra.mxu0 %v2316
        %2320 = vmatprep.subr.mxu0 0.0
        %2321 = vmatpush1.xpose.msra.mxu0 0.0
        %2322 = vmatprep.subr.mxu0 0.0
        %2323 = vmatpush1.xpose.msra.mxu0 0.0
        %2324 = vmatprep.subr.mxu0 0.0
        %2325 = vmatpush1.xpose.msra.mxu0 0.0
        %2326 = vmatprep.subr.mxu0 0.0
        %2327 = vmatpush1.xpose.msra.mxu0 0.0
        %2328 = vmatprep.subr.mxu0 0.0
        %2329 = vmatpush1.xpose.msra.mxu0 0.0
        %2330 = vmatprep.subr.mxu0 0.0
        %2331 = vmatpush1.xpose.msra.mxu0 0.0
        %2332 = vmatprep.subr.mxu0 0.0
        %2333 = vmatpush1.xpose.msra.mxu0 0.0
        %2334 = vmatprep.subr.mxu0 0.0
        %2335 = vmatpush1.xpose.msra.mxu0 0.0
        %2336 = vmatprep.subr.mxu0 0.0
        %2337 = vmatpush1.xpose.msra.mxu0 0.0
        %2338 = vmatprep.subr.mxu0 0.0
        %2339 = vmatpush1.xpose.msra.mxu0 0.0
        %2340 = vmatprep.subr.mxu0 0.0
        %2341 = vmatpush1.xpose.msra.mxu0 0.0
        %2342 = vmatprep.subr.mxu0 0.0
        %2343 = vmatpush1.xpose.msra.mxu0 0.0
        %2344 = vmatprep.subr.mxu0 0.0
        %2345 = vmatpush1.xpose.msra.mxu0 0.0
        %2346 = vmatprep.subr.mxu0 0.0
        %2347 = vmatpush1.xpose.msra.mxu0 0.0
        %2348 = vmatprep.subr.mxu0 0.0
        %2349 = vmatpush1.xpose.msra.mxu0 0.0
        %2350 = vmatprep.subr.mxu0 0.0
        %2351 = vmatpush1.xpose.msra.mxu0 0.0
        %2352 = vmatprep.subr.mxu0 0.0
        %2353 = vmatpush1.xpose.msra.mxu0 0.0
        %2354 = vmatprep.subr.mxu0 0.0
        %2355 = vmatpush1.xpose.msra.mxu0 0.0
        %2356 = vmatprep.subr.mxu0 0.0
        %2357 = vmatpush1.xpose.msra.mxu0 0.0
        %2358 = vmatprep.subr.mxu0 0.0
        %2359 = vmatpush1.xpose.msra.mxu0 0.0
        %2360 = vmatprep.subr.mxu0 0.0
        %2361 = vmatpush1.xpose.msra.mxu0 0.0
        %2362 = vmatprep.subr.mxu0 0.0
        %2363 = vmatpush1.xpose.msra.mxu0 0.0
        %2364 = vmatprep.subr.mxu0 0.0
        %2365 = vmatpush1.xpose.msra.mxu0 0.0
        %2366 = vmatprep.subr.mxu0 0.0
        %2367 = vmatpush1.xpose.msra.mxu0 0.0
        %2368 = vmatprep.subr.mxu0 0.0
        %2369 = vmatpush1.xpose.msra.mxu0 0.0
        %2370 = vmatprep.subr.mxu0 0.0
        %2371 = vmatpush1.xpose.msra.mxu0 0.0
        %2372 = vmatprep.subr.mxu0 0.0
        %2373 = vmatpush1.xpose.msra.mxu0 0.0
        %2374 = vmatprep.subr.mxu0 0.0
        %2375 = vmatpush1.xpose.msra.mxu0 0.0
        %2376 = vmatprep.subr.mxu0 0.0
        %2377 = vmatpush1.xpose.msra.mxu0 0.0
        %2378 = vmatprep.subr.mxu0 0.0
        %2379 = vmatpush1.xpose.msra.mxu0 0.0
        %2380 = vmatprep.subr.mxu0 0.0
        %2381 = vmatpush1.xpose.msra.mxu0 0.0
        %2382 = vmatprep.mubr.f32.mxu0 0.0
        %2383 = vmatmul.mubr.f32.gmra.mrb[0].mxu0 %v2313
        %v2384 = vpop.f32.mrb[0].mxu0
        %v2385 = vadd.f32 0.0, %v2384
        %v2386 = vpop.f32.mrb[0].mxu0
        %2387 = vdwg.mxu0
        %v2388 = vrot.slane %v1817, 7
        %v2389 = vsel %vm1820, %v2388, %v1816
        %v2390 = vrot.slane %v1818, 6
        %v2391 = vsel %vm1822, %v2390, %v2389
        %v2392 = vrot.slane %v1819, 5
        %v2393 = vsel %vm1824, %v2392, %v2391
        %v2394 = vsel %vm1826, %v2393, 0
        %v2397 = vsel %vm1826, %v1771, 0
        %2399 = vmatprep.subr.mxu0 0.0
        %2400 = vmatpush1.xpose.msra.mxu0 %v2397
        %2401 = vmatprep.subr.mxu0 0.0
        %2402 = vmatpush1.xpose.msra.mxu0 0.0
        %2403 = vmatprep.subr.mxu0 0.0
        %2404 = vmatpush1.xpose.msra.mxu0 0.0
        %2405 = vmatprep.subr.mxu0 0.0
        %2406 = vmatpush1.xpose.msra.mxu0 0.0
        %2407 = vmatprep.subr.mxu0 0.0
        %2408 = vmatpush1.xpose.msra.mxu0 0.0
        %2409 = vmatprep.subr.mxu0 0.0
        %2410 = vmatpush1.xpose.msra.mxu0 0.0
        %2411 = vmatprep.subr.mxu0 0.0
        %2412 = vmatpush1.xpose.msra.mxu0 0.0
        %2413 = vmatprep.subr.mxu0 0.0
        %2414 = vmatpush1.xpose.msra.mxu0 0.0
        %2415 = vmatprep.subr.mxu0 0.0
        %2416 = vmatpush1.xpose.msra.mxu0 0.0
        %2417 = vmatprep.subr.mxu0 0.0
        %2418 = vmatpush1.xpose.msra.mxu0 0.0
        %2419 = vmatprep.subr.mxu0 0.0
        %2420 = vmatpush1.xpose.msra.mxu0 0.0
        %2421 = vmatprep.subr.mxu0 0.0
        %2422 = vmatpush1.xpose.msra.mxu0 0.0
        %2423 = vmatprep.subr.mxu0 0.0
        %2424 = vmatpush1.xpose.msra.mxu0 0.0
        %2425 = vmatprep.subr.mxu0 0.0
        %2426 = vmatpush1.xpose.msra.mxu0 0.0
        %2427 = vmatprep.subr.mxu0 0.0
        %2428 = vmatpush1.xpose.msra.mxu0 0.0
        %2429 = vmatprep.subr.mxu0 0.0
        %2430 = vmatpush1.xpose.msra.mxu0 0.0
        %2431 = vmatprep.subr.mxu0 0.0
        %2432 = vmatpush1.xpose.msra.mxu0 0.0
        %2433 = vmatprep.subr.mxu0 0.0
        %2434 = vmatpush1.xpose.msra.mxu0 0.0
        %2435 = vmatprep.subr.mxu0 0.0
        %2436 = vmatpush1.xpose.msra.mxu0 0.0
        %2437 = vmatprep.subr.mxu0 0.0
        %2438 = vmatpush1.xpose.msra.mxu0 0.0
        %2439 = vmatprep.subr.mxu0 0.0
        %2440 = vmatpush1.xpose.msra.mxu0 0.0
        %2441 = vmatprep.subr.mxu0 0.0
        %2442 = vmatpush1.xpose.msra.mxu0 0.0
        %2443 = vmatprep.subr.mxu0 0.0
        %2444 = vmatpush1.xpose.msra.mxu0 0.0
        %2445 = vmatprep.subr.mxu0 0.0
        %2446 = vmatpush1.xpose.msra.mxu0 0.0
        %2447 = vmatprep.subr.mxu0 0.0
        %2448 = vmatpush1.xpose.msra.mxu0 0.0
        %2449 = vmatprep.subr.mxu0 0.0
        %2450 = vmatpush1.xpose.msra.mxu0 0.0
        %2451 = vmatprep.subr.mxu0 0.0
        %2452 = vmatpush1.xpose.msra.mxu0 0.0
        %2453 = vmatprep.subr.mxu0 0.0
        %2454 = vmatpush1.xpose.msra.mxu0 0.0
        %2455 = vmatprep.subr.mxu0 0.0
        %2456 = vmatpush1.xpose.msra.mxu0 0.0
        %2457 = vmatprep.subr.mxu0 0.0
        %2458 = vmatpush1.xpose.msra.mxu0 0.0
        %2459 = vmatprep.subr.mxu0 0.0
        %2460 = vmatpush1.xpose.msra.mxu0 0.0
        %2461 = vmatprep.subr.mxu0 0.0
        %2462 = vmatpush1.xpose.msra.mxu0 0.0
        %2463 = vmatprep.mubr.f32.mxu0 0.0
        %2464 = vmatmul.mubr.f32.gmra.mrb[0].mxu0 %v2394
        %v2465 = vpop.f32.mrb[0].mxu0
        %v2466 = vadd.f32 0.0, %v2465
        %v2467 = vpop.f32.mrb[0].mxu0
        %2468 = vdwg.mxu0
        %v2477 = vrot.slane %v1899, 1
        %v2478 = vrot.slane %v1980, 1
        %v2479 = vrot.slane %v2061, 1
        %v2480 = vrot.slane %v2142, 1
        %v2481 = vrot.slane %v2223, 1
        %v2482 = vrot.slane %v2304, 1
        %v2483 = vrot.slane %v2385, 1
        %v2484 = vrot.slane %v2466, 1
        %v2485 = vrot.slane %v1899, 2
        %v2486 = vrot.slane %v1980, 2
        %v2487 = vrot.slane %v2061, 2
        %v2488 = vrot.slane %v2142, 2
        %v2489 = vrot.slane %v2223, 2
        %v2490 = vrot.slane %v2304, 2
        %v2491 = vrot.slane %v2385, 2
        %v2492 = vrot.slane %v2466, 2
        %v2493 = vrot.slane %v1899, 3
        %v2494 = vrot.slane %v1980, 3
        %v2495 = vrot.slane %v2061, 3
        %v2496 = vrot.slane %v2142, 3
        %v2497 = vrot.slane %v2223, 3
        %v2498 = vrot.slane %v2304, 3
        %v2499 = vrot.slane %v2385, 3
        %v2500 = vrot.slane %v2466, 3
        %v2501 = vmul.f32 %v1251, %v1780
        %v2502 = vmul.f32 %v1251, %v1781
        %v2503 = vmul.f32 %v1251, %v1782
        %v2504 = vmul.f32 %v1251, %v1783
        %v2505 = vmul.f32 %v1251, %v1784
        %v2506 = vmul.f32 %v1251, %v1785
        %v2507 = vmul.f32 %v1251, %v1786
        %v2508 = vmul.f32 %v1251, %v1787
        %v2509 = vmul.f32 %v1321, %v1780
        %v2510 = vmul.f32 %v1321, %v1781
        %v2511 = vmul.f32 %v1321, %v1782
        %v2512 = vmul.f32 %v1321, %v1783
        %v2513 = vmul.f32 %v1321, %v1784
        %v2514 = vmul.f32 %v1321, %v1785
        %v2515 = vmul.f32 %v1321, %v1786
        %v2516 = vmul.f32 %v1321, %v1787
        %v2517 = vmul.f32 %v1391, %v1780
        %v2518 = vmul.f32 %v1391, %v1781
        %v2519 = vmul.f32 %v1391, %v1782
        %v2520 = vmul.f32 %v1391, %v1783
        %v2521 = vmul.f32 %v1391, %v1784
        %v2522 = vmul.f32 %v1391, %v1785
        %v2523 = vmul.f32 %v1391, %v1786
        %v2524 = vmul.f32 %v1391, %v1787
        %v2525 = vmul.f32 %v1461, %v1780
        %v2526 = vmul.f32 %v1461, %v1781
        %v2527 = vmul.f32 %v1461, %v1782
        %v2528 = vmul.f32 %v1461, %v1783
        %v2529 = vmul.f32 %v1461, %v1784
        %v2530 = vmul.f32 %v1461, %v1785
        %v2531 = vmul.f32 %v1461, %v1786
        %v2532 = vmul.f32 %v1461, %v1787
        %v2533 = vsel %vm1826, %v2501, 0.0
        %2534 = vadd.xlane.f32.xlu0 %v2533
        %v2535 = vpop.xlane.xlu0 %2534
        %v2536 = vsel %vm1826, %v2502, 0.0
        %2537 = vadd.xlane.f32.xlu0 %v2536
        %v2538 = vpop.xlane.xlu0 %2537
        %v2539 = vsel %vm1826, %v2503, 0.0
        %2540 = vadd.xlane.f32.xlu0 %v2539
        %v2541 = vpop.xlane.xlu0 %2540
        %v2542 = vsel %vm1826, %v2504, 0.0
        %2543 = vadd.xlane.f32.xlu0 %v2542
        %v2544 = vpop.xlane.xlu0 %2543
        %v2545 = vsel %vm1826, %v2505, 0.0
        %2546 = vadd.xlane.f32.xlu0 %v2545
        %v2547 = vpop.xlane.xlu0 %2546
        %v2548 = vsel %vm1826, %v2506, 0.0
        %2549 = vadd.xlane.f32.xlu0 %v2548
        %v2550 = vpop.xlane.xlu0 %2549
        %v2551 = vsel %vm1826, %v2507, 0.0
        %2552 = vadd.xlane.f32.xlu0 %v2551
        %v2553 = vpop.xlane.xlu0 %2552
        %v2554 = vsel %vm1826, %v2508, 0.0
        %2555 = vadd.xlane.f32.xlu0 %v2554
        %v2556 = vpop.xlane.xlu0 %2555
        %v2557 = vsel %vm1826, %v2509, 0.0
        %2558 = vadd.xlane.f32.xlu0 %v2557
        %v2559 = vpop.xlane.xlu0 %2558
        %v2560 = vsel %vm1826, %v2510, 0.0
        %2561 = vadd.xlane.f32.xlu0 %v2560
        %v2562 = vpop.xlane.xlu0 %2561
        %v2563 = vsel %vm1826, %v2511, 0.0
        %2564 = vadd.xlane.f32.xlu0 %v2563
        %v2565 = vpop.xlane.xlu0 %2564
        %v2566 = vsel %vm1826, %v2512, 0.0
        %2567 = vadd.xlane.f32.xlu0 %v2566
        %v2568 = vpop.xlane.xlu0 %2567
        %v2569 = vsel %vm1826, %v2513, 0.0
        %2570 = vadd.xlane.f32.xlu0 %v2569
        %v2571 = vpop.xlane.xlu0 %2570
        %v2572 = vsel %vm1826, %v2514, 0.0
        %2573 = vadd.xlane.f32.xlu0 %v2572
        %v2574 = vpop.xlane.xlu0 %2573
        %v2575 = vsel %vm1826, %v2515, 0.0
        %2576 = vadd.xlane.f32.xlu0 %v2575
        %v2577 = vpop.xlane.xlu0 %2576
        %v2578 = vsel %vm1826, %v2516, 0.0
        %2579 = vadd.xlane.f32.xlu0 %v2578
        %v2580 = vpop.xlane.xlu0 %2579
        %v2581 = vsel %vm1826, %v2517, 0.0
        %2582 = vadd.xlane.f32.xlu0 %v2581
        %v2583 = vpop.xlane.xlu0 %2582
        %v2584 = vsel %vm1826, %v2518, 0.0
        %2585 = vadd.xlane.f32.xlu0 %v2584
        %v2586 = vpop.xlane.xlu0 %2585
        %v2587 = vsel %vm1826, %v2519, 0.0
        %2588 = vadd.xlane.f32.xlu0 %v2587
        %v2589 = vpop.xlane.xlu0 %2588
        %v2590 = vsel %vm1826, %v2520, 0.0
        %2591 = vadd.xlane.f32.xlu0 %v2590
        %v2592 = vpop.xlane.xlu0 %2591
        %v2593 = vsel %vm1826, %v2521, 0.0
        %2594 = vadd.xlane.f32.xlu0 %v2593
        %v2595 = vpop.xlane.xlu0 %2594
        %v2596 = vsel %vm1826, %v2522, 0.0
        %2597 = vadd.xlane.f32.xlu0 %v2596
        %v2598 = vpop.xlane.xlu0 %2597
        %v2599 = vsel %vm1826, %v2523, 0.0
        %2600 = vadd.xlane.f32.xlu0 %v2599
        %v2601 = vpop.xlane.xlu0 %2600
        %v2602 = vsel %vm1826, %v2524, 0.0
        %2603 = vadd.xlane.f32.xlu0 %v2602
        %v2604 = vpop.xlane.xlu0 %2603
        %v2605 = vsel %vm1826, %v2525, 0.0
        %2606 = vadd.xlane.f32.xlu0 %v2605
        %v2607 = vpop.xlane.xlu0 %2606
        %v2608 = vsel %vm1826, %v2526, 0.0
        %2609 = vadd.xlane.f32.xlu0 %v2608
        %v2610 = vpop.xlane.xlu0 %2609
        %v2611 = vsel %vm1826, %v2527, 0.0
        %2612 = vadd.xlane.f32.xlu0 %v2611
        %v2613 = vpop.xlane.xlu0 %2612
        %v2614 = vsel %vm1826, %v2528, 0.0
        %2615 = vadd.xlane.f32.xlu0 %v2614
        %v2616 = vpop.xlane.xlu0 %2615
        %v2617 = vsel %vm1826, %v2529, 0.0
        %2618 = vadd.xlane.f32.xlu0 %v2617
        %v2619 = vpop.xlane.xlu0 %2618
        %v2620 = vsel %vm1826, %v2530, 0.0
        %2621 = vadd.xlane.f32.xlu0 %v2620
        %v2622 = vpop.xlane.xlu0 %2621
        %v2623 = vsel %vm1826, %v2531, 0.0
        %2624 = vadd.xlane.f32.xlu0 %v2623
        %v2625 = vpop.xlane.xlu0 %2624
        %v2626 = vsel %vm1826, %v2532, 0.0
        %2627 = vadd.xlane.f32.xlu0 %v2626
        %v2628 = vpop.xlane.xlu0 %2627
        %v2629 = vmul.f32 %v1780, %v1764
        %v2630 = vmul.f32 %v1781, %v1765
        %v2631 = vmul.f32 %v1782, %v1766
        %v2632 = vmul.f32 %v1783, %v1767
        %v2633 = vmul.f32 %v1784, %v1768
        %v2634 = vmul.f32 %v1785, %v1769
        %v2635 = vmul.f32 %v1786, %v1770
        %v2636 = vmul.f32 %v1787, %v1771
        %v2637 = vsel %vm1826, %v2629, 0.0
        %2638 = vadd.xlane.f32.xlu0 %v2637
        %v2639 = vpop.xlane.xlu0 %2638
        %v2640 = vsel %vm1826, %v2630, 0.0
        %2641 = vadd.xlane.f32.xlu0 %v2640
        %v2642 = vpop.xlane.xlu0 %2641
        %v2643 = vsel %vm1826, %v2631, 0.0
        %2644 = vadd.xlane.f32.xlu0 %v2643
        %v2645 = vpop.xlane.xlu0 %2644
        %v2646 = vsel %vm1826, %v2632, 0.0
        %2647 = vadd.xlane.f32.xlu0 %v2646
        %v2648 = vpop.xlane.xlu0 %2647
        %v2649 = vsel %vm1826, %v2633, 0.0
        %2650 = vadd.xlane.f32.xlu0 %v2649
        %v2651 = vpop.xlane.xlu0 %2650
        %v2652 = vsel %vm1826, %v2634, 0.0
        %2653 = vadd.xlane.f32.xlu0 %v2652
        %v2654 = vpop.xlane.xlu0 %2653
        %v2655 = vsel %vm1826, %v2635, 0.0
        %2656 = vadd.xlane.f32.xlu0 %v2655
        %v2657 = vpop.xlane.xlu0 %2656
        %v2658 = vsel %vm1826, %v2636, 0.0
        %2659 = vadd.xlane.f32.xlu0 %v2658
        %v2660 = vpop.xlane.xlu0 %2659
        %v2661 = vrot.slane %v1980, 7
        %v2662 = vsel %vm1820, %v2661, %v1899
        %v2663 = vrot.slane %v2061, 6
        %v2664 = vsel %vm1822, %v2663, %v2662
        %v2665 = vrot.slane %v2142, 5
        %v2666 = vsel %vm1824, %v2665, %v2664
        %v2667 = vrot.slane %v2223, 4
        %vm2668 = vcmask 1044484
        %v2669 = vsel %vm2668, %v2667, %v2666
        %vm2670 = vcmask 1045509
        %v2671 = vsel %vm2670, %v2498, %v2669
        %vm2672 = vcmask 1046534
        %v2673 = vsel %vm2672, %v2491, %v2671
        %vm2674 = vcmask 1047559
        %v2675 = vsel %vm2674, %v2484, %v2673
        %v2677 = vsel %vm1826, %v951, 0
        %v2680 = vsel %vm1826, %v1251, 0
        %2682 = vmatprep.subr.mxu0 0.0
        %2683 = vmatpush1.xpose.msra.mxu0 %v2680
        %2684 = vmatprep.subr.mxu0 0.0
        %2685 = vmatpush1.xpose.msra.mxu0 0.0
        %2686 = vmatprep.subr.mxu0 0.0
        %2687 = vmatpush1.xpose.msra.mxu0 0.0
        %2688 = vmatprep.subr.mxu0 0.0
        %2689 = vmatpush1.xpose.msra.mxu0 0.0
        %2690 = vmatprep.subr.mxu0 0.0
        %2691 = vmatpush1.xpose.msra.mxu0 0.0
        %2692 = vmatprep.subr.mxu0 0.0
        %2693 = vmatpush1.xpose.msra.mxu0 0.0
        %2694 = vmatprep.subr.mxu0 0.0
        %2695 = vmatpush1.xpose.msra.mxu0 0.0
        %2696 = vmatprep.subr.mxu0 0.0
        %2697 = vmatpush1.xpose.msra.mxu0 0.0
        %2698 = vmatprep.subr.mxu0 0.0
        %2699 = vmatpush1.xpose.msra.mxu0 0.0
        %2700 = vmatprep.subr.mxu0 0.0
        %2701 = vmatpush1.xpose.msra.mxu0 0.0
        %2702 = vmatprep.subr.mxu0 0.0
        %2703 = vmatpush1.xpose.msra.mxu0 0.0
        %2704 = vmatprep.subr.mxu0 0.0
        %2705 = vmatpush1.xpose.msra.mxu0 0.0
        %2706 = vmatprep.subr.mxu0 0.0
        %2707 = vmatpush1.xpose.msra.mxu0 0.0
        %2708 = vmatprep.subr.mxu0 0.0
        %2709 = vmatpush1.xpose.msra.mxu0 0.0
        %2710 = vmatprep.subr.mxu0 0.0
        %2711 = vmatpush1.xpose.msra.mxu0 0.0
        %2712 = vmatprep.subr.mxu0 0.0
        %2713 = vmatpush1.xpose.msra.mxu0 0.0
        %2714 = vmatprep.subr.mxu0 0.0
        %2715 = vmatpush1.xpose.msra.mxu0 0.0
        %2716 = vmatprep.subr.mxu0 0.0
        %2717 = vmatpush1.xpose.msra.mxu0 0.0
        %2718 = vmatprep.subr.mxu0 0.0
        %2719 = vmatpush1.xpose.msra.mxu0 0.0
        %2720 = vmatprep.subr.mxu0 0.0
        %2721 = vmatpush1.xpose.msra.mxu0 0.0
        %2722 = vmatprep.subr.mxu0 0.0
        %2723 = vmatpush1.xpose.msra.mxu0 0.0
        %2724 = vmatprep.subr.mxu0 0.0
        %2725 = vmatpush1.xpose.msra.mxu0 0.0
        %2726 = vmatprep.subr.mxu0 0.0
        %2727 = vmatpush1.xpose.msra.mxu0 0.0
        %2728 = vmatprep.subr.mxu0 0.0
        %2729 = vmatpush1.xpose.msra.mxu0 0.0
        %2730 = vmatprep.subr.mxu0 0.0
        %2731 = vmatpush1.xpose.msra.mxu0 0.0
        %2732 = vmatprep.subr.mxu0 0.0
        %2733 = vmatpush1.xpose.msra.mxu0 0.0
        %2734 = vmatprep.subr.mxu0 0.0
        %2735 = vmatpush1.xpose.msra.mxu0 0.0
        %2736 = vmatprep.subr.mxu0 0.0
        %2737 = vmatpush1.xpose.msra.mxu0 0.0
        %2738 = vmatprep.subr.mxu0 0.0
        %2739 = vmatpush1.xpose.msra.mxu0 0.0
        %2740 = vmatprep.subr.mxu0 0.0
        %2741 = vmatpush1.xpose.msra.mxu0 0.0
        %2742 = vmatprep.subr.mxu0 0.0
        %2743 = vmatpush1.xpose.msra.mxu0 0.0
        %2744 = vmatprep.subr.mxu0 0.0
        %2745 = vmatpush1.xpose.msra.mxu0 0.0
        %2746 = vmatprep.mubr.f32.mxu0 0.0
        %2747 = vmatmul.mubr.f32.gmra.mrb[0].mxu0 %v2677
        %v2748 = vpop.f32.mrb[0].mxu0
        %v2749 = vadd.f32 %v2675, %v2748
        %v2750 = vpop.f32.mrb[0].mxu0
        %2751 = vdwg.mxu0
        %v2752 = vrot.slane %v2478, 7
        %v2753 = vsel %vm1820, %v2752, %v2477
        %v2754 = vrot.slane %v2479, 6
        %v2755 = vsel %vm1822, %v2754, %v2753
        %v2756 = vrot.slane %v2480, 5
        %v2757 = vsel %vm1824, %v2756, %v2755
        %v2758 = vrot.slane %v2481, 4
        %v2759 = vsel %vm2668, %v2758, %v2757
        %v2760 = vrot.slane %v2482, 3
        %v2761 = vsel %vm2670, %v2760, %v2759
        %v2762 = vrot.slane %v2483, 2
        %v2763 = vsel %vm2672, %v2762, %v2761
        %v2764 = vrot.slane %v2484, 1
        %v2765 = vsel %vm2674, %v2764, %v2763
        %v2767 = vsel %vm1826, %v1021, 0
        %v2770 = vsel %vm1826, %v1321, 0
        %2772 = vmatprep.subr.mxu0 0.0
        %2773 = vmatpush1.xpose.msra.mxu0 %v2770
        %2774 = vmatprep.subr.mxu0 0.0
        %2775 = vmatpush1.xpose.msra.mxu0 0.0
        %2776 = vmatprep.subr.mxu0 0.0
        %2777 = vmatpush1.xpose.msra.mxu0 0.0
        %2778 = vmatprep.subr.mxu0 0.0
        %2779 = vmatpush1.xpose.msra.mxu0 0.0
        %2780 = vmatprep.subr.mxu0 0.0
        %2781 = vmatpush1.xpose.msra.mxu0 0.0
        %2782 = vmatprep.subr.mxu0 0.0
        %2783 = vmatpush1.xpose.msra.mxu0 0.0
        %2784 = vmatprep.subr.mxu0 0.0
        %2785 = vmatpush1.xpose.msra.mxu0 0.0
        %2786 = vmatprep.subr.mxu0 0.0
        %2787 = vmatpush1.xpose.msra.mxu0 0.0
        %2788 = vmatprep.subr.mxu0 0.0
        %2789 = vmatpush1.xpose.msra.mxu0 0.0
        %2790 = vmatprep.subr.mxu0 0.0
        %2791 = vmatpush1.xpose.msra.mxu0 0.0
        %2792 = vmatprep.subr.mxu0 0.0
        %2793 = vmatpush1.xpose.msra.mxu0 0.0
        %2794 = vmatprep.subr.mxu0 0.0
        %2795 = vmatpush1.xpose.msra.mxu0 0.0
        %2796 = vmatprep.subr.mxu0 0.0
        %2797 = vmatpush1.xpose.msra.mxu0 0.0
        %2798 = vmatprep.subr.mxu0 0.0
        %2799 = vmatpush1.xpose.msra.mxu0 0.0
        %2800 = vmatprep.subr.mxu0 0.0
        %2801 = vmatpush1.xpose.msra.mxu0 0.0
        %2802 = vmatprep.subr.mxu0 0.0
        %2803 = vmatpush1.xpose.msra.mxu0 0.0
        %2804 = vmatprep.subr.mxu0 0.0
        %2805 = vmatpush1.xpose.msra.mxu0 0.0
        %2806 = vmatprep.subr.mxu0 0.0
        %2807 = vmatpush1.xpose.msra.mxu0 0.0
        %2808 = vmatprep.subr.mxu0 0.0
        %2809 = vmatpush1.xpose.msra.mxu0 0.0
        %2810 = vmatprep.subr.mxu0 0.0
        %2811 = vmatpush1.xpose.msra.mxu0 0.0
        %2812 = vmatprep.subr.mxu0 0.0
        %2813 = vmatpush1.xpose.msra.mxu0 0.0
        %2814 = vmatprep.subr.mxu0 0.0
        %2815 = vmatpush1.xpose.msra.mxu0 0.0
        %2816 = vmatprep.subr.mxu0 0.0
        %2817 = vmatpush1.xpose.msra.mxu0 0.0
        %2818 = vmatprep.subr.mxu0 0.0
        %2819 = vmatpush1.xpose.msra.mxu0 0.0
        %2820 = vmatprep.subr.mxu0 0.0
        %2821 = vmatpush1.xpose.msra.mxu0 0.0
        %2822 = vmatprep.subr.mxu0 0.0
        %2823 = vmatpush1.xpose.msra.mxu0 0.0
        %2824 = vmatprep.subr.mxu0 0.0
        %2825 = vmatpush1.xpose.msra.mxu0 0.0
        %2826 = vmatprep.subr.mxu0 0.0
        %2827 = vmatpush1.xpose.msra.mxu0 0.0
        %2828 = vmatprep.subr.mxu0 0.0
        %2829 = vmatpush1.xpose.msra.mxu0 0.0
        %2830 = vmatprep.subr.mxu0 0.0
        %2831 = vmatpush1.xpose.msra.mxu0 0.0
        %2832 = vmatprep.subr.mxu0 0.0
        %2833 = vmatpush1.xpose.msra.mxu0 0.0
        %2834 = vmatprep.subr.mxu0 0.0
        %2835 = vmatpush1.xpose.msra.mxu0 0.0
        %2836 = vmatprep.mubr.f32.mxu0 0.0
        %2837 = vmatmul.mubr.f32.gmra.mrb[0].mxu0 %v2767
        %v2838 = vpop.f32.mrb[0].mxu0
        %v2839 = vadd.f32 %v2765, %v2838
        %v2840 = vpop.f32.mrb[0].mxu0
        %2841 = vdwg.mxu0
        %v2842 = vrot.slane %v2486, 7
        %v2843 = vsel %vm1820, %v2842, %v2485
        %v2844 = vrot.slane %v2487, 6
        %v2845 = vsel %vm1822, %v2844, %v2843
        %v2846 = vrot.slane %v2488, 5
        %v2847 = vsel %vm1824, %v2846, %v2845
        %v2848 = vrot.slane %v2489, 4
        %v2849 = vsel %vm2668, %v2848, %v2847
        %v2850 = vrot.slane %v2490, 3
        %v2851 = vsel %vm2670, %v2850, %v2849
        %v2852 = vrot.slane %v2491, 2
        %v2853 = vsel %vm2672, %v2852, %v2851
        %v2854 = vrot.slane %v2492, 1
        %v2855 = vsel %vm2674, %v2854, %v2853
        %v2857 = vsel %vm1826, %v1091, 0
        %v2860 = vsel %vm1826, %v1391, 0
        %2862 = vmatprep.subr.mxu0 0.0
        %2863 = vmatpush1.xpose.msra.mxu0 %v2860
        %2864 = vmatprep.subr.mxu0 0.0
        %2865 = vmatpush1.xpose.msra.mxu0 0.0
        %2866 = vmatprep.subr.mxu0 0.0
        %2867 = vmatpush1.xpose.msra.mxu0 0.0
        %2868 = vmatprep.subr.mxu0 0.0
        %2869 = vmatpush1.xpose.msra.mxu0 0.0
        %2870 = vmatprep.subr.mxu0 0.0
        %2871 = vmatpush1.xpose.msra.mxu0 0.0
        %2872 = vmatprep.subr.mxu0 0.0
        %2873 = vmatpush1.xpose.msra.mxu0 0.0
        %2874 = vmatprep.subr.mxu0 0.0
        %2875 = vmatpush1.xpose.msra.mxu0 0.0
        %2876 = vmatprep.subr.mxu0 0.0
        %2877 = vmatpush1.xpose.msra.mxu0 0.0
        %2878 = vmatprep.subr.mxu0 0.0
        %2879 = vmatpush1.xpose.msra.mxu0 0.0
        %2880 = vmatprep.subr.mxu0 0.0
        %2881 = vmatpush1.xpose.msra.mxu0 0.0
        %2882 = vmatprep.subr.mxu0 0.0
        %2883 = vmatpush1.xpose.msra.mxu0 0.0
        %2884 = vmatprep.subr.mxu0 0.0
        %2885 = vmatpush1.xpose.msra.mxu0 0.0
        %2886 = vmatprep.subr.mxu0 0.0
        %2887 = vmatpush1.xpose.msra.mxu0 0.0
        %2888 = vmatprep.subr.mxu0 0.0
        %2889 = vmatpush1.xpose.msra.mxu0 0.0
        %2890 = vmatprep.subr.mxu0 0.0
        %2891 = vmatpush1.xpose.msra.mxu0 0.0
        %2892 = vmatprep.subr.mxu0 0.0
        %2893 = vmatpush1.xpose.msra.mxu0 0.0
        %2894 = vmatprep.subr.mxu0 0.0
        %2895 = vmatpush1.xpose.msra.mxu0 0.0
        %2896 = vmatprep.subr.mxu0 0.0
        %2897 = vmatpush1.xpose.msra.mxu0 0.0
        %2898 = vmatprep.subr.mxu0 0.0
        %2899 = vmatpush1.xpose.msra.mxu0 0.0
        %2900 = vmatprep.subr.mxu0 0.0
        %2901 = vmatpush1.xpose.msra.mxu0 0.0
        %2902 = vmatprep.subr.mxu0 0.0
        %2903 = vmatpush1.xpose.msra.mxu0 0.0
        %2904 = vmatprep.subr.mxu0 0.0
        %2905 = vmatpush1.xpose.msra.mxu0 0.0
        %2906 = vmatprep.subr.mxu0 0.0
        %2907 = vmatpush1.xpose.msra.mxu0 0.0
        %2908 = vmatprep.subr.mxu0 0.0
        %2909 = vmatpush1.xpose.msra.mxu0 0.0
        %2910 = vmatprep.subr.mxu0 0.0
        %2911 = vmatpush1.xpose.msra.mxu0 0.0
        %2912 = vmatprep.subr.mxu0 0.0
        %2913 = vmatpush1.xpose.msra.mxu0 0.0
        %2914 = vmatprep.subr.mxu0 0.0
        %2915 = vmatpush1.xpose.msra.mxu0 0.0
        %2916 = vmatprep.subr.mxu0 0.0
        %2917 = vmatpush1.xpose.msra.mxu0 0.0
        %2918 = vmatprep.subr.mxu0 0.0
        %2919 = vmatpush1.xpose.msra.mxu0 0.0
        %2920 = vmatprep.subr.mxu0 0.0
        %2921 = vmatpush1.xpose.msra.mxu0 0.0
        %2922 = vmatprep.subr.mxu0 0.0
        %2923 = vmatpush1.xpose.msra.mxu0 0.0
        %2924 = vmatprep.subr.mxu0 0.0
        %2925 = vmatpush1.xpose.msra.mxu0 0.0
        %2926 = vmatprep.mubr.f32.mxu0 0.0
        %2927 = vmatmul.mubr.f32.gmra.mrb[0].mxu0 %v2857
        %v2928 = vpop.f32.mrb[0].mxu0
        %v2929 = vadd.f32 %v2855, %v2928
        %v2930 = vpop.f32.mrb[0].mxu0
        %2931 = vdwg.mxu0
        %v2932 = vrot.slane %v2494, 7
        %v2933 = vsel %vm1820, %v2932, %v2493
        %v2934 = vrot.slane %v2495, 6
        %v2935 = vsel %vm1822, %v2934, %v2933
        %v2936 = vrot.slane %v2496, 5
        %v2937 = vsel %vm1824, %v2936, %v2935
        %v2938 = vrot.slane %v2497, 4
        %v2939 = vsel %vm2668, %v2938, %v2937
        %v2940 = vrot.slane %v2498, 3
        %v2941 = vsel %vm2670, %v2940, %v2939
        %v2942 = vrot.slane %v2499, 2
        %v2943 = vsel %vm2672, %v2942, %v2941
        %v2944 = vrot.slane %v2500, 1
        %v2945 = vsel %vm2674, %v2944, %v2943
        %v2947 = vsel %vm1826, %v1161, 0
        %v2950 = vsel %vm1826, %v1461, 0
        %2952 = vmatprep.subr.mxu0 0.0
        %2953 = vmatpush1.xpose.msra.mxu0 %v2950
        %2954 = vmatprep.subr.mxu0 0.0
        %2955 = vmatpush1.xpose.msra.mxu0 0.0
        %2956 = vmatprep.subr.mxu0 0.0
        %2957 = vmatpush1.xpose.msra.mxu0 0.0
        %2958 = vmatprep.subr.mxu0 0.0
        %2959 = vmatpush1.xpose.msra.mxu0 0.0
        %2960 = vmatprep.subr.mxu0 0.0
        %2961 = vmatpush1.xpose.msra.mxu0 0.0
        %2962 = vmatprep.subr.mxu0 0.0
        %2963 = vmatpush1.xpose.msra.mxu0 0.0
        %2964 = vmatprep.subr.mxu0 0.0
        %2965 = vmatpush1.xpose.msra.mxu0 0.0
        %2966 = vmatprep.subr.mxu0 0.0
        %2967 = vmatpush1.xpose.msra.mxu0 0.0
        %2968 = vmatprep.subr.mxu0 0.0
        %2969 = vmatpush1.xpose.msra.mxu0 0.0
        %2970 = vmatprep.subr.mxu0 0.0
        %2971 = vmatpush1.xpose.msra.mxu0 0.0
        %2972 = vmatprep.subr.mxu0 0.0
        %2973 = vmatpush1.xpose.msra.mxu0 0.0
        %2974 = vmatprep.subr.mxu0 0.0
        %2975 = vmatpush1.xpose.msra.mxu0 0.0
        %2976 = vmatprep.subr.mxu0 0.0
        %2977 = vmatpush1.xpose.msra.mxu0 0.0
        %2978 = vmatprep.subr.mxu0 0.0
        %2979 = vmatpush1.xpose.msra.mxu0 0.0
        %2980 = vmatprep.subr.mxu0 0.0
        %2981 = vmatpush1.xpose.msra.mxu0 0.0
        %2982 = vmatprep.subr.mxu0 0.0
        %2983 = vmatpush1.xpose.msra.mxu0 0.0
        %2984 = vmatprep.subr.mxu0 0.0
        %2985 = vmatpush1.xpose.msra.mxu0 0.0
        %2986 = vmatprep.subr.mxu0 0.0
        %2987 = vmatpush1.xpose.msra.mxu0 0.0
        %2988 = vmatprep.subr.mxu0 0.0
        %2989 = vmatpush1.xpose.msra.mxu0 0.0
        %2990 = vmatprep.subr.mxu0 0.0
        %2991 = vmatpush1.xpose.msra.mxu0 0.0
        %2992 = vmatprep.subr.mxu0 0.0
        %2993 = vmatpush1.xpose.msra.mxu0 0.0
        %2994 = vmatprep.subr.mxu0 0.0
        %2995 = vmatpush1.xpose.msra.mxu0 0.0
        %2996 = vmatprep.subr.mxu0 0.0
        %2997 = vmatpush1.xpose.msra.mxu0 0.0
        %2998 = vmatprep.subr.mxu0 0.0
        %2999 = vmatpush1.xpose.msra.mxu0 0.0
        %3000 = vmatprep.subr.mxu0 0.0
        %3001 = vmatpush1.xpose.msra.mxu0 0.0
        %3002 = vmatprep.subr.mxu0 0.0
        %3003 = vmatpush1.xpose.msra.mxu0 0.0
        %3004 = vmatprep.subr.mxu0 0.0
        %3005 = vmatpush1.xpose.msra.mxu0 0.0
        %3006 = vmatprep.subr.mxu0 0.0
        %3007 = vmatpush1.xpose.msra.mxu0 0.0
        %3008 = vmatprep.subr.mxu0 0.0
        %3009 = vmatpush1.xpose.msra.mxu0 0.0
        %3010 = vmatprep.subr.mxu0 0.0
        %3011 = vmatpush1.xpose.msra.mxu0 0.0
        %3012 = vmatprep.subr.mxu0 0.0
        %3013 = vmatpush1.xpose.msra.mxu0 0.0
        %3014 = vmatprep.subr.mxu0 0.0
        %3015 = vmatpush1.xpose.msra.mxu0 0.0
        %3016 = vmatprep.mubr.f32.mxu0 0.0
        %3017 = vmatmul.mubr.f32.gmra.mrb[0].mxu0 %v2947
        %v3018 = vpop.f32.mrb[0].mxu0
        %v3019 = vadd.f32 %v2945, %v3018
        %v3020 = vpop.f32.mrb[0].mxu0
        %3021 = vdwg.mxu0
        %v3054 = vlaneseq
        %v3055 = vand.u32 %v3054, 127
        %v3056 = vlaneseq
        %v3057 = vshrl.u32 %v3056, 7
        %v3058 = vsub.s32 %v3055, %v3057
        %v3059 = vrot.slane %v2535, %v3058
        %v3060 = vlaneseq
        %v3061 = vshrl.u32 %v3060, 7
        %v3062 = vsub.s32 %v3055, %v3061
        %v3063 = vrot.slane %v2538, %v3062
        %v3064 = vlaneseq
        %v3065 = vshrl.u32 %v3064, 7
        %v3066 = vsub.s32 %v3055, %v3065
        %v3067 = vrot.slane %v2541, %v3066
        %v3068 = vlaneseq
        %v3069 = vshrl.u32 %v3068, 7
        %v3070 = vsub.s32 %v3055, %v3069
        %v3071 = vrot.slane %v2544, %v3070
        %v3072 = vlaneseq
        %v3073 = vshrl.u32 %v3072, 7
        %v3074 = vsub.s32 %v3055, %v3073
        %v3075 = vrot.slane %v2547, %v3074
        %v3076 = vlaneseq
        %v3077 = vshrl.u32 %v3076, 7
        %v3078 = vsub.s32 %v3055, %v3077
        %v3079 = vrot.slane %v2550, %v3078
        %v3080 = vlaneseq
        %v3081 = vshrl.u32 %v3080, 7
        %v3082 = vsub.s32 %v3055, %v3081
        %v3083 = vrot.slane %v2553, %v3082
        %v3084 = vlaneseq
        %v3085 = vshrl.u32 %v3084, 7
        %v3086 = vsub.s32 %v3055, %v3085
        %v3087 = vrot.slane %v2556, %v3086
        %v3088 = vlaneseq
        %v3089 = vshrl.u32 %v3088, 7
        %v3090 = vsub.s32 %v3055, %v3089
        %v3091 = vrot.slane %v2559, %v3090
        %v3092 = vlaneseq
        %v3093 = vshrl.u32 %v3092, 7
        %v3094 = vsub.s32 %v3055, %v3093
        %v3095 = vrot.slane %v2562, %v3094
        %v3096 = vlaneseq
        %v3097 = vshrl.u32 %v3096, 7
        %v3098 = vsub.s32 %v3055, %v3097
        %v3099 = vrot.slane %v2565, %v3098
        %v3100 = vlaneseq
        %v3101 = vshrl.u32 %v3100, 7
        %v3102 = vsub.s32 %v3055, %v3101
        %v3103 = vrot.slane %v2568, %v3102
        %v3104 = vlaneseq
        %v3105 = vshrl.u32 %v3104, 7
        %v3106 = vsub.s32 %v3055, %v3105
        %v3107 = vrot.slane %v2571, %v3106
        %v3108 = vlaneseq
        %v3109 = vshrl.u32 %v3108, 7
        %v3110 = vsub.s32 %v3055, %v3109
        %v3111 = vrot.slane %v2574, %v3110
        %v3112 = vlaneseq
        %v3113 = vshrl.u32 %v3112, 7
        %v3114 = vsub.s32 %v3055, %v3113
        %v3115 = vrot.slane %v2577, %v3114
        %v3116 = vlaneseq
        %v3117 = vshrl.u32 %v3116, 7
        %v3118 = vsub.s32 %v3055, %v3117
        %v3119 = vrot.slane %v2580, %v3118
        %v3120 = vlaneseq
        %v3121 = vshrl.u32 %v3120, 7
        %v3122 = vsub.s32 %v3055, %v3121
        %v3123 = vrot.slane %v2583, %v3122
        %v3124 = vlaneseq
        %v3125 = vshrl.u32 %v3124, 7
        %v3126 = vsub.s32 %v3055, %v3125
        %v3127 = vrot.slane %v2586, %v3126
        %v3128 = vlaneseq
        %v3129 = vshrl.u32 %v3128, 7
        %v3130 = vsub.s32 %v3055, %v3129
        %v3131 = vrot.slane %v2589, %v3130
        %v3132 = vlaneseq
        %v3133 = vshrl.u32 %v3132, 7
        %v3134 = vsub.s32 %v3055, %v3133
        %v3135 = vrot.slane %v2592, %v3134
        %v3136 = vlaneseq
        %v3137 = vshrl.u32 %v3136, 7
        %v3138 = vsub.s32 %v3055, %v3137
        %v3139 = vrot.slane %v2595, %v3138
        %v3140 = vlaneseq
        %v3141 = vshrl.u32 %v3140, 7
        %v3142 = vsub.s32 %v3055, %v3141
        %v3143 = vrot.slane %v2598, %v3142
        %v3144 = vlaneseq
        %v3145 = vshrl.u32 %v3144, 7
        %v3146 = vsub.s32 %v3055, %v3145
        %v3147 = vrot.slane %v2601, %v3146
        %v3148 = vlaneseq
        %v3149 = vshrl.u32 %v3148, 7
        %v3150 = vsub.s32 %v3055, %v3149
        %v3151 = vrot.slane %v2604, %v3150
        %v3152 = vlaneseq
        %v3153 = vshrl.u32 %v3152, 7
        %v3154 = vsub.s32 %v3055, %v3153
        %v3155 = vrot.slane %v2607, %v3154
        %v3156 = vlaneseq
        %v3157 = vshrl.u32 %v3156, 7
        %v3158 = vsub.s32 %v3055, %v3157
        %v3159 = vrot.slane %v2610, %v3158
        %v3160 = vlaneseq
        %v3161 = vshrl.u32 %v3160, 7
        %v3162 = vsub.s32 %v3055, %v3161
        %v3163 = vrot.slane %v2613, %v3162
        %v3164 = vlaneseq
        %v3165 = vshrl.u32 %v3164, 7
        %v3166 = vsub.s32 %v3055, %v3165
        %v3167 = vrot.slane %v2616, %v3166
        %v3168 = vlaneseq
        %v3169 = vshrl.u32 %v3168, 7
        %v3170 = vsub.s32 %v3055, %v3169
        %v3171 = vrot.slane %v2619, %v3170
        %v3172 = vlaneseq
        %v3173 = vshrl.u32 %v3172, 7
        %v3174 = vsub.s32 %v3055, %v3173
        %v3175 = vrot.slane %v2622, %v3174
        %v3176 = vlaneseq
        %v3177 = vshrl.u32 %v3176, 7
        %v3178 = vsub.s32 %v3055, %v3177
        %v3179 = vrot.slane %v2625, %v3178
        %v3180 = vlaneseq
        %v3181 = vshrl.u32 %v3180, 7
        %v3182 = vsub.s32 %v3055, %v3181
        %v3183 = vrot.slane %v2628, %v3182
        %v3184 = vsel %vm1820, %v3063, %v3059
        %v3185 = vsel %vm1822, %v3067, %v3184
        %v3186 = vsel %vm1824, %v3071, %v3185
        %v3187 = vsel %vm2668, %v3075, %v3186
        %v3188 = vsel %vm2670, %v3079, %v3187
        %v3189 = vsel %vm2672, %v3083, %v3188
        %v3190 = vsel %vm2674, %v3087, %v3189
        %v3191 = vsel %vm1820, %v3095, %v3091
        %v3192 = vsel %vm1822, %v3099, %v3191
        %v3193 = vsel %vm1824, %v3103, %v3192
        %v3194 = vsel %vm2668, %v3107, %v3193
        %v3195 = vsel %vm2670, %v3111, %v3194
        %v3196 = vsel %vm2672, %v3115, %v3195
        %v3197 = vsel %vm2674, %v3119, %v3196
        %v3198 = vsel %vm1820, %v3127, %v3123
        %v3199 = vsel %vm1822, %v3131, %v3198
        %v3200 = vsel %vm1824, %v3135, %v3199
        %v3201 = vsel %vm2668, %v3139, %v3200
        %v3202 = vsel %vm2670, %v3143, %v3201
        %v3203 = vsel %vm2672, %v3147, %v3202
        %v3204 = vsel %vm2674, %v3151, %v3203
        %v3205 = vsel %vm1820, %v3159, %v3155
        %v3206 = vsel %vm1822, %v3163, %v3205
        %v3207 = vsel %vm1824, %v3167, %v3206
        %v3208 = vsel %vm2668, %v3171, %v3207
        %v3209 = vsel %vm2670, %v3175, %v3208
        %v3210 = vsel %vm2672, %v3179, %v3209
        %v3211 = vsel %vm2674, %v3183, %v3210
        %v3216 = vadd.f32 %v2749, %v3190
        %v3217 = vadd.f32 %v2839, %v3197
        %v3218 = vadd.f32 %v2929, %v3204
        %v3219 = vadd.f32 %v3019, %v3211
        %v3220 = vld [vmem:[%s713] sm:$0xff]
        %v3222 = vlaneseq
        %v3223 = vshrl.u32 %v3222, 7
        %v3224 = vsub.s32 0, %v3223
        %v3225 = vrot.slane %v3220, %v3224
        %3227 = vbcast.lane.b32.xlu0 %v3225, 256
        %v3228 = vpop.permute.xlu0 %3227
        %v3229 = vlaneseq
        %v3230 = vshrl.u32 %v3229, 7
        %v3231 = vsub.s32 1, %v3230
        %v3232 = vrot.slane %v3220, %v3231
        %3234 = vbcast.lane.b32.xlu0 %v3232, 256
        %v3235 = vpop.permute.xlu0 %3234
        %v3236 = vlaneseq
        %v3237 = vshrl.u32 %v3236, 7
        %v3238 = vsub.s32 2, %v3237
        %v3239 = vrot.slane %v3220, %v3238
        %3241 = vbcast.lane.b32.xlu0 %v3239, 256
        %v3242 = vpop.permute.xlu0 %3241
        %v3243 = vlaneseq
        %v3244 = vshrl.u32 %v3243, 7
        %v3245 = vsub.s32 3, %v3244
        %v3246 = vrot.slane %v3220, %v3245
        %3248 = vbcast.lane.b32.xlu0 %v3246, 256
        %v3249 = vpop.permute.xlu0 %3248
        %v3250 = vlaneseq
        %v3251 = vshrl.u32 %v3250, 7
        %v3252 = vsub.s32 4, %v3251
        %v3253 = vrot.slane %v3220, %v3252
        %3255 = vbcast.lane.b32.xlu0 %v3253, 256
        %v3256 = vpop.permute.xlu0 %3255
        %v3257 = vlaneseq
        %v3258 = vshrl.u32 %v3257, 7
        %v3259 = vsub.s32 5, %v3258
        %v3260 = vrot.slane %v3220, %v3259
        %3262 = vbcast.lane.b32.xlu0 %v3260, 256
        %v3263 = vpop.permute.xlu0 %3262
        %v3264 = vlaneseq
        %v3265 = vshrl.u32 %v3264, 7
        %v3266 = vsub.s32 6, %v3265
        %v3267 = vrot.slane %v3220, %v3266
        %3269 = vbcast.lane.b32.xlu0 %v3267, 256
        %v3270 = vpop.permute.xlu0 %3269
        %v3271 = vlaneseq
        %v3272 = vshrl.u32 %v3271, 7
        %v3273 = vsub.s32 7, %v3272
        %v3274 = vrot.slane %v3220, %v3273
        %3276 = vbcast.lane.b32.xlu0 %v3274, 256
        %v3277 = vpop.permute.xlu0 %3276
        %v3286 = vadd.f32 %v2639, %v3228
        %v3287 = vadd.f32 %v2642, %v3235
        %v3288 = vadd.f32 %v2645, %v3242
        %v3289 = vadd.f32 %v2648, %v3249
        %v3290 = vadd.f32 %v2651, %v3256
        %v3291 = vadd.f32 %v2654, %v3263
        %v3292 = vadd.f32 %v2657, %v3270
        %v3293 = vadd.f32 %v2660, %v3277
        %3302 = vset.pattern.permute.xlu0 0
        %3303 = vperm.xlu0 %3302, %v3286
        %v3304 = vpop.permute.xlu0 %3303
        %3305 = vset.pattern.permute.xlu0 0
        %3306 = vperm.xlu0 %3305, %v3287
        %v3307 = vpop.permute.xlu0 %3306
        %3308 = vset.pattern.permute.xlu0 0
        %3309 = vperm.xlu0 %3308, %v3288
        %v3310 = vpop.permute.xlu0 %3309
        %3311 = vset.pattern.permute.xlu0 0
        %3312 = vperm.xlu0 %3311, %v3289
        %v3313 = vpop.permute.xlu0 %3312
        %3314 = vset.pattern.permute.xlu0 0
        %3315 = vperm.xlu0 %3314, %v3290
        %v3316 = vpop.permute.xlu0 %3315
        %3317 = vset.pattern.permute.xlu0 0
        %3318 = vperm.xlu0 %3317, %v3291
        %v3319 = vpop.permute.xlu0 %3318
        %3320 = vset.pattern.permute.xlu0 0
        %3321 = vperm.xlu0 %3320, %v3292
        %v3322 = vpop.permute.xlu0 %3321
        %3323 = vset.pattern.permute.xlu0 0
        %3324 = vperm.xlu0 %3323, %v3293
        %v3325 = vpop.permute.xlu0 %3324
        %v3326 = vlaneseq
        %v3327 = vshrl.u32 %v3326, 7
        %v3328 = vsub.s32 %v3055, %v3327
        %v3329 = vrot.slane %v3304, %v3328
        %v3330 = vlaneseq
        %v3331 = vshrl.u32 %v3330, 7
        %v3332 = vsub.s32 %v3055, %v3331
        %v3333 = vrot.slane %v3307, %v3332
        %v3334 = vlaneseq
        %v3335 = vshrl.u32 %v3334, 7
        %v3336 = vsub.s32 %v3055, %v3335
        %v3337 = vrot.slane %v3310, %v3336
        %v3338 = vlaneseq
        %v3339 = vshrl.u32 %v3338, 7
        %v3340 = vsub.s32 %v3055, %v3339
        %v3341 = vrot.slane %v3313, %v3340
        %v3342 = vlaneseq
        %v3343 = vshrl.u32 %v3342, 7
        %v3344 = vsub.s32 %v3055, %v3343
        %v3345 = vrot.slane %v3316, %v3344
        %v3346 = vlaneseq
        %v3347 = vshrl.u32 %v3346, 7
        %v3348 = vsub.s32 %v3055, %v3347
        %v3349 = vrot.slane %v3319, %v3348
        %v3350 = vlaneseq
        %v3351 = vshrl.u32 %v3350, 7
        %v3352 = vsub.s32 %v3055, %v3351
        %v3353 = vrot.slane %v3322, %v3352
        %v3354 = vlaneseq
        %v3355 = vshrl.u32 %v3354, 7
        %v3356 = vsub.s32 %v3055, %v3355
        %v3357 = vrot.slane %v3325, %v3356
        %v3358 = vsel %vm1820, %v3333, %v3329
        %v3359 = vsel %vm1822, %v3337, %v3358
        %v3360 = vsel %vm1824, %v3341, %v3359
        %v3361 = vsel %vm2668, %v3345, %v3360
        %v3362 = vsel %vm2670, %v3349, %v3361
        %v3363 = vsel %vm2672, %v3353, %v3362
        %v3364 = vsel %vm2674, %v3357, %v3363
        %v3366 = vadd.f32 %v3216, %v3364
        %v3367 = vadd.f32 %v3217, %v3364
        %v3368 = vadd.f32 %v3218, %v3364
        %v3369 = vadd.f32 %v3219, %v3364
        %v3370 = vsel %vm1826, %v3366, -inf
        %3371 = vmax.xlane.f32.xlu0 %v3370
        %v3372 = vpop.xlane.xlu0 %3371
        %v3373 = vsel %vm1826, %v3367, -inf
        %3374 = vmax.xlane.f32.xlu0 %v3373
        %v3375 = vpop.xlane.xlu0 %3374
        %v3376 = vsel %vm1826, %v3368, -inf
        %3377 = vmax.xlane.f32.xlu0 %v3376
        %v3378 = vpop.xlane.xlu0 %3377
        %v3379 = vsel %vm1826, %v3369, -inf
        %3380 = vmax.xlane.f32.xlu0 %v3379
        %v3381 = vpop.xlane.xlu0 %3380
        %v3382 = vsub.f32 %v3366, %v3372
        %v3383 = vsub.f32 %v3367, %v3375
        %v3384 = vsub.f32 %v3368, %v3378
        %v3385 = vsub.f32 %v3369, %v3381
        %v3386 = vmul.f32 %v3382, 1.442695
        %v3387 = vpow.pop %v3386
        %v3388 = vmul.f32 %v3383, 1.442695
        %v3389 = vpow.pop %v3388
        %v3390 = vmul.f32 %v3384, 1.442695
        %v3391 = vpow.pop %v3390
        %v3392 = vmul.f32 %v3385, 1.442695
        %v3393 = vpow.pop %v3392
        %v3394 = vsel %vm1826, %v3387, 0.0
        %3395 = vadd.xlane.f32.xlu0 %v3394
        %v3396 = vpop.xlane.xlu0 %3395
        %v3397 = vsel %vm1826, %v3389, 0.0
        %3398 = vadd.xlane.f32.xlu0 %v3397
        %v3399 = vpop.xlane.xlu0 %3398
        %v3400 = vsel %vm1826, %v3391, 0.0
        %3401 = vadd.xlane.f32.xlu0 %v3400
        %v3402 = vpop.xlane.xlu0 %3401
        %v3403 = vsel %vm1826, %v3393, 0.0
        %3404 = vadd.xlane.f32.xlu0 %v3403
        %v3405 = vpop.xlane.xlu0 %3404
        %v3406 = vrcp.pop %v3396
        %v3407 = vrcp.pop %v3399
        %v3408 = vrcp.pop %v3402
        %v3409 = vrcp.pop %v3405
        %v3410 = vmul.f32 %v3387, %v3406
        %v3411 = vmul.f32 %v3389, %v3407
        %v3412 = vmul.f32 %v3391, %v3408
        %v3413 = vmul.f32 %v3393, %v3409
        %v3418 = vrot.slane %v3410, 1
        %v3419 = vrot.slane %v3411, 1
        %v3420 = vrot.slane %v3412, 1
        %v3421 = vrot.slane %v3413, 1
        %v3422 = vrot.slane %v3410, 2
        %v3423 = vrot.slane %v3411, 2
        %v3424 = vrot.slane %v3412, 2
        %v3425 = vrot.slane %v3413, 2
        %v3426 = vrot.slane %v3410, 3
        %v3427 = vrot.slane %v3411, 3
        %v3428 = vrot.slane %v3412, 3
        %v3429 = vrot.slane %v3413, 3
        %v3430 = vrot.slane %v3410, 4
        %v3431 = vrot.slane %v3411, 4
        %v3432 = vrot.slane %v3412, 4
        %v3433 = vrot.slane %v3413, 4
        %v3434 = vrot.slane %v3410, 5
        %v3435 = vrot.slane %v3411, 5
        %v3436 = vrot.slane %v3412, 5
        %v3437 = vrot.slane %v3413, 5
        %v3438 = vrot.slane %v3410, 6
        %v3439 = vrot.slane %v3411, 6
        %v3440 = vrot.slane %v3412, 6
        %v3441 = vrot.slane %v3413, 6
        %v3442 = vrot.slane %v3410, 7
        %v3443 = vrot.slane %v3411, 7
        %v3444 = vrot.slane %v3412, 7
        %v3445 = vrot.slane %v3413, 7
        %v3446 = vsel %vm1820, %v3443, %v3410
        %v3447 = vsel %vm1822, %v3440, %v3446
        %v3448 = vsel %vm1824, %v3437, %v3447
        %v3449 = vsel %vm1826, %v3448, 0
        %3451 = vmatprep.subr.mxu0 0.0
        %3452 = vmatpush1.msra.mxu0 %v1772
        %3453 = vmatprep.subr.mxu0 0.0
        %3454 = vmatpush1.msra.mxu0 0.0
        %3455 = vmatprep.subr.mxu0 0.0
        %3456 = vmatpush1.msra.mxu0 0.0
        %3457 = vmatprep.subr.mxu0 0.0
        %3458 = vmatpush1.msra.mxu0 0.0
        %3459 = vmatprep.subr.mxu0 0.0
        %3460 = vmatpush1.msra.mxu0 0.0
        %3461 = vmatprep.subr.mxu0 0.0
        %3462 = vmatpush1.msra.mxu0 0.0
        %3463 = vmatprep.subr.mxu0 0.0
        %3464 = vmatpush1.msra.mxu0 0.0
        %3465 = vmatprep.subr.mxu0 0.0
        %3466 = vmatpush1.msra.mxu0 0.0
        %3467 = vmatprep.subr.mxu0 0.0
        %3468 = vmatpush1.msra.mxu0 0.0
        %3469 = vmatprep.subr.mxu0 0.0
        %3470 = vmatpush1.msra.mxu0 0.0
        %3471 = vmatprep.subr.mxu0 0.0
        %3472 = vmatpush1.msra.mxu0 0.0
        %3473 = vmatprep.subr.mxu0 0.0
        %3474 = vmatpush1.msra.mxu0 0.0
        %3475 = vmatprep.subr.mxu0 0.0
        %3476 = vmatpush1.msra.mxu0 0.0
        %3477 = vmatprep.subr.mxu0 0.0
        %3478 = vmatpush1.msra.mxu0 0.0
        %3479 = vmatprep.subr.mxu0 0.0
        %3480 = vmatpush1.msra.mxu0 0.0
        %3481 = vmatprep.subr.mxu0 0.0
        %3482 = vmatpush1.msra.mxu0 0.0
        %3483 = vmatprep.subr.mxu0 0.0
        %3484 = vmatpush1.msra.mxu0 0.0
        %3485 = vmatprep.subr.mxu0 0.0
        %3486 = vmatpush1.msra.mxu0 0.0
        %3487 = vmatprep.subr.mxu0 0.0
        %3488 = vmatpush1.msra.mxu0 0.0
        %3489 = vmatprep.subr.mxu0 0.0
        %3490 = vmatpush1.msra.mxu0 0.0
        %3491 = vmatprep.subr.mxu0 0.0
        %3492 = vmatpush1.msra.mxu0 0.0
        %3493 = vmatprep.subr.mxu0 0.0
        %3494 = vmatpush1.msra.mxu0 0.0
        %3495 = vmatprep.subr.mxu0 0.0
        %3496 = vmatpush1.msra.mxu0 0.0
        %3497 = vmatprep.subr.mxu0 0.0
        %3498 = vmatpush1.msra.mxu0 0.0
        %3499 = vmatprep.subr.mxu0 0.0
        %3500 = vmatpush1.msra.mxu0 0.0
        %3501 = vmatprep.subr.mxu0 0.0
        %3502 = vmatpush1.msra.mxu0 0.0
        %3503 = vmatprep.subr.mxu0 0.0
        %3504 = vmatpush1.msra.mxu0 0.0
        %3505 = vmatprep.subr.mxu0 0.0
        %3506 = vmatpush1.msra.mxu0 0.0
        %3507 = vmatprep.subr.mxu0 0.0
        %3508 = vmatpush1.msra.mxu0 0.0
        %3509 = vmatprep.subr.mxu0 0.0
        %3510 = vmatpush1.msra.mxu0 0.0
        %3511 = vmatprep.subr.mxu0 0.0
        %3512 = vmatpush1.msra.mxu0 0.0
        %3513 = vmatprep.subr.mxu0 0.0
        %3514 = vmatpush1.msra.mxu0 0.0
        %3515 = vmatprep.mubr.f32.mxu0 0.0
        %3516 = vmatmul.mubr.f32.gmra.mrb[0].mxu0 %v3449
        %v3517 = vpop.f32.mrb[0].mxu0
        %v3518 = vadd.f32 0.0, %v3517
        %v3519 = vpop.f32.mrb[0].mxu0
        %3520 = vdwg.mxu0
        %v3521 = vrot.slane %v3419, 7
        %v3522 = vsel %vm1820, %v3521, %v3418
        %v3523 = vrot.slane %v3420, 6
        %v3524 = vsel %vm1822, %v3523, %v3522
        %v3525 = vrot.slane %v3421, 5
        %v3526 = vsel %vm1824, %v3525, %v3524
        %v3527 = vsel %vm1826, %v3526, 0
        %3529 = vmatprep.subr.mxu0 0.0
        %3530 = vmatpush1.msra.mxu0 %v1773
        %3531 = vmatprep.subr.mxu0 0.0
        %3532 = vmatpush1.msra.mxu0 0.0
        %3533 = vmatprep.subr.mxu0 0.0
        %3534 = vmatpush1.msra.mxu0 0.0
        %3535 = vmatprep.subr.mxu0 0.0
        %3536 = vmatpush1.msra.mxu0 0.0
        %3537 = vmatprep.subr.mxu0 0.0
        %3538 = vmatpush1.msra.mxu0 0.0
        %3539 = vmatprep.subr.mxu0 0.0
        %3540 = vmatpush1.msra.mxu0 0.0
        %3541 = vmatprep.subr.mxu0 0.0
        %3542 = vmatpush1.msra.mxu0 0.0
        %3543 = vmatprep.subr.mxu0 0.0
        %3544 = vmatpush1.msra.mxu0 0.0
        %3545 = vmatprep.subr.mxu0 0.0
        %3546 = vmatpush1.msra.mxu0 0.0
        %3547 = vmatprep.subr.mxu0 0.0
        %3548 = vmatpush1.msra.mxu0 0.0
        %3549 = vmatprep.subr.mxu0 0.0
        %3550 = vmatpush1.msra.mxu0 0.0
        %3551 = vmatprep.subr.mxu0 0.0
        %3552 = vmatpush1.msra.mxu0 0.0
        %3553 = vmatprep.subr.mxu0 0.0
        %3554 = vmatpush1.msra.mxu0 0.0
        %3555 = vmatprep.subr.mxu0 0.0
        %3556 = vmatpush1.msra.mxu0 0.0
        %3557 = vmatprep.subr.mxu0 0.0
        %3558 = vmatpush1.msra.mxu0 0.0
        %3559 = vmatprep.subr.mxu0 0.0
        %3560 = vmatpush1.msra.mxu0 0.0
        %3561 = vmatprep.subr.mxu0 0.0
        %3562 = vmatpush1.msra.mxu0 0.0
        %3563 = vmatprep.subr.mxu0 0.0
        %3564 = vmatpush1.msra.mxu0 0.0
        %3565 = vmatprep.subr.mxu0 0.0
        %3566 = vmatpush1.msra.mxu0 0.0
        %3567 = vmatprep.subr.mxu0 0.0
        %3568 = vmatpush1.msra.mxu0 0.0
        %3569 = vmatprep.subr.mxu0 0.0
        %3570 = vmatpush1.msra.mxu0 0.0
        %3571 = vmatprep.subr.mxu0 0.0
        %3572 = vmatpush1.msra.mxu0 0.0
        %3573 = vmatprep.subr.mxu0 0.0
        %3574 = vmatpush1.msra.mxu0 0.0
        %3575 = vmatprep.subr.mxu0 0.0
        %3576 = vmatpush1.msra.mxu0 0.0
        %3577 = vmatprep.subr.mxu0 0.0
        %3578 = vmatpush1.msra.mxu0 0.0
        %3579 = vmatprep.subr.mxu0 0.0
        %3580 = vmatpush1.msra.mxu0 0.0
        %3581 = vmatprep.subr.mxu0 0.0
        %3582 = vmatpush1.msra.mxu0 0.0
        %3583 = vmatprep.subr.mxu0 0.0
        %3584 = vmatpush1.msra.mxu0 0.0
        %3585 = vmatprep.subr.mxu0 0.0
        %3586 = vmatpush1.msra.mxu0 0.0
        %3587 = vmatprep.subr.mxu0 0.0
        %3588 = vmatpush1.msra.mxu0 0.0
        %3589 = vmatprep.subr.mxu0 0.0
        %3590 = vmatpush1.msra.mxu0 0.0
        %3591 = vmatprep.subr.mxu0 0.0
        %3592 = vmatpush1.msra.mxu0 0.0
        %3593 = vmatprep.mubr.f32.mxu0 0.0
        %3594 = vmatmul.mubr.f32.gmra.mrb[0].mxu0 %v3527
        %v3595 = vpop.f32.mrb[0].mxu0
        %v3596 = vadd.f32 0.0, %v3595
        %v3597 = vpop.f32.mrb[0].mxu0
        %3598 = vdwg.mxu0
        %v3599 = vrot.slane %v3423, 7
        %v3600 = vsel %vm1820, %v3599, %v3422
        %v3601 = vrot.slane %v3424, 6
        %v3602 = vsel %vm1822, %v3601, %v3600
        %v3603 = vrot.slane %v3425, 5
        %v3604 = vsel %vm1824, %v3603, %v3602
        %v3605 = vsel %vm1826, %v3604, 0
        %3607 = vmatprep.subr.mxu0 0.0
        %3608 = vmatpush1.msra.mxu0 %v1774
        %3609 = vmatprep.subr.mxu0 0.0
        %3610 = vmatpush1.msra.mxu0 0.0
        %3611 = vmatprep.subr.mxu0 0.0
        %3612 = vmatpush1.msra.mxu0 0.0
        %3613 = vmatprep.subr.mxu0 0.0
        %3614 = vmatpush1.msra.mxu0 0.0
        %3615 = vmatprep.subr.mxu0 0.0
        %3616 = vmatpush1.msra.mxu0 0.0
        %3617 = vmatprep.subr.mxu0 0.0
        %3618 = vmatpush1.msra.mxu0 0.0
        %3619 = vmatprep.subr.mxu0 0.0
        %3620 = vmatpush1.msra.mxu0 0.0
        %3621 = vmatprep.subr.mxu0 0.0
        %3622 = vmatpush1.msra.mxu0 0.0
        %3623 = vmatprep.subr.mxu0 0.0
        %3624 = vmatpush1.msra.mxu0 0.0
        %3625 = vmatprep.subr.mxu0 0.0
        %3626 = vmatpush1.msra.mxu0 0.0
        %3627 = vmatprep.subr.mxu0 0.0
        %3628 = vmatpush1.msra.mxu0 0.0
        %3629 = vmatprep.subr.mxu0 0.0
        %3630 = vmatpush1.msra.mxu0 0.0
        %3631 = vmatprep.subr.mxu0 0.0
        %3632 = vmatpush1.msra.mxu0 0.0
        %3633 = vmatprep.subr.mxu0 0.0
        %3634 = vmatpush1.msra.mxu0 0.0
        %3635 = vmatprep.subr.mxu0 0.0
        %3636 = vmatpush1.msra.mxu0 0.0
        %3637 = vmatprep.subr.mxu0 0.0
        %3638 = vmatpush1.msra.mxu0 0.0
        %3639 = vmatprep.subr.mxu0 0.0
        %3640 = vmatpush1.msra.mxu0 0.0
        %3641 = vmatprep.subr.mxu0 0.0
        %3642 = vmatpush1.msra.mxu0 0.0
        %3643 = vmatprep.subr.mxu0 0.0
        %3644 = vmatpush1.msra.mxu0 0.0
        %3645 = vmatprep.subr.mxu0 0.0
        %3646 = vmatpush1.msra.mxu0 0.0
        %3647 = vmatprep.subr.mxu0 0.0
        %3648 = vmatpush1.msra.mxu0 0.0
        %3649 = vmatprep.subr.mxu0 0.0
        %3650 = vmatpush1.msra.mxu0 0.0
        %3651 = vmatprep.subr.mxu0 0.0
        %3652 = vmatpush1.msra.mxu0 0.0
        %3653 = vmatprep.subr.mxu0 0.0
        %3654 = vmatpush1.msra.mxu0 0.0
        %3655 = vmatprep.subr.mxu0 0.0
        %3656 = vmatpush1.msra.mxu0 0.0
        %3657 = vmatprep.subr.mxu0 0.0
        %3658 = vmatpush1.msra.mxu0 0.0
        %3659 = vmatprep.subr.mxu0 0.0
        %3660 = vmatpush1.msra.mxu0 0.0
        %3661 = vmatprep.subr.mxu0 0.0
        %3662 = vmatpush1.msra.mxu0 0.0
        %3663 = vmatprep.subr.mxu0 0.0
        %3664 = vmatpush1.msra.mxu0 0.0
        %3665 = vmatprep.subr.mxu0 0.0
        %3666 = vmatpush1.msra.mxu0 0.0
        %3667 = vmatprep.subr.mxu0 0.0
        %3668 = vmatpush1.msra.mxu0 0.0
        %3669 = vmatprep.subr.mxu0 0.0
        %3670 = vmatpush1.msra.mxu0 0.0
        %3671 = vmatprep.mubr.f32.mxu0 0.0
        %3672 = vmatmul.mubr.f32.gmra.mrb[0].mxu0 %v3605
        %v3673 = vpop.f32.mrb[0].mxu0
        %v3674 = vadd.f32 0.0, %v3673
        %v3675 = vpop.f32.mrb[0].mxu0
        %3676 = vdwg.mxu0
        %v3677 = vrot.slane %v3427, 7
        %v3678 = vsel %vm1820, %v3677, %v3426
        %v3679 = vrot.slane %v3428, 6
        %v3680 = vsel %vm1822, %v3679, %v3678
        %v3681 = vrot.slane %v3429, 5
        %v3682 = vsel %vm1824, %v3681, %v3680
        %v3683 = vsel %vm1826, %v3682, 0
        %3685 = vmatprep.subr.mxu0 0.0
        %3686 = vmatpush1.msra.mxu0 %v1775
        %3687 = vmatprep.subr.mxu0 0.0
        %3688 = vmatpush1.msra.mxu0 0.0
        %3689 = vmatprep.subr.mxu0 0.0
        %3690 = vmatpush1.msra.mxu0 0.0
        %3691 = vmatprep.subr.mxu0 0.0
        %3692 = vmatpush1.msra.mxu0 0.0
        %3693 = vmatprep.subr.mxu0 0.0
        %3694 = vmatpush1.msra.mxu0 0.0
        %3695 = vmatprep.subr.mxu0 0.0
        %3696 = vmatpush1.msra.mxu0 0.0
        %3697 = vmatprep.subr.mxu0 0.0
        %3698 = vmatpush1.msra.mxu0 0.0
        %3699 = vmatprep.subr.mxu0 0.0
        %3700 = vmatpush1.msra.mxu0 0.0
        %3701 = vmatprep.subr.mxu0 0.0
        %3702 = vmatpush1.msra.mxu0 0.0
        %3703 = vmatprep.subr.mxu0 0.0
        %3704 = vmatpush1.msra.mxu0 0.0
        %3705 = vmatprep.subr.mxu0 0.0
        %3706 = vmatpush1.msra.mxu0 0.0
        %3707 = vmatprep.subr.mxu0 0.0
        %3708 = vmatpush1.msra.mxu0 0.0
        %3709 = vmatprep.subr.mxu0 0.0
        %3710 = vmatpush1.msra.mxu0 0.0
        %3711 = vmatprep.subr.mxu0 0.0
        %3712 = vmatpush1.msra.mxu0 0.0
        %3713 = vmatprep.subr.mxu0 0.0
        %3714 = vmatpush1.msra.mxu0 0.0
        %3715 = vmatprep.subr.mxu0 0.0
        %3716 = vmatpush1.msra.mxu0 0.0
        %3717 = vmatprep.subr.mxu0 0.0
        %3718 = vmatpush1.msra.mxu0 0.0
        %3719 = vmatprep.subr.mxu0 0.0
        %3720 = vmatpush1.msra.mxu0 0.0
        %3721 = vmatprep.subr.mxu0 0.0
        %3722 = vmatpush1.msra.mxu0 0.0
        %3723 = vmatprep.subr.mxu0 0.0
        %3724 = vmatpush1.msra.mxu0 0.0
        %3725 = vmatprep.subr.mxu0 0.0
        %3726 = vmatpush1.msra.mxu0 0.0
        %3727 = vmatprep.subr.mxu0 0.0
        %3728 = vmatpush1.msra.mxu0 0.0
        %3729 = vmatprep.subr.mxu0 0.0
        %3730 = vmatpush1.msra.mxu0 0.0
        %3731 = vmatprep.subr.mxu0 0.0
        %3732 = vmatpush1.msra.mxu0 0.0
        %3733 = vmatprep.subr.mxu0 0.0
        %3734 = vmatpush1.msra.mxu0 0.0
        %3735 = vmatprep.subr.mxu0 0.0
        %3736 = vmatpush1.msra.mxu0 0.0
        %3737 = vmatprep.subr.mxu0 0.0
        %3738 = vmatpush1.msra.mxu0 0.0
        %3739 = vmatprep.subr.mxu0 0.0
        %3740 = vmatpush1.msra.mxu0 0.0
        %3741 = vmatprep.subr.mxu0 0.0
        %3742 = vmatpush1.msra.mxu0 0.0
        %3743 = vmatprep.subr.mxu0 0.0
        %3744 = vmatpush1.msra.mxu0 0.0
        %3745 = vmatprep.subr.mxu0 0.0
        %3746 = vmatpush1.msra.mxu0 0.0
        %3747 = vmatprep.subr.mxu0 0.0
        %3748 = vmatpush1.msra.mxu0 0.0
        %3749 = vmatprep.mubr.f32.mxu0 0.0
        %3750 = vmatmul.mubr.f32.gmra.mrb[0].mxu0 %v3683
        %v3751 = vpop.f32.mrb[0].mxu0
        %v3752 = vadd.f32 0.0, %v3751
        %v3753 = vpop.f32.mrb[0].mxu0
        %3754 = vdwg.mxu0
        %v3755 = vrot.slane %v3431, 7
        %v3756 = vsel %vm1820, %v3755, %v3430
        %v3757 = vrot.slane %v3432, 6
        %v3758 = vsel %vm1822, %v3757, %v3756
        %v3759 = vrot.slane %v3433, 5
        %v3760 = vsel %vm1824, %v3759, %v3758
        %v3761 = vsel %vm1826, %v3760, 0
        %3763 = vmatprep.subr.mxu0 0.0
        %3764 = vmatpush1.msra.mxu0 %v1776
        %3765 = vmatprep.subr.mxu0 0.0
        %3766 = vmatpush1.msra.mxu0 0.0
        %3767 = vmatprep.subr.mxu0 0.0
        %3768 = vmatpush1.msra.mxu0 0.0
        %3769 = vmatprep.subr.mxu0 0.0
        %3770 = vmatpush1.msra.mxu0 0.0
        %3771 = vmatprep.subr.mxu0 0.0
        %3772 = vmatpush1.msra.mxu0 0.0
        %3773 = vmatprep.subr.mxu0 0.0
        %3774 = vmatpush1.msra.mxu0 0.0
        %3775 = vmatprep.subr.mxu0 0.0
        %3776 = vmatpush1.msra.mxu0 0.0
        %3777 = vmatprep.subr.mxu0 0.0
        %3778 = vmatpush1.msra.mxu0 0.0
        %3779 = vmatprep.subr.mxu0 0.0
        %3780 = vmatpush1.msra.mxu0 0.0
        %3781 = vmatprep.subr.mxu0 0.0
        %3782 = vmatpush1.msra.mxu0 0.0
        %3783 = vmatprep.subr.mxu0 0.0
        %3784 = vmatpush1.msra.mxu0 0.0
        %3785 = vmatprep.subr.mxu0 0.0
        %3786 = vmatpush1.msra.mxu0 0.0
        %3787 = vmatprep.subr.mxu0 0.0
        %3788 = vmatpush1.msra.mxu0 0.0
        %3789 = vmatprep.subr.mxu0 0.0
        %3790 = vmatpush1.msra.mxu0 0.0
        %3791 = vmatprep.subr.mxu0 0.0
        %3792 = vmatpush1.msra.mxu0 0.0
        %3793 = vmatprep.subr.mxu0 0.0
        %3794 = vmatpush1.msra.mxu0 0.0
        %3795 = vmatprep.subr.mxu0 0.0
        %3796 = vmatpush1.msra.mxu0 0.0
        %3797 = vmatprep.subr.mxu0 0.0
        %3798 = vmatpush1.msra.mxu0 0.0
        %3799 = vmatprep.subr.mxu0 0.0
        %3800 = vmatpush1.msra.mxu0 0.0
        %3801 = vmatprep.subr.mxu0 0.0
        %3802 = vmatpush1.msra.mxu0 0.0
        %3803 = vmatprep.subr.mxu0 0.0
        %3804 = vmatpush1.msra.mxu0 0.0
        %3805 = vmatprep.subr.mxu0 0.0
        %3806 = vmatpush1.msra.mxu0 0.0
        %3807 = vmatprep.subr.mxu0 0.0
        %3808 = vmatpush1.msra.mxu0 0.0
        %3809 = vmatprep.subr.mxu0 0.0
        %3810 = vmatpush1.msra.mxu0 0.0
        %3811 = vmatprep.subr.mxu0 0.0
        %3812 = vmatpush1.msra.mxu0 0.0
        %3813 = vmatprep.subr.mxu0 0.0
        %3814 = vmatpush1.msra.mxu0 0.0
        %3815 = vmatprep.subr.mxu0 0.0
        %3816 = vmatpush1.msra.mxu0 0.0
        %3817 = vmatprep.subr.mxu0 0.0
        %3818 = vmatpush1.msra.mxu0 0.0
        %3819 = vmatprep.subr.mxu0 0.0
        %3820 = vmatpush1.msra.mxu0 0.0
        %3821 = vmatprep.subr.mxu0 0.0
        %3822 = vmatpush1.msra.mxu0 0.0
        %3823 = vmatprep.subr.mxu0 0.0
        %3824 = vmatpush1.msra.mxu0 0.0
        %3825 = vmatprep.subr.mxu0 0.0
        %3826 = vmatpush1.msra.mxu0 0.0
        %3827 = vmatprep.mubr.f32.mxu0 0.0
        %3828 = vmatmul.mubr.f32.gmra.mrb[0].mxu0 %v3761
        %v3829 = vpop.f32.mrb[0].mxu0
        %v3830 = vadd.f32 0.0, %v3829
        %v3831 = vpop.f32.mrb[0].mxu0
        %3832 = vdwg.mxu0
        %v3833 = vrot.slane %v3435, 7
        %v3834 = vsel %vm1820, %v3833, %v3434
        %v3835 = vrot.slane %v3436, 6
        %v3836 = vsel %vm1822, %v3835, %v3834
        %v3837 = vrot.slane %v3437, 5
        %v3838 = vsel %vm1824, %v3837, %v3836
        %v3839 = vsel %vm1826, %v3838, 0
        %3841 = vmatprep.subr.mxu0 0.0
        %3842 = vmatpush1.msra.mxu0 %v1777
        %3843 = vmatprep.subr.mxu0 0.0
        %3844 = vmatpush1.msra.mxu0 0.0
        %3845 = vmatprep.subr.mxu0 0.0
        %3846 = vmatpush1.msra.mxu0 0.0
        %3847 = vmatprep.subr.mxu0 0.0
        %3848 = vmatpush1.msra.mxu0 0.0
        %3849 = vmatprep.subr.mxu0 0.0
        %3850 = vmatpush1.msra.mxu0 0.0
        %3851 = vmatprep.subr.mxu0 0.0
        %3852 = vmatpush1.msra.mxu0 0.0
        %3853 = vmatprep.subr.mxu0 0.0
        %3854 = vmatpush1.msra.mxu0 0.0
        %3855 = vmatprep.subr.mxu0 0.0
        %3856 = vmatpush1.msra.mxu0 0.0
        %3857 = vmatprep.subr.mxu0 0.0
        %3858 = vmatpush1.msra.mxu0 0.0
        %3859 = vmatprep.subr.mxu0 0.0
        %3860 = vmatpush1.msra.mxu0 0.0
        %3861 = vmatprep.subr.mxu0 0.0
        %3862 = vmatpush1.msra.mxu0 0.0
        %3863 = vmatprep.subr.mxu0 0.0
        %3864 = vmatpush1.msra.mxu0 0.0
        %3865 = vmatprep.subr.mxu0 0.0
        %3866 = vmatpush1.msra.mxu0 0.0
        %3867 = vmatprep.subr.mxu0 0.0
        %3868 = vmatpush1.msra.mxu0 0.0
        %3869 = vmatprep.subr.mxu0 0.0
        %3870 = vmatpush1.msra.mxu0 0.0
        %3871 = vmatprep.subr.mxu0 0.0
        %3872 = vmatpush1.msra.mxu0 0.0
        %3873 = vmatprep.subr.mxu0 0.0
        %3874 = vmatpush1.msra.mxu0 0.0
        %3875 = vmatprep.subr.mxu0 0.0
        %3876 = vmatpush1.msra.mxu0 0.0
        %3877 = vmatprep.subr.mxu0 0.0
        %3878 = vmatpush1.msra.mxu0 0.0
        %3879 = vmatprep.subr.mxu0 0.0
        %3880 = vmatpush1.msra.mxu0 0.0
        %3881 = vmatprep.subr.mxu0 0.0
        %3882 = vmatpush1.msra.mxu0 0.0
        %3883 = vmatprep.subr.mxu0 0.0
        %3884 = vmatpush1.msra.mxu0 0.0
        %3885 = vmatprep.subr.mxu0 0.0
        %3886 = vmatpush1.msra.mxu0 0.0
        %3887 = vmatprep.subr.mxu0 0.0
        %3888 = vmatpush1.msra.mxu0 0.0
        %3889 = vmatprep.subr.mxu0 0.0
        %3890 = vmatpush1.msra.mxu0 0.0
        %3891 = vmatprep.subr.mxu0 0.0
        %3892 = vmatpush1.msra.mxu0 0.0
        %3893 = vmatprep.subr.mxu0 0.0
        %3894 = vmatpush1.msra.mxu0 0.0
        %3895 = vmatprep.subr.mxu0 0.0
        %3896 = vmatpush1.msra.mxu0 0.0
        %3897 = vmatprep.subr.mxu0 0.0
        %3898 = vmatpush1.msra.mxu0 0.0
        %3899 = vmatprep.subr.mxu0 0.0
        %3900 = vmatpush1.msra.mxu0 0.0
        %3901 = vmatprep.subr.mxu0 0.0
        %3902 = vmatpush1.msra.mxu0 0.0
        %3903 = vmatprep.subr.mxu0 0.0
        %3904 = vmatpush1.msra.mxu0 0.0
        %3905 = vmatprep.mubr.f32.mxu0 0.0
        %3906 = vmatmul.mubr.f32.gmra.mrb[0].mxu0 %v3839
        %v3907 = vpop.f32.mrb[0].mxu0
        %v3908 = vadd.f32 0.0, %v3907
        %v3909 = vpop.f32.mrb[0].mxu0
        %3910 = vdwg.mxu0
        %v3911 = vrot.slane %v3439, 7
        %v3912 = vsel %vm1820, %v3911, %v3438
        %v3913 = vrot.slane %v3440, 6
        %v3914 = vsel %vm1822, %v3913, %v3912
        %v3915 = vrot.slane %v3441, 5
        %v3916 = vsel %vm1824, %v3915, %v3914
        %v3917 = vsel %vm1826, %v3916, 0
        %3919 = vmatprep.subr.mxu0 0.0
        %3920 = vmatpush1.msra.mxu0 %v1778
        %3921 = vmatprep.subr.mxu0 0.0
        %3922 = vmatpush1.msra.mxu0 0.0
        %3923 = vmatprep.subr.mxu0 0.0
        %3924 = vmatpush1.msra.mxu0 0.0
        %3925 = vmatprep.subr.mxu0 0.0
        %3926 = vmatpush1.msra.mxu0 0.0
        %3927 = vmatprep.subr.mxu0 0.0
        %3928 = vmatpush1.msra.mxu0 0.0
        %3929 = vmatprep.subr.mxu0 0.0
        %3930 = vmatpush1.msra.mxu0 0.0
        %3931 = vmatprep.subr.mxu0 0.0
        %3932 = vmatpush1.msra.mxu0 0.0
        %3933 = vmatprep.subr.mxu0 0.0
        %3934 = vmatpush1.msra.mxu0 0.0
        %3935 = vmatprep.subr.mxu0 0.0
        %3936 = vmatpush1.msra.mxu0 0.0
        %3937 = vmatprep.subr.mxu0 0.0
        %3938 = vmatpush1.msra.mxu0 0.0
        %3939 = vmatprep.subr.mxu0 0.0
        %3940 = vmatpush1.msra.mxu0 0.0
        %3941 = vmatprep.subr.mxu0 0.0
        %3942 = vmatpush1.msra.mxu0 0.0
        %3943 = vmatprep.subr.mxu0 0.0
        %3944 = vmatpush1.msra.mxu0 0.0
        %3945 = vmatprep.subr.mxu0 0.0
        %3946 = vmatpush1.msra.mxu0 0.0
        %3947 = vmatprep.subr.mxu0 0.0
        %3948 = vmatpush1.msra.mxu0 0.0
        %3949 = vmatprep.subr.mxu0 0.0
        %3950 = vmatpush1.msra.mxu0 0.0
        %3951 = vmatprep.subr.mxu0 0.0
        %3952 = vmatpush1.msra.mxu0 0.0
        %3953 = vmatprep.subr.mxu0 0.0
        %3954 = vmatpush1.msra.mxu0 0.0
        %3955 = vmatprep.subr.mxu0 0.0
        %3956 = vmatpush1.msra.mxu0 0.0
        %3957 = vmatprep.subr.mxu0 0.0
        %3958 = vmatpush1.msra.mxu0 0.0
        %3959 = vmatprep.subr.mxu0 0.0
        %3960 = vmatpush1.msra.mxu0 0.0
        %3961 = vmatprep.subr.mxu0 0.0
        %3962 = vmatpush1.msra.mxu0 0.0
        %3963 = vmatprep.subr.mxu0 0.0
        %3964 = vmatpush1.msra.mxu0 0.0
        %3965 = vmatprep.subr.mxu0 0.0
        %3966 = vmatpush1.msra.mxu0 0.0
        %3967 = vmatprep.subr.mxu0 0.0
        %3968 = vmatpush1.msra.mxu0 0.0
        %3969 = vmatprep.subr.mxu0 0.0
        %3970 = vmatpush1.msra.mxu0 0.0
        %3971 = vmatprep.subr.mxu0 0.0
        %3972 = vmatpush1.msra.mxu0 0.0
        %3973 = vmatprep.subr.mxu0 0.0
        %3974 = vmatpush1.msra.mxu0 0.0
        %3975 = vmatprep.subr.mxu0 0.0
        %3976 = vmatpush1.msra.mxu0 0.0
        %3977 = vmatprep.subr.mxu0 0.0
        %3978 = vmatpush1.msra.mxu0 0.0
        %3979 = vmatprep.subr.mxu0 0.0
        %3980 = vmatpush1.msra.mxu0 0.0
        %3981 = vmatprep.subr.mxu0 0.0
        %3982 = vmatpush1.msra.mxu0 0.0
        %3983 = vmatprep.mubr.f32.mxu0 0.0
        %3984 = vmatmul.mubr.f32.gmra.mrb[0].mxu0 %v3917
        %v3985 = vpop.f32.mrb[0].mxu0
        %v3986 = vadd.f32 0.0, %v3985
        %v3987 = vpop.f32.mrb[0].mxu0
        %3988 = vdwg.mxu0
        %v3989 = vrot.slane %v3443, 7
        %v3990 = vsel %vm1820, %v3989, %v3442
        %v3991 = vrot.slane %v3444, 6
        %v3992 = vsel %vm1822, %v3991, %v3990
        %v3993 = vrot.slane %v3445, 5
        %v3994 = vsel %vm1824, %v3993, %v3992
        %v3995 = vsel %vm1826, %v3994, 0
        %3997 = vmatprep.subr.mxu0 0.0
        %3998 = vmatpush1.msra.mxu0 %v1779
        %3999 = vmatprep.subr.mxu0 0.0
        %4000 = vmatpush1.msra.mxu0 0.0
        %4001 = vmatprep.subr.mxu0 0.0
        %4002 = vmatpush1.msra.mxu0 0.0
        %4003 = vmatprep.subr.mxu0 0.0
        %4004 = vmatpush1.msra.mxu0 0.0
        %4005 = vmatprep.subr.mxu0 0.0
        %4006 = vmatpush1.msra.mxu0 0.0
        %4007 = vmatprep.subr.mxu0 0.0
        %4008 = vmatpush1.msra.mxu0 0.0
        %4009 = vmatprep.subr.mxu0 0.0
        %4010 = vmatpush1.msra.mxu0 0.0
        %4011 = vmatprep.subr.mxu0 0.0
        %4012 = vmatpush1.msra.mxu0 0.0
        %4013 = vmatprep.subr.mxu0 0.0
        %4014 = vmatpush1.msra.mxu0 0.0
        %4015 = vmatprep.subr.mxu0 0.0
        %4016 = vmatpush1.msra.mxu0 0.0
        %4017 = vmatprep.subr.mxu0 0.0
        %4018 = vmatpush1.msra.mxu0 0.0
        %4019 = vmatprep.subr.mxu0 0.0
        %4020 = vmatpush1.msra.mxu0 0.0
        %4021 = vmatprep.subr.mxu0 0.0
        %4022 = vmatpush1.msra.mxu0 0.0
        %4023 = vmatprep.subr.mxu0 0.0
        %4024 = vmatpush1.msra.mxu0 0.0
        %4025 = vmatprep.subr.mxu0 0.0
        %4026 = vmatpush1.msra.mxu0 0.0
        %4027 = vmatprep.subr.mxu0 0.0
        %4028 = vmatpush1.msra.mxu0 0.0
        %4029 = vmatprep.subr.mxu0 0.0
        %4030 = vmatpush1.msra.mxu0 0.0
        %4031 = vmatprep.subr.mxu0 0.0
        %4032 = vmatpush1.msra.mxu0 0.0
        %4033 = vmatprep.subr.mxu0 0.0
        %4034 = vmatpush1.msra.mxu0 0.0
        %4035 = vmatprep.subr.mxu0 0.0
        %4036 = vmatpush1.msra.mxu0 0.0
        %4037 = vmatprep.subr.mxu0 0.0
        %4038 = vmatpush1.msra.mxu0 0.0
        %4039 = vmatprep.subr.mxu0 0.0
        %4040 = vmatpush1.msra.mxu0 0.0
        %4041 = vmatprep.subr.mxu0 0.0
        %4042 = vmatpush1.msra.mxu0 0.0
        %4043 = vmatprep.subr.mxu0 0.0
        %4044 = vmatpush1.msra.mxu0 0.0
        %4045 = vmatprep.subr.mxu0 0.0
        %4046 = vmatpush1.msra.mxu0 0.0
        %4047 = vmatprep.subr.mxu0 0.0
        %4048 = vmatpush1.msra.mxu0 0.0
        %4049 = vmatprep.subr.mxu0 0.0
        %4050 = vmatpush1.msra.mxu0 0.0
        %4051 = vmatprep.subr.mxu0 0.0
        %4052 = vmatpush1.msra.mxu0 0.0
        %4053 = vmatprep.subr.mxu0 0.0
        %4054 = vmatpush1.msra.mxu0 0.0
        %4055 = vmatprep.subr.mxu0 0.0
        %4056 = vmatpush1.msra.mxu0 0.0
        %4057 = vmatprep.subr.mxu0 0.0
        %4058 = vmatpush1.msra.mxu0 0.0
        %4059 = vmatprep.subr.mxu0 0.0
        %4060 = vmatpush1.msra.mxu0 0.0
        %4061 = vmatprep.mubr.f32.mxu0 0.0
        %4062 = vmatmul.mubr.f32.gmra.mrb[0].mxu0 %v3995
        %v4063 = vpop.f32.mrb[0].mxu0
        %v4064 = vadd.f32 0.0, %v4063
        %v4065 = vpop.f32.mrb[0].mxu0
        %4066 = vdwg.mxu0
        %v4075 = vrot.slane %v3518, 1
        %v4076 = vrot.slane %v3596, 1
        %v4077 = vrot.slane %v3674, 1
        %v4078 = vrot.slane %v3752, 1
        %v4079 = vrot.slane %v3830, 1
        %v4080 = vrot.slane %v3908, 1
        %v4081 = vrot.slane %v3986, 1
        %v4082 = vrot.slane %v4064, 1
        %v4083 = vrot.slane %v3518, 2
        %v4084 = vrot.slane %v3596, 2
        %v4085 = vrot.slane %v3674, 2
        %v4086 = vrot.slane %v3752, 2
        %v4087 = vrot.slane %v3830, 2
        %v4088 = vrot.slane %v3908, 2
        %v4089 = vrot.slane %v3986, 2
        %v4090 = vrot.slane %v4064, 2
        %v4091 = vrot.slane %v3518, 3
        %v4092 = vrot.slane %v3596, 3
        %v4093 = vrot.slane %v3674, 3
        %v4094 = vrot.slane %v3752, 3
        %v4095 = vrot.slane %v3830, 3
        %v4096 = vrot.slane %v3908, 3
        %v4097 = vrot.slane %v3986, 3
        %v4098 = vrot.slane %v4064, 3
        %v4099 = vrot.slane %v3596, 7
        %v4100 = vsel %vm1820, %v4099, %v3518
        %v4101 = vrot.slane %v3674, 6
        %v4102 = vsel %vm1822, %v4101, %v4100
        %v4103 = vrot.slane %v3752, 5
        %v4104 = vsel %vm1824, %v4103, %v4102
        %v4105 = vrot.slane %v3830, 4
        %v4106 = vsel %vm2668, %v4105, %v4104
        %v4107 = vsel %vm2670, %v4096, %v4106
        %v4108 = vsel %vm2672, %v4089, %v4107
        %v4109 = vsel %vm2674, %v4082, %v4108
        %v4111 = vsel %vm1826, %v3410, 0
        %4113 = vmatprep.subr.mxu0 0.0
        %4114 = vmatpush1.msra.mxu0 %v1551
        %4115 = vmatprep.subr.mxu0 0.0
        %4116 = vmatpush1.msra.mxu0 0.0
        %4117 = vmatprep.subr.mxu0 0.0
        %4118 = vmatpush1.msra.mxu0 0.0
        %4119 = vmatprep.subr.mxu0 0.0
        %4120 = vmatpush1.msra.mxu0 0.0
        %4121 = vmatprep.subr.mxu0 0.0
        %4122 = vmatpush1.msra.mxu0 0.0
        %4123 = vmatprep.subr.mxu0 0.0
        %4124 = vmatpush1.msra.mxu0 0.0
        %4125 = vmatprep.subr.mxu0 0.0
        %4126 = vmatpush1.msra.mxu0 0.0
        %4127 = vmatprep.subr.mxu0 0.0
        %4128 = vmatpush1.msra.mxu0 0.0
        %4129 = vmatprep.subr.mxu0 0.0
        %4130 = vmatpush1.msra.mxu0 0.0
        %4131 = vmatprep.subr.mxu0 0.0
        %4132 = vmatpush1.msra.mxu0 0.0
        %4133 = vmatprep.subr.mxu0 0.0
        %4134 = vmatpush1.msra.mxu0 0.0
        %4135 = vmatprep.subr.mxu0 0.0
        %4136 = vmatpush1.msra.mxu0 0.0
        %4137 = vmatprep.subr.mxu0 0.0
        %4138 = vmatpush1.msra.mxu0 0.0
        %4139 = vmatprep.subr.mxu0 0.0
        %4140 = vmatpush1.msra.mxu0 0.0
        %4141 = vmatprep.subr.mxu0 0.0
        %4142 = vmatpush1.msra.mxu0 0.0
        %4143 = vmatprep.subr.mxu0 0.0
        %4144 = vmatpush1.msra.mxu0 0.0
        %4145 = vmatprep.subr.mxu0 0.0
        %4146 = vmatpush1.msra.mxu0 0.0
        %4147 = vmatprep.subr.mxu0 0.0
        %4148 = vmatpush1.msra.mxu0 0.0
        %4149 = vmatprep.subr.mxu0 0.0
        %4150 = vmatpush1.msra.mxu0 0.0
        %4151 = vmatprep.subr.mxu0 0.0
        %4152 = vmatpush1.msra.mxu0 0.0
        %4153 = vmatprep.subr.mxu0 0.0
        %4154 = vmatpush1.msra.mxu0 0.0
        %4155 = vmatprep.subr.mxu0 0.0
        %4156 = vmatpush1.msra.mxu0 0.0
        %4157 = vmatprep.subr.mxu0 0.0
        %4158 = vmatpush1.msra.mxu0 0.0
        %4159 = vmatprep.subr.mxu0 0.0
        %4160 = vmatpush1.msra.mxu0 0.0
        %4161 = vmatprep.subr.mxu0 0.0
        %4162 = vmatpush1.msra.mxu0 0.0
        %4163 = vmatprep.subr.mxu0 0.0
        %4164 = vmatpush1.msra.mxu0 0.0
        %4165 = vmatprep.subr.mxu0 0.0
        %4166 = vmatpush1.msra.mxu0 0.0
        %4167 = vmatprep.subr.mxu0 0.0
        %4168 = vmatpush1.msra.mxu0 0.0
        %4169 = vmatprep.subr.mxu0 0.0
        %4170 = vmatpush1.msra.mxu0 0.0
        %4171 = vmatprep.subr.mxu0 0.0
        %4172 = vmatpush1.msra.mxu0 0.0
        %4173 = vmatprep.subr.mxu0 0.0
        %4174 = vmatpush1.msra.mxu0 0.0
        %4175 = vmatprep.subr.mxu0 0.0
        %4176 = vmatpush1.msra.mxu0 0.0
        %4177 = vmatprep.mubr.f32.mxu0 0.0
        %4178 = vmatmul.mubr.f32.gmra.mrb[0].mxu0 %v4111
        %v4179 = vpop.f32.mrb[0].mxu0
        %v4180 = vadd.f32 %v4109, %v4179
        %v4181 = vpop.f32.mrb[0].mxu0
        %4182 = vdwg.mxu0
        %v4183 = vrot.slane %v4076, 7
        %v4184 = vsel %vm1820, %v4183, %v4075
        %v4185 = vrot.slane %v4077, 6
        %v4186 = vsel %vm1822, %v4185, %v4184
        %v4187 = vrot.slane %v4078, 5
        %v4188 = vsel %vm1824, %v4187, %v4186
        %v4189 = vrot.slane %v4079, 4
        %v4190 = vsel %vm2668, %v4189, %v4188
        %v4191 = vrot.slane %v4080, 3
        %v4192 = vsel %vm2670, %v4191, %v4190
        %v4193 = vrot.slane %v4081, 2
        %v4194 = vsel %vm2672, %v4193, %v4192
        %v4195 = vrot.slane %v4082, 1
        %v4196 = vsel %vm2674, %v4195, %v4194
        %v4198 = vsel %vm1826, %v3411, 0
        %4200 = vmatprep.subr.mxu0 0.0
        %4201 = vmatpush1.msra.mxu0 %v1621
        %4202 = vmatprep.subr.mxu0 0.0
        %4203 = vmatpush1.msra.mxu0 0.0
        %4204 = vmatprep.subr.mxu0 0.0
        %4205 = vmatpush1.msra.mxu0 0.0
        %4206 = vmatprep.subr.mxu0 0.0
        %4207 = vmatpush1.msra.mxu0 0.0
        %4208 = vmatprep.subr.mxu0 0.0
        %4209 = vmatpush1.msra.mxu0 0.0
        %4210 = vmatprep.subr.mxu0 0.0
        %4211 = vmatpush1.msra.mxu0 0.0
        %4212 = vmatprep.subr.mxu0 0.0
        %4213 = vmatpush1.msra.mxu0 0.0
        %4214 = vmatprep.subr.mxu0 0.0
        %4215 = vmatpush1.msra.mxu0 0.0
        %4216 = vmatprep.subr.mxu0 0.0
        %4217 = vmatpush1.msra.mxu0 0.0
        %4218 = vmatprep.subr.mxu0 0.0
        %4219 = vmatpush1.msra.mxu0 0.0
        %4220 = vmatprep.subr.mxu0 0.0
        %4221 = vmatpush1.msra.mxu0 0.0
        %4222 = vmatprep.subr.mxu0 0.0
        %4223 = vmatpush1.msra.mxu0 0.0
        %4224 = vmatprep.subr.mxu0 0.0
        %4225 = vmatpush1.msra.mxu0 0.0
        %4226 = vmatprep.subr.mxu0 0.0
        %4227 = vmatpush1.msra.mxu0 0.0
        %4228 = vmatprep.subr.mxu0 0.0
        %4229 = vmatpush1.msra.mxu0 0.0
        %4230 = vmatprep.subr.mxu0 0.0
        %4231 = vmatpush1.msra.mxu0 0.0
        %4232 = vmatprep.subr.mxu0 0.0
        %4233 = vmatpush1.msra.mxu0 0.0
        %4234 = vmatprep.subr.mxu0 0.0
        %4235 = vmatpush1.msra.mxu0 0.0
        %4236 = vmatprep.subr.mxu0 0.0
        %4237 = vmatpush1.msra.mxu0 0.0
        %4238 = vmatprep.subr.mxu0 0.0
        %4239 = vmatpush1.msra.mxu0 0.0
        %4240 = vmatprep.subr.mxu0 0.0
        %4241 = vmatpush1.msra.mxu0 0.0
        %4242 = vmatprep.subr.mxu0 0.0
        %4243 = vmatpush1.msra.mxu0 0.0
        %4244 = vmatprep.subr.mxu0 0.0
        %4245 = vmatpush1.msra.mxu0 0.0
        %4246 = vmatprep.subr.mxu0 0.0
        %4247 = vmatpush1.msra.mxu0 0.0
        %4248 = vmatprep.subr.mxu0 0.0
        %4249 = vmatpush1.msra.mxu0 0.0
        %4250 = vmatprep.subr.mxu0 0.0
        %4251 = vmatpush1.msra.mxu0 0.0
        %4252 = vmatprep.subr.mxu0 0.0
        %4253 = vmatpush1.msra.mxu0 0.0
        %4254 = vmatprep.subr.mxu0 0.0
        %4255 = vmatpush1.msra.mxu0 0.0
        %4256 = vmatprep.subr.mxu0 0.0
        %4257 = vmatpush1.msra.mxu0 0.0
        %4258 = vmatprep.subr.mxu0 0.0
        %4259 = vmatpush1.msra.mxu0 0.0
        %4260 = vmatprep.subr.mxu0 0.0
        %4261 = vmatpush1.msra.mxu0 0.0
        %4262 = vmatprep.subr.mxu0 0.0
        %4263 = vmatpush1.msra.mxu0 0.0
        %4264 = vmatprep.mubr.f32.mxu0 0.0
        %4265 = vmatmul.mubr.f32.gmra.mrb[0].mxu0 %v4198
        %v4266 = vpop.f32.mrb[0].mxu0
        %v4267 = vadd.f32 %v4196, %v4266
        %v4268 = vpop.f32.mrb[0].mxu0
        %4269 = vdwg.mxu0
        %v4270 = vrot.slane %v4084, 7
        %v4271 = vsel %vm1820, %v4270, %v4083
        %v4272 = vrot.slane %v4085, 6
        %v4273 = vsel %vm1822, %v4272, %v4271
        %v4274 = vrot.slane %v4086, 5
        %v4275 = vsel %vm1824, %v4274, %v4273
        %v4276 = vrot.slane %v4087, 4
        %v4277 = vsel %vm2668, %v4276, %v4275
        %v4278 = vrot.slane %v4088, 3
        %v4279 = vsel %vm2670, %v4278, %v4277
        %v4280 = vrot.slane %v4089, 2
        %v4281 = vsel %vm2672, %v4280, %v4279
        %v4282 = vrot.slane %v4090, 1
        %v4283 = vsel %vm2674, %v4282, %v4281
        %v4285 = vsel %vm1826, %v3412, 0
        %4287 = vmatprep.subr.mxu0 0.0
        %4288 = vmatpush1.msra.mxu0 %v1691
        %4289 = vmatprep.subr.mxu0 0.0
        %4290 = vmatpush1.msra.mxu0 0.0
        %4291 = vmatprep.subr.mxu0 0.0
        %4292 = vmatpush1.msra.mxu0 0.0
        %4293 = vmatprep.subr.mxu0 0.0
        %4294 = vmatpush1.msra.mxu0 0.0
        %4295 = vmatprep.subr.mxu0 0.0
        %4296 = vmatpush1.msra.mxu0 0.0
        %4297 = vmatprep.subr.mxu0 0.0
        %4298 = vmatpush1.msra.mxu0 0.0
        %4299 = vmatprep.subr.mxu0 0.0
        %4300 = vmatpush1.msra.mxu0 0.0
        %4301 = vmatprep.subr.mxu0 0.0
        %4302 = vmatpush1.msra.mxu0 0.0
        %4303 = vmatprep.subr.mxu0 0.0
        %4304 = vmatpush1.msra.mxu0 0.0
        %4305 = vmatprep.subr.mxu0 0.0
        %4306 = vmatpush1.msra.mxu0 0.0
        %4307 = vmatprep.subr.mxu0 0.0
        %4308 = vmatpush1.msra.mxu0 0.0
        %4309 = vmatprep.subr.mxu0 0.0
        %4310 = vmatpush1.msra.mxu0 0.0
        %4311 = vmatprep.subr.mxu0 0.0
        %4312 = vmatpush1.msra.mxu0 0.0
        %4313 = vmatprep.subr.mxu0 0.0
        %4314 = vmatpush1.msra.mxu0 0.0
        %4315 = vmatprep.subr.mxu0 0.0
        %4316 = vmatpush1.msra.mxu0 0.0
        %4317 = vmatprep.subr.mxu0 0.0
        %4318 = vmatpush1.msra.mxu0 0.0
        %4319 = vmatprep.subr.mxu0 0.0
        %4320 = vmatpush1.msra.mxu0 0.0
        %4321 = vmatprep.subr.mxu0 0.0
        %4322 = vmatpush1.msra.mxu0 0.0
        %4323 = vmatprep.subr.mxu0 0.0
        %4324 = vmatpush1.msra.mxu0 0.0
        %4325 = vmatprep.subr.mxu0 0.0
        %4326 = vmatpush1.msra.mxu0 0.0
        %4327 = vmatprep.subr.mxu0 0.0
        %4328 = vmatpush1.msra.mxu0 0.0
        %4329 = vmatprep.subr.mxu0 0.0
        %4330 = vmatpush1.msra.mxu0 0.0
        %4331 = vmatprep.subr.mxu0 0.0
        %4332 = vmatpush1.msra.mxu0 0.0
        %4333 = vmatprep.subr.mxu0 0.0
        %4334 = vmatpush1.msra.mxu0 0.0
        %4335 = vmatprep.subr.mxu0 0.0
        %4336 = vmatpush1.msra.mxu0 0.0
        %4337 = vmatprep.subr.mxu0 0.0
        %4338 = vmatpush1.msra.mxu0 0.0
        %4339 = vmatprep.subr.mxu0 0.0
        %4340 = vmatpush1.msra.mxu0 0.0
        %4341 = vmatprep.subr.mxu0 0.0
        %4342 = vmatpush1.msra.mxu0 0.0
        %4343 = vmatprep.subr.mxu0 0.0
        %4344 = vmatpush1.msra.mxu0 0.0
        %4345 = vmatprep.subr.mxu0 0.0
        %4346 = vmatpush1.msra.mxu0 0.0
        %4347 = vmatprep.subr.mxu0 0.0
        %4348 = vmatpush1.msra.mxu0 0.0
        %4349 = vmatprep.subr.mxu0 0.0
        %4350 = vmatpush1.msra.mxu0 0.0
        %4351 = vmatprep.mubr.f32.mxu0 0.0
        %4352 = vmatmul.mubr.f32.gmra.mrb[0].mxu0 %v4285
        %v4353 = vpop.f32.mrb[0].mxu0
        %v4354 = vadd.f32 %v4283, %v4353
        %v4355 = vpop.f32.mrb[0].mxu0
        %4356 = vdwg.mxu0
        %v4357 = vrot.slane %v4092, 7
        %v4358 = vsel %vm1820, %v4357, %v4091
        %v4359 = vrot.slane %v4093, 6
        %v4360 = vsel %vm1822, %v4359, %v4358
        %v4361 = vrot.slane %v4094, 5
        %v4362 = vsel %vm1824, %v4361, %v4360
        %v4363 = vrot.slane %v4095, 4
        %v4364 = vsel %vm2668, %v4363, %v4362
        %v4365 = vrot.slane %v4096, 3
        %v4366 = vsel %vm2670, %v4365, %v4364
        %v4367 = vrot.slane %v4097, 2
        %v4368 = vsel %vm2672, %v4367, %v4366
        %v4369 = vrot.slane %v4098, 1
        %v4370 = vsel %vm2674, %v4369, %v4368
        %v4372 = vsel %vm1826, %v3413, 0
        %4374 = vmatprep.subr.mxu0 0.0
        %4375 = vmatpush1.msra.mxu0 %v1761
        %4376 = vmatprep.subr.mxu0 0.0
        %4377 = vmatpush1.msra.mxu0 0.0
        %4378 = vmatprep.subr.mxu0 0.0
        %4379 = vmatpush1.msra.mxu0 0.0
        %4380 = vmatprep.subr.mxu0 0.0
        %4381 = vmatpush1.msra.mxu0 0.0
        %4382 = vmatprep.subr.mxu0 0.0
        %4383 = vmatpush1.msra.mxu0 0.0
        %4384 = vmatprep.subr.mxu0 0.0
        %4385 = vmatpush1.msra.mxu0 0.0
        %4386 = vmatprep.subr.mxu0 0.0
        %4387 = vmatpush1.msra.mxu0 0.0
        %4388 = vmatprep.subr.mxu0 0.0
        %4389 = vmatpush1.msra.mxu0 0.0
        %4390 = vmatprep.subr.mxu0 0.0
        %4391 = vmatpush1.msra.mxu0 0.0
        %4392 = vmatprep.subr.mxu0 0.0
        %4393 = vmatpush1.msra.mxu0 0.0
        %4394 = vmatprep.subr.mxu0 0.0
        %4395 = vmatpush1.msra.mxu0 0.0
        %4396 = vmatprep.subr.mxu0 0.0
        %4397 = vmatpush1.msra.mxu0 0.0
        %4398 = vmatprep.subr.mxu0 0.0
        %4399 = vmatpush1.msra.mxu0 0.0
        %4400 = vmatprep.subr.mxu0 0.0
        %4401 = vmatpush1.msra.mxu0 0.0
        %4402 = vmatprep.subr.mxu0 0.0
        %4403 = vmatpush1.msra.mxu0 0.0
        %4404 = vmatprep.subr.mxu0 0.0
        %4405 = vmatpush1.msra.mxu0 0.0
        %4406 = vmatprep.subr.mxu0 0.0
        %4407 = vmatpush1.msra.mxu0 0.0
        %4408 = vmatprep.subr.mxu0 0.0
        %4409 = vmatpush1.msra.mxu0 0.0
        %4410 = vmatprep.subr.mxu0 0.0
        %4411 = vmatpush1.msra.mxu0 0.0
        %4412 = vmatprep.subr.mxu0 0.0
        %4413 = vmatpush1.msra.mxu0 0.0
        %4414 = vmatprep.subr.mxu0 0.0
        %4415 = vmatpush1.msra.mxu0 0.0
        %4416 = vmatprep.subr.mxu0 0.0
        %4417 = vmatpush1.msra.mxu0 0.0
        %4418 = vmatprep.subr.mxu0 0.0
        %4419 = vmatpush1.msra.mxu0 0.0
        %4420 = vmatprep.subr.mxu0 0.0
        %4421 = vmatpush1.msra.mxu0 0.0
        %4422 = vmatprep.subr.mxu0 0.0
        %4423 = vmatpush1.msra.mxu0 0.0
        %4424 = vmatprep.subr.mxu0 0.0
        %4425 = vmatpush1.msra.mxu0 0.0
        %4426 = vmatprep.subr.mxu0 0.0
        %4427 = vmatpush1.msra.mxu0 0.0
        %4428 = vmatprep.subr.mxu0 0.0
        %4429 = vmatpush1.msra.mxu0 0.0
        %4430 = vmatprep.subr.mxu0 0.0
        %4431 = vmatpush1.msra.mxu0 0.0
        %4432 = vmatprep.subr.mxu0 0.0
        %4433 = vmatpush1.msra.mxu0 0.0
        %4434 = vmatprep.subr.mxu0 0.0
        %4435 = vmatpush1.msra.mxu0 0.0
        %4436 = vmatprep.subr.mxu0 0.0
        %4437 = vmatpush1.msra.mxu0 0.0
        %4438 = vmatprep.mubr.f32.mxu0 0.0
        %4439 = vmatmul.mubr.f32.gmra.mrb[0].mxu0 %v4372
        %v4440 = vpop.f32.mrb[0].mxu0
        %v4441 = vadd.f32 %v4370, %v4440
        %v4442 = vpop.f32.mrb[0].mxu0
        %4443 = vdwg.mxu0
        %v4445 = vsel %vm1826, %v4180, 0
        %4447 = vmatprep.subr.mxu0 0.0
        %4448 = vmatpush1.msra.mxu0 %v777
        %4449 = vmatprep.subr.mxu0 0.0
        %4450 = vmatpush1.msra.mxu0 0.0
        %4451 = vmatprep.subr.mxu0 0.0
        %4452 = vmatpush1.msra.mxu0 0.0
        %4453 = vmatprep.subr.mxu0 0.0
        %4454 = vmatpush1.msra.mxu0 0.0
        %4455 = vmatprep.subr.mxu0 0.0
        %4456 = vmatpush1.msra.mxu0 0.0
        %4457 = vmatprep.subr.mxu0 0.0
        %4458 = vmatpush1.msra.mxu0 0.0
        %4459 = vmatprep.subr.mxu0 0.0
        %4460 = vmatpush1.msra.mxu0 0.0
        %4461 = vmatprep.subr.mxu0 0.0
        %4462 = vmatpush1.msra.mxu0 0.0
        %4463 = vmatprep.subr.mxu0 0.0
        %4464 = vmatpush1.msra.mxu0 0.0
        %4465 = vmatprep.subr.mxu0 0.0
        %4466 = vmatpush1.msra.mxu0 0.0
        %4467 = vmatprep.subr.mxu0 0.0
        %4468 = vmatpush1.msra.mxu0 0.0
        %4469 = vmatprep.subr.mxu0 0.0
        %4470 = vmatpush1.msra.mxu0 0.0
        %4471 = vmatprep.subr.mxu0 0.0
        %4472 = vmatpush1.msra.mxu0 0.0
        %4473 = vmatprep.subr.mxu0 0.0
        %4474 = vmatpush1.msra.mxu0 0.0
        %4475 = vmatprep.subr.mxu0 0.0
        %4476 = vmatpush1.msra.mxu0 0.0
        %4477 = vmatprep.subr.mxu0 0.0
        %4478 = vmatpush1.msra.mxu0 0.0
        %4479 = vmatprep.subr.mxu0 0.0
        %4480 = vmatpush1.msra.mxu0 0.0
        %4481 = vmatprep.subr.mxu0 0.0
        %4482 = vmatpush1.msra.mxu0 0.0
        %4483 = vmatprep.subr.mxu0 0.0
        %4484 = vmatpush1.msra.mxu0 0.0
        %4485 = vmatprep.subr.mxu0 0.0
        %4486 = vmatpush1.msra.mxu0 0.0
        %4487 = vmatprep.subr.mxu0 0.0
        %4488 = vmatpush1.msra.mxu0 0.0
        %4489 = vmatprep.subr.mxu0 0.0
        %4490 = vmatpush1.msra.mxu0 0.0
        %4491 = vmatprep.subr.mxu0 0.0
        %4492 = vmatpush1.msra.mxu0 0.0
        %4493 = vmatprep.subr.mxu0 0.0
        %4494 = vmatpush1.msra.mxu0 0.0
        %4495 = vmatprep.subr.mxu0 0.0
        %4496 = vmatpush1.msra.mxu0 0.0
        %4497 = vmatprep.subr.mxu0 0.0
        %4498 = vmatpush1.msra.mxu0 0.0
        %4499 = vmatprep.subr.mxu0 0.0
        %4500 = vmatpush1.msra.mxu0 0.0
        %4501 = vmatprep.subr.mxu0 0.0
        %4502 = vmatpush1.msra.mxu0 0.0
        %4503 = vmatprep.subr.mxu0 0.0
        %4504 = vmatpush1.msra.mxu0 0.0
        %4505 = vmatprep.subr.mxu0 0.0
        %4506 = vmatpush1.msra.mxu0 0.0
        %4507 = vmatprep.subr.mxu0 0.0
        %4508 = vmatpush1.msra.mxu0 0.0
        %4509 = vmatprep.subr.mxu0 0.0
        %4510 = vmatpush1.msra.mxu0 0.0
        %4511 = vmatprep.mubr.f32.mxu0 0.0
        %4512 = vmatmul.mubr.f32.gmra.mrb[0].mxu0 %v4445
        %v4513 = vpop.f32.mrb[0].mxu0
        %v4514 = vadd.f32 0.0, %v4513
        %v4515 = vpop.f32.mrb[0].mxu0
        %4516 = vdwg.mxu0
        %v4518 = vsel %vm1826, %v4267, 0
        %4520 = vmatprep.subr.mxu0 0.0
        %4521 = vmatpush1.msra.mxu0 %v778
        %4522 = vmatprep.subr.mxu0 0.0
        %4523 = vmatpush1.msra.mxu0 0.0
        %4524 = vmatprep.subr.mxu0 0.0
        %4525 = vmatpush1.msra.mxu0 0.0
        %4526 = vmatprep.subr.mxu0 0.0
        %4527 = vmatpush1.msra.mxu0 0.0
        %4528 = vmatprep.subr.mxu0 0.0
        %4529 = vmatpush1.msra.mxu0 0.0
        %4530 = vmatprep.subr.mxu0 0.0
        %4531 = vmatpush1.msra.mxu0 0.0
        %4532 = vmatprep.subr.mxu0 0.0
        %4533 = vmatpush1.msra.mxu0 0.0
        %4534 = vmatprep.subr.mxu0 0.0
        %4535 = vmatpush1.msra.mxu0 0.0
        %4536 = vmatprep.subr.mxu0 0.0
        %4537 = vmatpush1.msra.mxu0 0.0
        %4538 = vmatprep.subr.mxu0 0.0
        %4539 = vmatpush1.msra.mxu0 0.0
        %4540 = vmatprep.subr.mxu0 0.0
        %4541 = vmatpush1.msra.mxu0 0.0
        %4542 = vmatprep.subr.mxu0 0.0
        %4543 = vmatpush1.msra.mxu0 0.0
        %4544 = vmatprep.subr.mxu0 0.0
        %4545 = vmatpush1.msra.mxu0 0.0
        %4546 = vmatprep.subr.mxu0 0.0
        %4547 = vmatpush1.msra.mxu0 0.0
        %4548 = vmatprep.subr.mxu0 0.0
        %4549 = vmatpush1.msra.mxu0 0.0
        %4550 = vmatprep.subr.mxu0 0.0
        %4551 = vmatpush1.msra.mxu0 0.0
        %4552 = vmatprep.subr.mxu0 0.0
        %4553 = vmatpush1.msra.mxu0 0.0
        %4554 = vmatprep.subr.mxu0 0.0
        %4555 = vmatpush1.msra.mxu0 0.0
        %4556 = vmatprep.subr.mxu0 0.0
        %4557 = vmatpush1.msra.mxu0 0.0
        %4558 = vmatprep.subr.mxu0 0.0
        %4559 = vmatpush1.msra.mxu0 0.0
        %4560 = vmatprep.subr.mxu0 0.0
        %4561 = vmatpush1.msra.mxu0 0.0
        %4562 = vmatprep.subr.mxu0 0.0
        %4563 = vmatpush1.msra.mxu0 0.0
        %4564 = vmatprep.subr.mxu0 0.0
        %4565 = vmatpush1.msra.mxu0 0.0
        %4566 = vmatprep.subr.mxu0 0.0
        %4567 = vmatpush1.msra.mxu0 0.0
        %4568 = vmatprep.subr.mxu0 0.0
        %4569 = vmatpush1.msra.mxu0 0.0
        %4570 = vmatprep.subr.mxu0 0.0
        %4571 = vmatpush1.msra.mxu0 0.0
        %4572 = vmatprep.subr.mxu0 0.0
        %4573 = vmatpush1.msra.mxu0 0.0
        %4574 = vmatprep.subr.mxu0 0.0
        %4575 = vmatpush1.msra.mxu0 0.0
        %4576 = vmatprep.subr.mxu0 0.0
        %4577 = vmatpush1.msra.mxu0 0.0
        %4578 = vmatprep.subr.mxu0 0.0
        %4579 = vmatpush1.msra.mxu0 0.0
        %4580 = vmatprep.subr.mxu0 0.0
        %4581 = vmatpush1.msra.mxu0 0.0
        %4582 = vmatprep.subr.mxu0 0.0
        %4583 = vmatpush1.msra.mxu0 0.0
        %4584 = vmatprep.mubr.f32.mxu0 0.0
        %4585 = vmatmul.mubr.f32.gmra.mrb[0].mxu0 %v4518
        %v4586 = vpop.f32.mrb[0].mxu0
        %v4587 = vadd.f32 0.0, %v4586
        %v4588 = vpop.f32.mrb[0].mxu0
        %4589 = vdwg.mxu0
        %v4591 = vsel %vm1826, %v4354, 0
        %4593 = vmatprep.subr.mxu0 0.0
        %4594 = vmatpush1.msra.mxu0 %v779
        %4595 = vmatprep.subr.mxu0 0.0
        %4596 = vmatpush1.msra.mxu0 0.0
        %4597 = vmatprep.subr.mxu0 0.0
        %4598 = vmatpush1.msra.mxu0 0.0
        %4599 = vmatprep.subr.mxu0 0.0
        %4600 = vmatpush1.msra.mxu0 0.0
        %4601 = vmatprep.subr.mxu0 0.0
        %4602 = vmatpush1.msra.mxu0 0.0
        %4603 = vmatprep.subr.mxu0 0.0
        %4604 = vmatpush1.msra.mxu0 0.0
        %4605 = vmatprep.subr.mxu0 0.0
        %4606 = vmatpush1.msra.mxu0 0.0
        %4607 = vmatprep.subr.mxu0 0.0
        %4608 = vmatpush1.msra.mxu0 0.0
        %4609 = vmatprep.subr.mxu0 0.0
        %4610 = vmatpush1.msra.mxu0 0.0
        %4611 = vmatprep.subr.mxu0 0.0
        %4612 = vmatpush1.msra.mxu0 0.0
        %4613 = vmatprep.subr.mxu0 0.0
        %4614 = vmatpush1.msra.mxu0 0.0
        %4615 = vmatprep.subr.mxu0 0.0
        %4616 = vmatpush1.msra.mxu0 0.0
        %4617 = vmatprep.subr.mxu0 0.0
        %4618 = vmatpush1.msra.mxu0 0.0
        %4619 = vmatprep.subr.mxu0 0.0
        %4620 = vmatpush1.msra.mxu0 0.0
        %4621 = vmatprep.subr.mxu0 0.0
        %4622 = vmatpush1.msra.mxu0 0.0
        %4623 = vmatprep.subr.mxu0 0.0
        %4624 = vmatpush1.msra.mxu0 0.0
        %4625 = vmatprep.subr.mxu0 0.0
        %4626 = vmatpush1.msra.mxu0 0.0
        %4627 = vmatprep.subr.mxu0 0.0
        %4628 = vmatpush1.msra.mxu0 0.0
        %4629 = vmatprep.subr.mxu0 0.0
        %4630 = vmatpush1.msra.mxu0 0.0
        %4631 = vmatprep.subr.mxu0 0.0
        %4632 = vmatpush1.msra.mxu0 0.0
        %4633 = vmatprep.subr.mxu0 0.0
        %4634 = vmatpush1.msra.mxu0 0.0
        %4635 = vmatprep.subr.mxu0 0.0
        %4636 = vmatpush1.msra.mxu0 0.0
        %4637 = vmatprep.subr.mxu0 0.0
        %4638 = vmatpush1.msra.mxu0 0.0
        %4639 = vmatprep.subr.mxu0 0.0
        %4640 = vmatpush1.msra.mxu0 0.0
        %4641 = vmatprep.subr.mxu0 0.0
        %4642 = vmatpush1.msra.mxu0 0.0
        %4643 = vmatprep.subr.mxu0 0.0
        %4644 = vmatpush1.msra.mxu0 0.0
        %4645 = vmatprep.subr.mxu0 0.0
        %4646 = vmatpush1.msra.mxu0 0.0
        %4647 = vmatprep.subr.mxu0 0.0
        %4648 = vmatpush1.msra.mxu0 0.0
        %4649 = vmatprep.subr.mxu0 0.0
        %4650 = vmatpush1.msra.mxu0 0.0
        %4651 = vmatprep.subr.mxu0 0.0
        %4652 = vmatpush1.msra.mxu0 0.0
        %4653 = vmatprep.subr.mxu0 0.0
        %4654 = vmatpush1.msra.mxu0 0.0
        %4655 = vmatprep.subr.mxu0 0.0
        %4656 = vmatpush1.msra.mxu0 0.0
        %4657 = vmatprep.mubr.f32.mxu0 0.0
        %4658 = vmatmul.mubr.f32.gmra.mrb[0].mxu0 %v4591
        %v4659 = vpop.f32.mrb[0].mxu0
        %v4660 = vadd.f32 0.0, %v4659
        %v4661 = vpop.f32.mrb[0].mxu0
        %4662 = vdwg.mxu0
        %v4664 = vsel %vm1826, %v4441, 0
        %4666 = vmatprep.subr.mxu0 0.0
        %4667 = vmatpush1.msra.mxu0 %v780
        %4668 = vmatprep.subr.mxu0 0.0
        %4669 = vmatpush1.msra.mxu0 0.0
        %4670 = vmatprep.subr.mxu0 0.0
        %4671 = vmatpush1.msra.mxu0 0.0
        %4672 = vmatprep.subr.mxu0 0.0
        %4673 = vmatpush1.msra.mxu0 0.0
        %4674 = vmatprep.subr.mxu0 0.0
        %4675 = vmatpush1.msra.mxu0 0.0
        %4676 = vmatprep.subr.mxu0 0.0
        %4677 = vmatpush1.msra.mxu0 0.0
        %4678 = vmatprep.subr.mxu0 0.0
        %4679 = vmatpush1.msra.mxu0 0.0
        %4680 = vmatprep.subr.mxu0 0.0
        %4681 = vmatpush1.msra.mxu0 0.0
        %4682 = vmatprep.subr.mxu0 0.0
        %4683 = vmatpush1.msra.mxu0 0.0
        %4684 = vmatprep.subr.mxu0 0.0
        %4685 = vmatpush1.msra.mxu0 0.0
        %4686 = vmatprep.subr.mxu0 0.0
        %4687 = vmatpush1.msra.mxu0 0.0
        %4688 = vmatprep.subr.mxu0 0.0
        %4689 = vmatpush1.msra.mxu0 0.0
        %4690 = vmatprep.subr.mxu0 0.0
        %4691 = vmatpush1.msra.mxu0 0.0
        %4692 = vmatprep.subr.mxu0 0.0
        %4693 = vmatpush1.msra.mxu0 0.0
        %4694 = vmatprep.subr.mxu0 0.0
        %4695 = vmatpush1.msra.mxu0 0.0
        %4696 = vmatprep.subr.mxu0 0.0
        %4697 = vmatpush1.msra.mxu0 0.0
        %4698 = vmatprep.subr.mxu0 0.0
        %4699 = vmatpush1.msra.mxu0 0.0
        %4700 = vmatprep.subr.mxu0 0.0
        %4701 = vmatpush1.msra.mxu0 0.0
        %4702 = vmatprep.subr.mxu0 0.0
        %4703 = vmatpush1.msra.mxu0 0.0
        %4704 = vmatprep.subr.mxu0 0.0
        %4705 = vmatpush1.msra.mxu0 0.0
        %4706 = vmatprep.subr.mxu0 0.0
        %4707 = vmatpush1.msra.mxu0 0.0
        %4708 = vmatprep.subr.mxu0 0.0
        %4709 = vmatpush1.msra.mxu0 0.0
        %4710 = vmatprep.subr.mxu0 0.0
        %4711 = vmatpush1.msra.mxu0 0.0
        %4712 = vmatprep.subr.mxu0 0.0
        %4713 = vmatpush1.msra.mxu0 0.0
        %4714 = vmatprep.subr.mxu0 0.0
        %4715 = vmatpush1.msra.mxu0 0.0
        %4716 = vmatprep.subr.mxu0 0.0
        %4717 = vmatpush1.msra.mxu0 0.0
        %4718 = vmatprep.subr.mxu0 0.0
        %4719 = vmatpush1.msra.mxu0 0.0
        %4720 = vmatprep.subr.mxu0 0.0
        %4721 = vmatpush1.msra.mxu0 0.0
        %4722 = vmatprep.subr.mxu0 0.0
        %4723 = vmatpush1.msra.mxu0 0.0
        %4724 = vmatprep.subr.mxu0 0.0
        %4725 = vmatpush1.msra.mxu0 0.0
        %4726 = vmatprep.subr.mxu0 0.0
        %4727 = vmatpush1.msra.mxu0 0.0
        %4728 = vmatprep.subr.mxu0 0.0
        %4729 = vmatpush1.msra.mxu0 0.0
        %4730 = vmatprep.mubr.f32.mxu0 0.0
        %4731 = vmatmul.mubr.f32.gmra.mrb[0].mxu0 %v4664
        %v4732 = vpop.f32.mrb[0].mxu0
        %v4733 = vadd.f32 0.0, %v4732
        %v4734 = vpop.f32.mrb[0].mxu0
        %4735 = vdwg.mxu0
        %v4736 = vsel %vm880, %v4514, 0.0
        %v4737 = vsel %vm880, %v4587, 0.0
        %v4738 = vadd.f32 %v4736, %v4737
        %v4739 = vsel %vm880, %v4660, 0.0
        %v4740 = vadd.f32 %v4738, %v4739
        %v4741 = vsel %vm880, %v4733, 0.0
        %v4742 = vadd.f32 %v4740, %v4741
        %v4743 = vld [vmem:[%s12] sm:$0x1]
        %v4745 = vlaneseq
        %v4746 = vshrl.u32 %v4745, 7
        %v4747 = vsub.s32 0, %v4746
        %v4748 = vrot.slane %v4743, %v4747
        %v4750 = vadd.f32 %v4742, %v4748
        %v4751 = vadd.f32 %v859, %v4750
        %v4752 = vsel %vm880, %v4751, 0.0
        %4753 = vadd.xlane.f32.xlu0 %v4752
        %v4754 = vpop.xlane.xlu0 %4753
        %v4755 = vrcp.pop 32.0
        %v4756 = vmul.f32 %v4754, %v4755
        %v4757 = vsub.f32 %v4751, %v4756
        %v4758 = vmul.f32 %v4757, %v4757
        %v4759 = vsel %vm880, %v4758, 0.0
        %4760 = vadd.xlane.f32.xlu0 %v4759
        %v4761 = vpop.xlane.xlu0 %4760
        %v4762 = vmul.f32 %v4761, %v4755
        %v4763 = vadd.f32 %v4762, 1e-05
        %v4764 = vrsqrt.pop %v4763
        %v4765 = vmul.f32 %v4757, %v4764
        %v4766 = vld [vmem:[%s13] sm:$0x1]
        %v4768 = vlaneseq
        %v4769 = vshrl.u32 %v4768, 7
        %v4770 = vsub.s32 0, %v4769
        %v4771 = vrot.slane %v4766, %v4770
        %v4773 = vmul.f32 %v4765, %v4771
        %v4774 = vld [vmem:[%s14] sm:$0x1]
        %v4776 = vlaneseq
        %v4777 = vshrl.u32 %v4776, 7
        %v4778 = vsub.s32 0, %v4777
        %v4779 = vrot.slane %v4774, %v4778
        %v4781 = vadd.f32 %v4773, %v4779
        %v4782 = vld [vmem:[%s15] sm:$0xff]
        %v4783 = vld [vmem:[%s15 + $0x8] sm:$0xff]
        %v4784 = vld [vmem:[%s15 + $0x10] sm:$0xff]
        %v4785 = vld [vmem:[%s15 + $0x18] sm:$0xff]
        %v4786 = vld [vmem:[%s16] sm:$0x1]
        %v4788 = vlaneseq
        %v4789 = vshrl.u32 %v4788, 7
        %v4790 = vsub.s32 0, %v4789
        %v4791 = vrot.slane %v4786, %v4790
        %v4794 = vsel %vm880, %v4781, 0
        %4796 = vmatprep.subr.mxu0 0.0
        %4797 = vmatpush1.msra.mxu0 %v4782
        %4798 = vmatprep.subr.mxu0 0.0
        %4799 = vmatpush1.msra.mxu0 %v4783
        %4800 = vmatprep.subr.mxu0 0.0
        %4801 = vmatpush1.msra.mxu0 %v4784
        %4802 = vmatprep.subr.mxu0 0.0
        %4803 = vmatpush1.msra.mxu0 %v4785
        %4804 = vmatprep.subr.mxu0 0.0
        %4805 = vmatpush1.msra.mxu0 0.0
        %4806 = vmatprep.subr.mxu0 0.0
        %4807 = vmatpush1.msra.mxu0 0.0
        %4808 = vmatprep.subr.mxu0 0.0
        %4809 = vmatpush1.msra.mxu0 0.0
        %4810 = vmatprep.subr.mxu0 0.0
        %4811 = vmatpush1.msra.mxu0 0.0
        %4812 = vmatprep.subr.mxu0 0.0
        %4813 = vmatpush1.msra.mxu0 0.0
        %4814 = vmatprep.subr.mxu0 0.0
        %4815 = vmatpush1.msra.mxu0 0.0
        %4816 = vmatprep.subr.mxu0 0.0
        %4817 = vmatpush1.msra.mxu0 0.0
        %4818 = vmatprep.subr.mxu0 0.0
        %4819 = vmatpush1.msra.mxu0 0.0
        %4820 = vmatprep.subr.mxu0 0.0
        %4821 = vmatpush1.msra.mxu0 0.0
        %4822 = vmatprep.subr.mxu0 0.0
        %4823 = vmatpush1.msra.mxu0 0.0
        %4824 = vmatprep.subr.mxu0 0.0
        %4825 = vmatpush1.msra.mxu0 0.0
        %4826 = vmatprep.subr.mxu0 0.0
        %4827 = vmatpush1.msra.mxu0 0.0
        %4828 = vmatprep.subr.mxu0 0.0
        %4829 = vmatpush1.msra.mxu0 0.0
        %4830 = vmatprep.subr.mxu0 0.0
        %4831 = vmatpush1.msra.mxu0 0.0
        %4832 = vmatprep.subr.mxu0 0.0
        %4833 = vmatpush1.msra.mxu0 0.0
        %4834 = vmatprep.subr.mxu0 0.0
        %4835 = vmatpush1.msra.mxu0 0.0
        %4836 = vmatprep.subr.mxu0 0.0
        %4837 = vmatpush1.msra.mxu0 0.0
        %4838 = vmatprep.subr.mxu0 0.0
        %4839 = vmatpush1.msra.mxu0 0.0
        %4840 = vmatprep.subr.mxu0 0.0
        %4841 = vmatpush1.msra.mxu0 0.0
        %4842 = vmatprep.subr.mxu0 0.0
        %4843 = vmatpush1.msra.mxu0 0.0
        %4844 = vmatprep.subr.mxu0 0.0
        %4845 = vmatpush1.msra.mxu0 0.0
        %4846 = vmatprep.subr.mxu0 0.0
        %4847 = vmatpush1.msra.mxu0 0.0
        %4848 = vmatprep.subr.mxu0 0.0
        %4849 = vmatpush1.msra.mxu0 0.0
        %4850 = vmatprep.subr.mxu0 0.0
        %4851 = vmatpush1.msra.mxu0 0.0
        %4852 = vmatprep.subr.mxu0 0.0
        %4853 = vmatpush1.msra.mxu0 0.0
        %4854 = vmatprep.subr.mxu0 0.0
        %4855 = vmatpush1.msra.mxu0 0.0
        %4856 = vmatprep.subr.mxu0 0.0
        %4857 = vmatpush1.msra.mxu0 0.0
        %4858 = vmatprep.subr.mxu0 0.0
        %4859 = vmatpush1.msra.mxu0 0.0
        %4860 = vmatprep.mubr.f32.mxu0 0.0
        %4861 = vmatmul.mubr.f32.gmra.mrb[0].mxu0 %v4794
        %v4862 = vpop.f32.mrb[0].mxu0
        %v4863 = vadd.f32 %v4791, %v4862
        %v4864 = vpop.f32.mrb[0].mxu0
        %4865 = vdwg.mxu0
        %v4866 = vmax.f32 %v4863, 0.0
        %v4867 = vld [vmem:[%s17] sm:$0xff]
        %v4868 = vld [vmem:[%s17 + $0x8] sm:$0xff]
        %v4869 = vld [vmem:[%s17 + $0x10] sm:$0xff]
        %v4870 = vld [vmem:[%s17 + $0x18] sm:$0xff]
        %v4871 = vld [vmem:[%s17 + $0x20] sm:$0xff]
        %v4872 = vld [vmem:[%s17 + $0x28] sm:$0xff]
        %v4873 = vld [vmem:[%s17 + $0x30] sm:$0xff]
        %v4874 = vld [vmem:[%s17 + $0x38] sm:$0xff]
        %v4875 = vld [vmem:[%s18] sm:$0x1]
        %v4877 = vlaneseq
        %v4878 = vshrl.u32 %v4877, 7
        %v4879 = vsub.s32 0, %v4878
        %v4880 = vrot.slane %v4875, %v4879
        %vm4882 = vcmask 523264
        %v4884 = vsel %vm4882, %v4866, 0
        %4886 = vmatprep.subr.mxu0 0.0
        %4887 = vmatpush1.msra.mxu0 %v4867
        %4888 = vmatprep.subr.mxu0 0.0
        %4889 = vmatpush1.msra.mxu0 %v4868
        %4890 = vmatprep.subr.mxu0 0.0
        %4891 = vmatpush1.msra.mxu0 %v4869
        %4892 = vmatprep.subr.mxu0 0.0
        %4893 = vmatpush1.msra.mxu0 %v4870
        %4894 = vmatprep.subr.mxu0 0.0
        %4895 = vmatpush1.msra.mxu0 %v4871
        %4896 = vmatprep.subr.mxu0 0.0
        %4897 = vmatpush1.msra.mxu0 %v4872
        %4898 = vmatprep.subr.mxu0 0.0
        %4899 = vmatpush1.msra.mxu0 %v4873
        %4900 = vmatprep.subr.mxu0 0.0
        %4901 = vmatpush1.msra.mxu0 %v4874
        %4902 = vmatprep.subr.mxu0 0.0
        %4903 = vmatpush1.msra.mxu0 0.0
        %4904 = vmatprep.subr.mxu0 0.0
        %4905 = vmatpush1.msra.mxu0 0.0
        %4906 = vmatprep.subr.mxu0 0.0
        %4907 = vmatpush1.msra.mxu0 0.0
        %4908 = vmatprep.subr.mxu0 0.0
        %4909 = vmatpush1.msra.mxu0 0.0
        %4910 = vmatprep.subr.mxu0 0.0
        %4911 = vmatpush1.msra.mxu0 0.0
        %4912 = vmatprep.subr.mxu0 0.0
        %4913 = vmatpush1.msra.mxu0 0.0
        %4914 = vmatprep.subr.mxu0 0.0
        %4915 = vmatpush1.msra.mxu0 0.0
        %4916 = vmatprep.subr.mxu0 0.0
        %4917 = vmatpush1.msra.mxu0 0.0
        %4918 = vmatprep.subr.mxu0 0.0
        %4919 = vmatpush1.msra.mxu0 0.0
        %4920 = vmatprep.subr.mxu0 0.0
        %4921 = vmatpush1.msra.mxu0 0.0
        %4922 = vmatprep.subr.mxu0 0.0
        %4923 = vmatpush1.msra.mxu0 0.0
        %4924 = vmatprep.subr.mxu0 0.0
        %4925 = vmatpush1.msra.mxu0 0.0
        %4926 = vmatprep.subr.mxu0 0.0
        %4927 = vmatpush1.msra.mxu0 0.0
        %4928 = vmatprep.subr.mxu0 0.0
        %4929 = vmatpush1.msra.mxu0 0.0
        %4930 = vmatprep.subr.mxu0 0.0
        %4931 = vmatpush1.msra.mxu0 0.0
        %4932 = vmatprep.subr.mxu0 0.0
        %4933 = vmatpush1.msra.mxu0 0.0
        %4934 = vmatprep.subr.mxu0 0.0
        %4935 = vmatpush1.msra.mxu0 0.0
        %4936 = vmatprep.subr.mxu0 0.0
        %4937 = vmatpush1.msra.mxu0 0.0
        %4938 = vmatprep.subr.mxu0 0.0
        %4939 = vmatpush1.msra.mxu0 0.0
        %4940 = vmatprep.subr.mxu0 0.0
        %4941 = vmatpush1.msra.mxu0 0.0
        %4942 = vmatprep.subr.mxu0 0.0
        %4943 = vmatpush1.msra.mxu0 0.0
        %4944 = vmatprep.subr.mxu0 0.0
        %4945 = vmatpush1.msra.mxu0 0.0
        %4946 = vmatprep.subr.mxu0 0.0
        %4947 = vmatpush1.msra.mxu0 0.0
        %4948 = vmatprep.subr.mxu0 0.0
        %4949 = vmatpush1.msra.mxu0 0.0
        %4950 = vmatprep.mubr.f32.mxu0 0.0
        %4951 = vmatmul.mubr.f32.gmra.mrb[0].mxu0 %v4884
        %v4952 = vpop.f32.mrb[0].mxu0
        %v4953 = vadd.f32 %v4880, %v4952
        %v4954 = vpop.f32.mrb[0].mxu0
        %4955 = vdwg.mxu0
        %v4956 = vadd.f32 %v4781, %v4953
        %v4957 = vsel %vm880, %v4956, 0.0
        %4958 = vadd.xlane.f32.xlu0 %v4957
        %v4959 = vpop.xlane.xlu0 %4958
        %v4960 = vmul.f32 %v4959, %v4755
        %v4961 = vsub.f32 %v4956, %v4960
        %v4962 = vmul.f32 %v4961, %v4961
        %v4963 = vsel %vm880, %v4962, 0.0
        %4964 = vadd.xlane.f32.xlu0 %v4963
        %v4965 = vpop.xlane.xlu0 %4964
        %v4966 = vmul.f32 %v4965, %v4755
        %v4967 = vadd.f32 %v4966, 1e-05
        %v4968 = vrsqrt.pop %v4967
        %v4969 = vmul.f32 %v4961, %v4968
        %v4970 = vld [vmem:[%s19] sm:$0x1]
        %v4972 = vlaneseq
        %v4973 = vshrl.u32 %v4972, 7
        %v4974 = vsub.s32 0, %v4973
        %v4975 = vrot.slane %v4970, %v4974
        %v4977 = vmul.f32 %v4969, %v4975
        %v4978 = vld [vmem:[%s20] sm:$0x1]
        %v4980 = vlaneseq
        %v4981 = vshrl.u32 %v4980, 7
        %v4982 = vsub.s32 0, %v4981
        %v4983 = vrot.slane %v4978, %v4982
        %v4985 = vadd.f32 %v4977, %v4983
        %4986 = vst.msk [vmem:[%s705] sm:$0xff] %vm880, %v4985
        %s4987 = sand.u32 %s509, 1
        %s4988 = scalar_lea.sflag [#allocation3], %s4987
        %s4989 = sand.u32 %s509, 1
        %s4990 = smul.addr %s4989, 8
        %s4991 = scalar_lea.vmem [#allocation2], %s4990
        // Predicated region
        $region105: #{tpu_custom_call.1} parent=103 // pred_check
          %p4992 = pneg %p519
        $region106: #{tpu_custom_call.1} parent=103 // pred_check_branch
          %4994 = sbr.rel (%p4992) target = $region108
        $region107: #{tpu_custom_call.1} parent=103 // pred_region
          %s4996 = ssub.s32 128, 128
          %4997 = vsyncadd %s4988, %s4996
          %s4998 = smul.addr %s35, 128
          %s4999 = scalar_lea.hbm %s21, %s4998
          %s5001 = sshll.u32 %s4991, 4
          %s5002 = int_to_ptr.vmem [resolvable:$true] %s5001
          %5004 = dma.vmem_to_hbm [thread:$0]  %s5002, 128, %s4999, %s4988
        $region108: #{tpu_custom_call.1} parent=103 // pred_fallthru
          _
      $region104: #{tpu_custom_call.1} parent=5 // pred_fallthru
        _
      %p5005 = scmp.le.s32.totalorder 2, %s30
      // Predicated region
      $region109: #{tpu_custom_call.1} parent=5 // pred_check
        %p5006 = pneg %p5005
      $region110: #{tpu_custom_call.1} parent=5 // pred_check_branch
        %5008 = sbr.rel (%p5006) target = $region112
      $region111: #{tpu_custom_call.1} parent=5 // pred_region
        %s5009 = ssub.s32 %s30, 2
        // Predicated region
        $region113: #{tpu_custom_call.1} parent=111 // pred_check
          %p5010 = pneg %p525
        $region114: #{tpu_custom_call.1} parent=111 // pred_check_branch
          %5012 = sbr.rel (%p5010) target = $region116
        $region115: #{tpu_custom_call.1} parent=111 // pred_region
          %s5013 = sand.u32 %s510, 1
          %s5014 = scalar_lea.sflag [#allocation3], %s5013
          %s5015 = sand.u32 %s510, 1
          %s5016 = smul.addr %s5015, 8
          %s5017 = scalar_lea.vmem [#allocation2], %s5016
          %5018 = dma.done %s5014, 128
        $region116: #{tpu_custom_call.1} parent=111 // pred_fallthru
          _
      $region112: #{tpu_custom_call.1} parent=5 // pred_fallthru
        _
    $region6: #{tpu_custom_call.1} parent=1 // loop_footer
      %s34 = sadd.s32 1, %s30
    $region7: #{tpu_custom_call.1} parent=1 // loop_footer_branch
      %29 = sbr.rel target = $region3
    $region8: #{tpu_custom_call.1} parent=1 // loop_exit
      _
    %5019 = vsyncpa [#allocation3], 1
    %s5020 = scalar_lea.sflag [#allocation3], 1
    %5021 = vsyncpa %s5020, 1

</llo_original>
